<compile_context>
chip_gen: v5e
topology: v5e:2x2
jax: 0.10.0
libtpu: 0.0.40
codegen_flags: <defaults>
</compile_context>

<pallas_src>
import functools
import math

import jax
import jax.numpy as jnp
from jax import lax
from jax.experimental import pallas as pl
from jax.experimental.pallas import tpu as pltpu


# ---------------------------------------------------------------------------
# Fused conv3x3 + bias + ReLU + 2x2/stride-2 max-pool (one image per grid step)
# ---------------------------------------------------------------------------
def _conv3x3_relu_pool_kernel(x_ref, w_ref, b_ref, o_ref,
                              slab_ref, pool_ref, stage_ref, *,
                              W, Hp, Wp, R, n_chunks):
    """
    x_ref     : (1, H*W, Cin)     bf16  NHWC input, (H, W) flattened row-major
    w_ref     : (9*Cin, Cout)     bf16  im2col weight, row = (di*3 + dj)*Cin + c
    b_ref     : (1, Cout)         f32
    o_ref     : (1, Hp*Wp, Cout)  bf16  pooled output, (Hp, Wp) flattened row-major
    slab_ref  : (CHUNK_M, 9*Cin)  bf16  im2col slab for one chunk (VMEM scratch)
    pool_ref  : (CHUNK_M, Cout)   f32   relu(conv + bias) for one chunk (VMEM scratch)
    stage_ref : (R*Wp, Cout)      f32   pooled rows of one chunk (VMEM scratch)

    One chunk covers R pooled rows == 2*R conv rows == CHUNK_M = 2*R*W - 2 flat conv
    positions.  Flat positions with column j >= W-2 are garbage (never pooled); the
    last two of them are dropped so the deepest tap read (+2W+2) stays in bounds.
    """
    cin = x_ref.shape[-1]
    chunk_m = slab_ref.shape[0]
    bias = b_ref[...]                                    # hoisted out of the chunk loop

    def chunk_body(c, carry):
        # Clamp so a ragged last chunk overlaps (recomputing identical rows) instead of
        # reading out of bounds.
        p0 = jnp.minimum(c * R, Hp - R)                  # first pooled row of this chunk
        base = 2 * p0 * W                                # first flat conv row of chunk

        # --- im2col build: 9 shifted (CHUNK_M, Cin) windows -> (CHUNK_M, 9*Cin) slab ---
        for t in range(9):
            off = (t // 3) * W + (t % 3)
            slab_ref[:, t * cin:(t + 1) * cin] = x_ref[0, pl.ds(base + off, chunk_m), :]

        # --- ONE MXU pass over the chunk (K = 9*Cin), f32 accumulation ---
        acc = jnp.dot(slab_ref[...], w_ref[...], preferred_element_type=jnp.float32)
        pool_ref[...] = jnp.maximum(acc + bias, 0.0)     # stays f32 for the pooling

        # --- 2x2 / stride-2 max-pool on the f32 chunk; stage rows, one store per chunk -
        for ip in range(R):                              # R is small and static
            rb = 2 * ip * W
            r00 = pool_ref[pl.ds(rb, Wp, stride=2), :]
            r01 = pool_ref[pl.ds(rb + 1, Wp, stride=2), :]
            r10 = pool_ref[pl.ds(rb + W, Wp, stride=2), :]
            r11 = pool_ref[pl.ds(rb + W + 1, Wp, stride=2), :]
            stage_ref[ip * Wp:(ip + 1) * Wp, :] = jnp.maximum(
                jnp.maximum(r00, r01), jnp.maximum(r10, r11))
        o_ref[0, pl.ds(p0 * Wp, R * Wp), :] = stage_ref[...].astype(o_ref.dtype)
        return carry

    lax.fori_loop(0, n_chunks, chunk_body, 0)


def conv3x3_relu_pool(x_flat, w_im2col, b, H, W):
    """Conv2d(k=3, s=1, no pad) + ReLU + MaxPool2d(2, 2) on a flat NHWC input."""
    Nb, HW, Cin = x_flat.shape
    assert HW == H * W
    KC, Cout = w_im2col.shape
    assert KC == 9 * Cin
    Ho, Wo = H - 2, W - 2
    Hp, Wp = Ho // 2, Wo // 2
    assert Hp >= 1 and Wp >= 1

    # Chunk = R pooled rows; pick R so ~256 flat conv rows feed each MXU pass.
    R = max(1, min(Hp, 256 // (2 * W)))
    chunk_m = 2 * R * W - 2
    n_chunks = -(-Hp // R)

    kernel = functools.partial(_conv3x3_relu_pool_kernel,
                               W=W, Hp=Hp, Wp=Wp, R=R, n_chunks=n_chunks)
    b2 = jnp.reshape(b, (1, Cout)).astype(jnp.float32)

    # TODO(synk): for very large images (>~448 px on v7x's 64 MiB VMEM), add a second
    # grid axis over pooled-row blocks with a 2-row halo instead of one image per step.
    return pl.pallas_call(
        kernel,
        out_shape=jax.ShapeDtypeStruct((Nb, Hp * Wp, Cout), jnp.bfloat16),
        grid_spec=pltpu.PrefetchScalarGridSpec(
            num_scalar_prefetch=0,
            grid=(Nb,),
            in_specs=[
                pl.BlockSpec((1, HW, Cin), lambda n: (n, 0, 0)),
                pl.BlockSpec((9 * Cin, Cout), lambda n: (0, 0)),
                pl.BlockSpec((1, Cout), lambda n: (0, 0)),
            ],
            out_specs=pl.BlockSpec((1, Hp * Wp, Cout), lambda n: (n, 0, 0)),
            scratch_shapes=[
                pltpu.VMEM((chunk_m, 9 * Cin), jnp.bfloat16),   # im2col slab
                pltpu.VMEM((chunk_m, Cout), jnp.float32),        # f32 conv result
                pltpu.VMEM((R * Wp, Cout), jnp.float32),         # pooled-row staging
            ]),
        compiler_params=pltpu.CompilerParams(dimension_semantics=("parallel",)),
        cost_estimate=pl.CostEstimate(
            flops=2 * Nb * Ho * Wo * 9 * Cin * Cout,
            transcendentals=0,
            bytes_accessed=(Nb * HW * Cin + 9 * Cin * Cout) * 2
                           + Cout * 4 + Nb * Hp * Wp * Cout * 2),
    )(x_flat.astype(jnp.bfloat16), w_im2col.astype(jnp.bfloat16), b2)


# ---------------------------------------------------------------------------
# Fused FC head: relu(x @ w1 + b1) @ w2 + b2 in a single pallas_call
# ---------------------------------------------------------------------------
def _fc_head_kernel(a_ref, w1_ref, b1_ref, w2_ref, b2_ref, o_ref, acc_ref):
    @pl.when(pl.program_id(1) == 0)
    def _init():
        acc_ref[...] = jnp.zeros_like(acc_ref)

    acc_ref[...] += jnp.dot(a_ref[...], w1_ref[...],
                            preferred_element_type=jnp.float32)

    @pl.when(pl.program_id(1) == pl.num_programs(1) - 1)
    def _finalize():
        h = jnp.maximum(acc_ref[...] + b1_ref[...], 0.0).astype(jnp.bfloat16)
        logits = (jnp.dot(h, w2_ref[...], preferred_element_type=jnp.float32)
                  + b2_ref[...])
        o_ref[...] = logits.astype(o_ref.dtype)


def _aligned_tile(dim, cap, align):
    """Largest t <= cap with t % align == 0 and dim % t == 0; else the full dim."""
    if dim <= cap:
        return dim
    t = (cap // align) * align
    while t >= align:
        if dim % t == 0:
            return t
        t -= align
    # TODO(synk): masked ragged-K fallback; every K in this model divides a 128-multiple.
    return dim


def fc_head(a, w1, b1, w2, b2):
    """Fused fc1(+ReLU)+fc2: fc2's (128, Npad) weight stays resident in VMEM."""
    M, K = a.shape
    K_, H1 = w1.shape
    H1_, N = w2.shape
    assert K == K_ and H1 == H1_
    a = a.astype(jnp.bfloat16)
    w1 = w1.astype(jnp.bfloat16)
    w2 = w2.astype(jnp.bfloat16)
    b1r = jnp.reshape(b1, (1, H1)).astype(jnp.float32)
    b2r = jnp.reshape(b2, (1, N)).astype(jnp.float32)

    # Ragged M: padded rows of the last A block flow through the MXU/accumulator but
    # are masked on the output store -- harmless.
    TM = M if M <= 256 else 256
    # 2048 cap keeps double-buffered A/W1 tiles well under v5e's 16 MiB scoped VMEM.
    TK = _aligned_tile(K, 2048, 128)
    assert K % TK == 0, "K tile must divide K exactly (no garbage in the reduction)"
    grid = (-(-M // TM), K // TK)

    return pl.pallas_call(
        _fc_head_kernel,
        out_shape=jax.ShapeDtypeStruct((M, N), jnp.float32),
        grid_spec=pltpu.PrefetchScalarGridSpec(
            num_scalar_prefetch=0,
            grid=grid,
            in_specs=[
                pl.BlockSpec((TM, TK), lambda i, k: (i, k)),
                pl.BlockSpec((TK, H1), lambda i, k: (k, 0)),
                pl.BlockSpec((1, H1), lambda i, k: (0, 0)),
                pl.BlockSpec((H1, N), lambda i, k: (0, 0)),
                pl.BlockSpec((1, N), lambda i, k: (0, 0)),
            ],
            out_specs=pl.BlockSpec((TM, N), lambda i, k: (i, 0)),
            scratch_shapes=[pltpu.VMEM((TM, H1), jnp.float32)]),
        compiler_params=pltpu.CompilerParams(
            dimension_semantics=("parallel", "arbitrary")),
        cost_estimate=pl.CostEstimate(
            flops=2 * M * K * H1 + 2 * M * H1 * N,
            transcendentals=0,
            bytes_accessed=(M * K + K * H1 + H1 * N) * 2 + (H1 + N) * 4 + M * N * 4),
    )(a, w1, b1r, w2, b2r)


# ---------------------------------------------------------------------------
# Full CNN forward (equivalent to the PyTorch module's forward)
# ---------------------------------------------------------------------------
def cnn_forward(x_nchw, kp, *, num_classes):
    Nb, Cin, H, W = x_nchw.shape
    x = jnp.transpose(x_nchw, (0, 2, 3, 1)).astype(jnp.bfloat16)   # NCHW -> NHWC (once)
    x = x.reshape(Nb, H * W, Cin)                                  # flat spatial view
    x = conv3x3_relu_pool(x, kp["w1"], kp["b1"], H, W)             # (Nb, Hp1*Wp1, 32)
    H1, W1 = (H - 2) // 2, (W - 2) // 2
    x = conv3x3_relu_pool(x, kp["w2"], kp["b2"], H1, W1)           # (Nb, Hp2*Wp2, 64)
    x = x.reshape(Nb, -1)                      # NHWC flatten; wfc1 rows pre-permuted to
    logits = fc_head(x, kp["wfc1"], kp["bfc1"],                    # match PyTorch's NCHW
                     kp["wfc2"], kp["bfc2"])                       # x.view(-1, flat)
    return logits[:, :num_classes]             # drop fc2's 128-lane padding


# ---------------------------------------------------------------------------
# Parameters: PyTorch-layout init + one-time conversion to kernel layouts
# ---------------------------------------------------------------------------
def init_params(key, num_classes, flattened_size):
    keys = jax.random.split(key, 8)

    def uni(k, shape, fan_in):
        bound = 1.0 / math.sqrt(fan_in)
        return jax.random.uniform(k, shape, jnp.float32, -bound, bound)

    return dict(
        w1=uni(keys[0], (32, 3, 3, 3), 3 * 3 * 3),
        b1=uni(keys[1], (32,), 3 * 3 * 3),
        w2=uni(keys[2], (64, 32, 3, 3), 32 * 3 * 3),
        b2=uni(keys[3], (64,), 32 * 3 * 3),
        wfc1=uni(keys[4], (flattened_size, 128), flattened_size),
        bfc1=uni(keys[5], (128,), flattened_size),
        wfc2=uni(keys[6], (128, num_classes), 128),
        bfc2=uni(keys[7], (num_classes,), 128),
    )


def prepare_params(pt, H, W):
    """One-time conversion of PyTorch-layout parameters into kernel layouts."""
    # Spatial dims after conv1->pool->conv2->pool (floor mode), as calculate_output_size.
    h, w = (H - 2) // 2, (W - 2) // 2
    h, w = (h - 2) // 2, (w - 2) // 2
    c2 = pt["w2"].shape[0]
    assert pt["wfc1"].shape[0] == c2 * h * w

    def conv_w(w_oihw):               # (O, I, 3, 3) -> (9*I, O), row = (di*3+dj)*I + c
        o, i, kh, kw = w_oihw.shape
        return (jnp.transpose(w_oihw, (2, 3, 1, 0))
                .reshape(kh * kw * i, o).astype(jnp.bfloat16))

    # fc1: activations are flattened in NHWC order; permute wfc1's rows once so the
    # result matches PyTorch's NCHW x.view(-1, flattened) exactly.
    hh = jnp.arange(h)[:, None, None]
    ww = jnp.arange(w)[None, :, None]
    cc = jnp.arange(c2)[None, None, :]
    perm = (cc * (h * w) + hh * w + ww).reshape(-1)
    wfc1 = pt["wfc1"][perm, :].astype(jnp.bfloat16)

    # fc2: pad the output (lane) dim to a multiple of 128 -> lane-dense stores.
    n_cls = pt["wfc2"].shape[1]
    n_pad = ((n_cls + 127) // 128) * 128
    wfc2 = jnp.pad(pt["wfc2"], ((0, 0), (0, n_pad - n_cls))).astype(jnp.bfloat16)
    bfc2 = jnp.pad(pt["bfc2"], (0, n_pad - n_cls)).astype(jnp.float32).reshape(1, n_pad)

    return dict(
        w1=conv_w(pt["w1"]), b1=pt["b1"].astype(jnp.float32).reshape(1, -1),
        w2=conv_w(pt["w2"]), b2=pt["b2"].astype(jnp.float32).reshape(1, -1),
        wfc1=wfc1, bfc1=pt["bfc1"].astype(jnp.float32).reshape(1, -1),
        wfc2=wfc2, bfc2=bfc2,
    )


if __name__ == "__main__":
    # Small shapes consistent with the module: NCHW input, 3 channels.
    N, C, H, W = 2, 3, 16, 16
    NUM_CLASSES = 4   # synthetic stand-in for len(train_dataset.classes)

    # flattened_size computed exactly as calculate_output_size() would for this H, W:
    h1, w1 = (H - 2) // 2, (W - 2) // 2          # conv1 (k=3, no pad) + pool
    h2, w2 = (h1 - 2) // 2, (w1 - 2) // 2        # conv2 + pool
    flattened_size = 64 * h2 * w2                # 64 * 2 * 2 = 256

    key = jax.random.PRNGKey(0)
    k_x, k_p = jax.random.split(key)
    x = jax.random.normal(k_x, (N, C, H, W), jnp.float32)

    pt_params = init_params(k_p, NUM_CLASSES, flattened_size)   # PyTorch layout
    kparams = prepare_params(pt_params, H, W)                   # one-time kernel layout

    fwd = jax.jit(functools.partial(cnn_forward, num_classes=NUM_CLASSES))
    out = fwd(x, kparams)
    jax.block_until_ready(out)
    assert out.shape == (N, NUM_CLASSES)
    print("KERNEL_OK")
</pallas_src>

<mosaic_0001>
module attributes {stable_mosaic.version = 11 : i64} {
  func.func @_conv3x3_relu_pool_kernel(%arg0: i32, %arg1: memref<1x256x3xbf16, #tpu.memory_space<vmem>>, %arg2: memref<27x32xbf16, #tpu.memory_space<vmem>>, %arg3: memref<1x32xf32, #tpu.memory_space<vmem>>, %arg4: memref<1x49x32xbf16, #tpu.memory_space<vmem>>, %arg5: memref<222x27xbf16, #tpu.memory_space<vmem>>, %arg6: memref<222x32xf32, #tpu.memory_space<vmem>>, %arg7: memref<49x32xf32, #tpu.memory_space<vmem>>) attributes {dimension_semantics = [#tpu.dimension_semantics<parallel>], iteration_bounds = array<i64: 2>, scalar_prefetch = 0 : i64, scratch_operands = 3 : i64, tpu.core_type = #tpu.core_type<tc>, window_params = [{transform_indices = @transform_0, window_bounds = array<i64: 1, 256, 3>}, {pipeline_mode = #tpu.pipeline_mode<synchronous>, transform_indices = @transform_1, window_bounds = array<i64: 27, 32>}, {pipeline_mode = #tpu.pipeline_mode<synchronous>, transform_indices = @transform_2, window_bounds = array<i64: 1, 32>}, {transform_indices = @transform_3, window_bounds = array<i64: 1, 49, 32>}]} {
    %c0 = arith.constant 0 : index
    %c0_0 = arith.constant 0 : index
    %0 = vector.load %arg3[%c0, %c0_0] : memref<1x32xf32, #tpu.memory_space<vmem>>, vector<1x32xf32>
    %c0_i32 = arith.constant 0 : i32
    %c7_i32 = arith.constant 7 : i32
    %1 = arith.muli %c0_i32, %c7_i32 : i32
    %c0_i32_1 = arith.constant 0 : i32
    %2 = arith.minsi %1, %c0_i32_1 : i32
    %c2_i32 = arith.constant 2 : i32
    %3 = arith.muli %c2_i32, %2 : i32
    %c16_i32 = arith.constant 16 : i32
    %4 = arith.muli %3, %c16_i32 : i32
    %c0_i32_2 = arith.constant 0 : i32
    %5 = arith.addi %4, %c0_i32_2 : i32
    %c0_3 = arith.constant 0 : index
    %6 = arith.index_cast %5 : i32 to index
    %c0_4 = arith.constant 0 : index
    %7 = vector.load %arg1[%c0_3, %6, %c0_4] : memref<1x256x3xbf16, #tpu.memory_space<vmem>>, vector<1x222x3xbf16>
    %8 = vector.shape_cast %7 : vector<1x222x3xbf16> to vector<222x3xbf16>
    %c0_5 = arith.constant 0 : index
    %c0_6 = arith.constant 0 : index
    %9 = vector.load %arg5[%c0_5, %c0_6] : memref<222x27xbf16, #tpu.memory_space<vmem>>, vector<222x3xbf16>
    tpu.vector_store %arg5[%c0_5, %c0_6], %8 {strides = array<i32>} : memref<222x27xbf16, #tpu.memory_space<vmem>>, vector<222x3xbf16>,
    %c1_i32 = arith.constant 1 : i32
    %10 = arith.addi %4, %c1_i32 : i32
    %c0_7 = arith.constant 0 : index
    %11 = arith.index_cast %10 : i32 to index
    %c0_8 = arith.constant 0 : index
    %12 = vector.load %arg1[%c0_7, %11, %c0_8] : memref<1x256x3xbf16, #tpu.memory_space<vmem>>, vector<1x222x3xbf16>
    %13 = vector.shape_cast %12 : vector<1x222x3xbf16> to vector<222x3xbf16>
    %c0_9 = arith.constant 0 : index
    %c3 = arith.constant 3 : index
    %14 = vector.load %arg5[%c0_9, %c3] : memref<222x27xbf16, #tpu.memory_space<vmem>>, vector<222x3xbf16>
    tpu.vector_store %arg5[%c0_9, %c3], %13 {strides = array<i32>} : memref<222x27xbf16, #tpu.memory_space<vmem>>, vector<222x3xbf16>,
    %c2_i32_10 = arith.constant 2 : i32
    %15 = arith.addi %4, %c2_i32_10 : i32
    %c0_11 = arith.constant 0 : index
    %16 = arith.index_cast %15 : i32 to index
    %c0_12 = arith.constant 0 : index
    %17 = vector.load %arg1[%c0_11, %16, %c0_12] : memref<1x256x3xbf16, #tpu.memory_space<vmem>>, vector<1x222x3xbf16>
    %18 = vector.shape_cast %17 : vector<1x222x3xbf16> to vector<222x3xbf16>
    %c0_13 = arith.constant 0 : index
    %c6 = arith.constant 6 : index
    %19 = vector.load %arg5[%c0_13, %c6] : memref<222x27xbf16, #tpu.memory_space<vmem>>, vector<222x3xbf16>
    tpu.vector_store %arg5[%c0_13, %c6], %18 {strides = array<i32>} : memref<222x27xbf16, #tpu.memory_space<vmem>>, vector<222x3xbf16>,
    %c16_i32_14 = arith.constant 16 : i32
    %20 = arith.addi %4, %c16_i32_14 : i32
    %c0_15 = arith.constant 0 : index
    %21 = arith.index_cast %20 : i32 to index
    %c0_16 = arith.constant 0 : index
    %22 = vector.load %arg1[%c0_15, %21, %c0_16] : memref<1x256x3xbf16, #tpu.memory_space<vmem>>, vector<1x222x3xbf16>
    %23 = vector.shape_cast %22 : vector<1x222x3xbf16> to vector<222x3xbf16>
    %c0_17 = arith.constant 0 : index
    %c9 = arith.constant 9 : index
    %24 = vector.load %arg5[%c0_17, %c9] : memref<222x27xbf16, #tpu.memory_space<vmem>>, vector<222x3xbf16>
    tpu.vector_store %arg5[%c0_17, %c9], %23 {strides = array<i32>} : memref<222x27xbf16, #tpu.memory_space<vmem>>, vector<222x3xbf16>,
    %c17_i32 = arith.constant 17 : i32
    %25 = arith.addi %4, %c17_i32 : i32
    %c0_18 = arith.constant 0 : index
    %26 = arith.index_cast %25 : i32 to index
    %c0_19 = arith.constant 0 : index
    %27 = vector.load %arg1[%c0_18, %26, %c0_19] : memref<1x256x3xbf16, #tpu.memory_space<vmem>>, vector<1x222x3xbf16>
    %28 = vector.shape_cast %27 : vector<1x222x3xbf16> to vector<222x3xbf16>
    %c0_20 = arith.constant 0 : index
    %c12 = arith.constant 12 : index
    %29 = vector.load %arg5[%c0_20, %c12] : memref<222x27xbf16, #tpu.memory_space<vmem>>, vector<222x3xbf16>
    tpu.vector_store %arg5[%c0_20, %c12], %28 {strides = array<i32>} : memref<222x27xbf16, #tpu.memory_space<vmem>>, vector<222x3xbf16>,
    %c18_i32 = arith.constant 18 : i32
    %30 = arith.addi %4, %c18_i32 : i32
    %c0_21 = arith.constant 0 : index
    %31 = arith.index_cast %30 : i32 to index
    %c0_22 = arith.constant 0 : index
    %32 = vector.load %arg1[%c0_21, %31, %c0_22] : memref<1x256x3xbf16, #tpu.memory_space<vmem>>, vector<1x222x3xbf16>
    %33 = vector.shape_cast %32 : vector<1x222x3xbf16> to vector<222x3xbf16>
    %c0_23 = arith.constant 0 : index
    %c15 = arith.constant 15 : index
    %34 = vector.load %arg5[%c0_23, %c15] : memref<222x27xbf16, #tpu.memory_space<vmem>>, vector<222x3xbf16>
    tpu.vector_store %arg5[%c0_23, %c15], %33 {strides = array<i32>} : memref<222x27xbf16, #tpu.memory_space<vmem>>, vector<222x3xbf16>,
    %c32_i32 = arith.constant 32 : i32
    %35 = arith.addi %4, %c32_i32 : i32
    %c0_24 = arith.constant 0 : index
    %36 = arith.index_cast %35 : i32 to index
    %c0_25 = arith.constant 0 : index
    %37 = vector.load %arg1[%c0_24, %36, %c0_25] : memref<1x256x3xbf16, #tpu.memory_space<vmem>>, vector<1x222x3xbf16>
    %38 = vector.shape_cast %37 : vector<1x222x3xbf16> to vector<222x3xbf16>
    %c0_26 = arith.constant 0 : index
    %c18 = arith.constant 18 : index
    %39 = vector.load %arg5[%c0_26, %c18] : memref<222x27xbf16, #tpu.memory_space<vmem>>, vector<222x3xbf16>
    tpu.vector_store %arg5[%c0_26, %c18], %38 {strides = array<i32>} : memref<222x27xbf16, #tpu.memory_space<vmem>>, vector<222x3xbf16>,
    %c33_i32 = arith.constant 33 : i32
    %40 = arith.addi %4, %c33_i32 : i32
    %c0_27 = arith.constant 0 : index
    %41 = arith.index_cast %40 : i32 to index
    %c0_28 = arith.constant 0 : index
    %42 = vector.load %arg1[%c0_27, %41, %c0_28] : memref<1x256x3xbf16, #tpu.memory_space<vmem>>, vector<1x222x3xbf16>
    %43 = vector.shape_cast %42 : vector<1x222x3xbf16> to vector<222x3xbf16>
    %c0_29 = arith.constant 0 : index
    %c21 = arith.constant 21 : index
    %44 = vector.load %arg5[%c0_29, %c21] : memref<222x27xbf16, #tpu.memory_space<vmem>>, vector<222x3xbf16>
    tpu.vector_store %arg5[%c0_29, %c21], %43 {strides = array<i32>} : memref<222x27xbf16, #tpu.memory_space<vmem>>, vector<222x3xbf16>,
    %c34_i32 = arith.constant 34 : i32
    %45 = arith.addi %4, %c34_i32 : i32
    %c0_30 = arith.constant 0 : index
    %46 = arith.index_cast %45 : i32 to index
    %c0_31 = arith.constant 0 : index
    %47 = vector.load %arg1[%c0_30, %46, %c0_31] : memref<1x256x3xbf16, #tpu.memory_space<vmem>>, vector<1x222x3xbf16>
    %48 = vector.shape_cast %47 : vector<1x222x3xbf16> to vector<222x3xbf16>
    %c0_32 = arith.constant 0 : index
    %c24 = arith.constant 24 : index
    %49 = vector.load %arg5[%c0_32, %c24] : memref<222x27xbf16, #tpu.memory_space<vmem>>, vector<222x3xbf16>
    tpu.vector_store %arg5[%c0_32, %c24], %48 {strides = array<i32>} : memref<222x27xbf16, #tpu.memory_space<vmem>>, vector<222x3xbf16>,
    %c0_33 = arith.constant 0 : index
    %c0_34 = arith.constant 0 : index
    %50 = vector.load %arg5[%c0_33, %c0_34] : memref<222x27xbf16, #tpu.memory_space<vmem>>, vector<222x27xbf16>
    %c0_35 = arith.constant 0 : index
    %c0_36 = arith.constant 0 : index
    %51 = vector.load %arg2[%c0_35, %c0_36] : memref<27x32xbf16, #tpu.memory_space<vmem>>, vector<27x32xbf16>
    %cst = arith.constant dense<0.000000e+00> : vector<222x32xf32>
    %52 = tpu.matmul %50, %51, %cst {dimension_numbers = #tpu.dot_dimension_numbers<[1], [0], [0], [1], [0, 0, 1, 1], [], []>} : vector<222x27xbf16>, vector<27x32xbf16>, vector<222x32xf32> -> vector<222x32xf32>
    %53 = vector.broadcast %0 : vector<1x32xf32> to vector<222x32xf32>
    %54 = arith.addf %52, %53 : vector<222x32xf32>
    %cst_37 = arith.constant 0.000000e+00 : f32
    %55 = vector.broadcast %cst_37 : f32 to vector<222x32xf32>
    %56 = arith.maximumf %54, %55 : vector<222x32xf32>
    %c0_38 = arith.constant 0 : index
    %c0_39 = arith.constant 0 : index
    %57 = vector.load %arg6[%c0_38, %c0_39] : memref<222x32xf32, #tpu.memory_space<vmem>>, vector<222x32xf32>
    tpu.vector_store %arg6[%c0_38, %c0_39], %56 {strides = array<i32>} : memref<222x32xf32, #tpu.memory_space<vmem>>, vector<222x32xf32>,
    %c0_40 = arith.constant 0 : index
    %c0_41 = arith.constant 0 : index
    %58 = tpu.strided_load %arg6[%c0_40, %c0_41] {strides = array<i32: 2, 1>} : memref<222x32xf32, #tpu.memory_space<vmem>>, vector<7x32xf32>
    %c1 = arith.constant 1 : index
    %c0_42 = arith.constant 0 : index
    %59 = tpu.strided_load %arg6[%c1, %c0_42] {strides = array<i32: 2, 1>} : memref<222x32xf32, #tpu.memory_space<vmem>>, vector<7x32xf32>
    %c16 = arith.constant 16 : index
    %c0_43 = arith.constant 0 : index
    %60 = tpu.strided_load %arg6[%c16, %c0_43] {strides = array<i32: 2, 1>} : memref<222x32xf32, #tpu.memory_space<vmem>>, vector<7x32xf32>
    %c17 = arith.constant 17 : index
    %c0_44 = arith.constant 0 : index
    %61 = tpu.strided_load %arg6[%c17, %c0_44] {strides = array<i32: 2, 1>} : memref<222x32xf32, #tpu.memory_space<vmem>>, vector<7x32xf32>
    %62 = arith.maximumf %58, %59 : vector<7x32xf32>
    %63 = arith.maximumf %60, %61 : vector<7x32xf32>
    %64 = arith.maximumf %62, %63 : vector<7x32xf32>
    %c0_45 = arith.constant 0 : index
    %c0_46 = arith.constant 0 : index
    %65 = vector.load %arg7[%c0_45, %c0_46] : memref<49x32xf32, #tpu.memory_space<vmem>>, vector<7x32xf32>
    tpu.vector_store %arg7[%c0_45, %c0_46], %64 {strides = array<i32>} : memref<49x32xf32, #tpu.memory_space<vmem>>, vector<7x32xf32>,
    %c32 = arith.constant 32 : index
    %c0_47 = arith.constant 0 : index
    %66 = tpu.strided_load %arg6[%c32, %c0_47] {strides = array<i32: 2, 1>} : memref<222x32xf32, #tpu.memory_space<vmem>>, vector<7x32xf32>
    %c33 = arith.constant 33 : index
    %c0_48 = arith.constant 0 : index
    %67 = tpu.strided_load %arg6[%c33, %c0_48] {strides = array<i32: 2, 1>} : memref<222x32xf32, #tpu.memory_space<vmem>>, vector<7x32xf32>
    %c48 = arith.constant 48 : index
    %c0_49 = arith.constant 0 : index
    %68 = tpu.strided_load %arg6[%c48, %c0_49] {strides = array<i32: 2, 1>} : memref<222x32xf32, #tpu.memory_space<vmem>>, vector<7x32xf32>
    %c49 = arith.constant 49 : index
    %c0_50 = arith.constant 0 : index
    %69 = tpu.strided_load %arg6[%c49, %c0_50] {strides = array<i32: 2, 1>} : memref<222x32xf32, #tpu.memory_space<vmem>>, vector<7x32xf32>
    %70 = arith.maximumf %66, %67 : vector<7x32xf32>
    %71 = arith.maximumf %68, %69 : vector<7x32xf32>
    %72 = arith.maximumf %70, %71 : vector<7x32xf32>
    %c7 = arith.constant 7 : index
    %c0_51 = arith.constant 0 : index
    %73 = vector.load %arg7[%c7, %c0_51] : memref<49x32xf32, #tpu.memory_space<vmem>>, vector<7x32xf32>
    tpu.vector_store %arg7[%c7, %c0_51], %72 {strides = array<i32>} : memref<49x32xf32, #tpu.memory_space<vmem>>, vector<7x32xf32>,
    %c64 = arith.constant 64 : index
    %c0_52 = arith.constant 0 : index
    %74 = tpu.strided_load %arg6[%c64, %c0_52] {strides = array<i32: 2, 1>} : memref<222x32xf32, #tpu.memory_space<vmem>>, vector<7x32xf32>
    %c65 = arith.constant 65 : index
    %c0_53 = arith.constant 0 : index
    %75 = tpu.strided_load %arg6[%c65, %c0_53] {strides = array<i32: 2, 1>} : memref<222x32xf32, #tpu.memory_space<vmem>>, vector<7x32xf32>
    %c80 = arith.constant 80 : index
    %c0_54 = arith.constant 0 : index
    %76 = tpu.strided_load %arg6[%c80, %c0_54] {strides = array<i32: 2, 1>} : memref<222x32xf32, #tpu.memory_space<vmem>>, vector<7x32xf32>
    %c81 = arith.constant 81 : index
    %c0_55 = arith.constant 0 : index
    %77 = tpu.strided_load %arg6[%c81, %c0_55] {strides = array<i32: 2, 1>} : memref<222x32xf32, #tpu.memory_space<vmem>>, vector<7x32xf32>
    %78 = arith.maximumf %74, %75 : vector<7x32xf32>
    %79 = arith.maximumf %76, %77 : vector<7x32xf32>
    %80 = arith.maximumf %78, %79 : vector<7x32xf32>
    %c14 = arith.constant 14 : index
    %c0_56 = arith.constant 0 : index
    %81 = vector.load %arg7[%c14, %c0_56] : memref<49x32xf32, #tpu.memory_space<vmem>>, vector<7x32xf32>
    tpu.vector_store %arg7[%c14, %c0_56], %80 {strides = array<i32>} : memref<49x32xf32, #tpu.memory_space<vmem>>, vector<7x32xf32>,
    %c96 = arith.constant 96 : index
    %c0_57 = arith.constant 0 : index
    %82 = tpu.strided_load %arg6[%c96, %c0_57] {strides = array<i32: 2, 1>} : memref<222x32xf32, #tpu.memory_space<vmem>>, vector<7x32xf32>
    %c97 = arith.constant 97 : index
    %c0_58 = arith.constant 0 : index
    %83 = tpu.strided_load %arg6[%c97, %c0_58] {strides = array<i32: 2, 1>} : memref<222x32xf32, #tpu.memory_space<vmem>>, vector<7x32xf32>
    %c112 = arith.constant 112 : index
    %c0_59 = arith.constant 0 : index
    %84 = tpu.strided_load %arg6[%c112, %c0_59] {strides = array<i32: 2, 1>} : memref<222x32xf32, #tpu.memory_space<vmem>>, vector<7x32xf32>
    %c113 = arith.constant 113 : index
    %c0_60 = arith.constant 0 : index
    %85 = tpu.strided_load %arg6[%c113, %c0_60] {strides = array<i32: 2, 1>} : memref<222x32xf32, #tpu.memory_space<vmem>>, vector<7x32xf32>
    %86 = arith.maximumf %82, %83 : vector<7x32xf32>
    %87 = arith.maximumf %84, %85 : vector<7x32xf32>
    %88 = arith.maximumf %86, %87 : vector<7x32xf32>
    %c21_61 = arith.constant 21 : index
    %c0_62 = arith.constant 0 : index
    %89 = vector.load %arg7[%c21_61, %c0_62] : memref<49x32xf32, #tpu.memory_space<vmem>>, vector<7x32xf32>
    tpu.vector_store %arg7[%c21_61, %c0_62], %88 {strides = array<i32>} : memref<49x32xf32, #tpu.memory_space<vmem>>, vector<7x32xf32>,
    %c128 = arith.constant 128 : index
    %c0_63 = arith.constant 0 : index
    %90 = tpu.strided_load %arg6[%c128, %c0_63] {strides = array<i32: 2, 1>} : memref<222x32xf32, #tpu.memory_space<vmem>>, vector<7x32xf32>
    %c129 = arith.constant 129 : index
    %c0_64 = arith.constant 0 : index
    %91 = tpu.strided_load %arg6[%c129, %c0_64] {strides = array<i32: 2, 1>} : memref<222x32xf32, #tpu.memory_space<vmem>>, vector<7x32xf32>
    %c144 = arith.constant 144 : index
    %c0_65 = arith.constant 0 : index
    %92 = tpu.strided_load %arg6[%c144, %c0_65] {strides = array<i32: 2, 1>} : memref<222x32xf32, #tpu.memory_space<vmem>>, vector<7x32xf32>
    %c145 = arith.constant 145 : index
    %c0_66 = arith.constant 0 : index
    %93 = tpu.strided_load %arg6[%c145, %c0_66] {strides = array<i32: 2, 1>} : memref<222x32xf32, #tpu.memory_space<vmem>>, vector<7x32xf32>
    %94 = arith.maximumf %90, %91 : vector<7x32xf32>
    %95 = arith.maximumf %92, %93 : vector<7x32xf32>
    %96 = arith.maximumf %94, %95 : vector<7x32xf32>
    %c28 = arith.constant 28 : index
    %c0_67 = arith.constant 0 : index
    %97 = vector.load %arg7[%c28, %c0_67] : memref<49x32xf32, #tpu.memory_space<vmem>>, vector<7x32xf32>
    tpu.vector_store %arg7[%c28, %c0_67], %96 {strides = array<i32>} : memref<49x32xf32, #tpu.memory_space<vmem>>, vector<7x32xf32>,
    %c160 = arith.constant 160 : index
    %c0_68 = arith.constant 0 : index
    %98 = tpu.strided_load %arg6[%c160, %c0_68] {strides = array<i32: 2, 1>} : memref<222x32xf32, #tpu.memory_space<vmem>>, vector<7x32xf32>
    %c161 = arith.constant 161 : index
    %c0_69 = arith.constant 0 : index
    %99 = tpu.strided_load %arg6[%c161, %c0_69] {strides = array<i32: 2, 1>} : memref<222x32xf32, #tpu.memory_space<vmem>>, vector<7x32xf32>
    %c176 = arith.constant 176 : index
    %c0_70 = arith.constant 0 : index
    %100 = tpu.strided_load %arg6[%c176, %c0_70] {strides = array<i32: 2, 1>} : memref<222x32xf32, #tpu.memory_space<vmem>>, vector<7x32xf32>
    %c177 = arith.constant 177 : index
    %c0_71 = arith.constant 0 : index
    %101 = tpu.strided_load %arg6[%c177, %c0_71] {strides = array<i32: 2, 1>} : memref<222x32xf32, #tpu.memory_space<vmem>>, vector<7x32xf32>
    %102 = arith.maximumf %98, %99 : vector<7x32xf32>
    %103 = arith.maximumf %100, %101 : vector<7x32xf32>
    %104 = arith.maximumf %102, %103 : vector<7x32xf32>
    %c35 = arith.constant 35 : index
    %c0_72 = arith.constant 0 : index
    %105 = vector.load %arg7[%c35, %c0_72] : memref<49x32xf32, #tpu.memory_space<vmem>>, vector<7x32xf32>
    tpu.vector_store %arg7[%c35, %c0_72], %104 {strides = array<i32>} : memref<49x32xf32, #tpu.memory_space<vmem>>, vector<7x32xf32>,
    %c192 = arith.constant 192 : index
    %c0_73 = arith.constant 0 : index
    %106 = tpu.strided_load %arg6[%c192, %c0_73] {strides = array<i32: 2, 1>} : memref<222x32xf32, #tpu.memory_space<vmem>>, vector<7x32xf32>
    %c193 = arith.constant 193 : index
    %c0_74 = arith.constant 0 : index
    %107 = tpu.strided_load %arg6[%c193, %c0_74] {strides = array<i32: 2, 1>} : memref<222x32xf32, #tpu.memory_space<vmem>>, vector<7x32xf32>
    %c208 = arith.constant 208 : index
    %c0_75 = arith.constant 0 : index
    %108 = tpu.strided_load %arg6[%c208, %c0_75] {strides = array<i32: 2, 1>} : memref<222x32xf32, #tpu.memory_space<vmem>>, vector<7x32xf32>
    %c209 = arith.constant 209 : index
    %c0_76 = arith.constant 0 : index
    %109 = tpu.strided_load %arg6[%c209, %c0_76] {strides = array<i32: 2, 1>} : memref<222x32xf32, #tpu.memory_space<vmem>>, vector<7x32xf32>
    %110 = arith.maximumf %106, %107 : vector<7x32xf32>
    %111 = arith.maximumf %108, %109 : vector<7x32xf32>
    %112 = arith.maximumf %110, %111 : vector<7x32xf32>
    %c42 = arith.constant 42 : index
    %c0_77 = arith.constant 0 : index
    %113 = vector.load %arg7[%c42, %c0_77] : memref<49x32xf32, #tpu.memory_space<vmem>>, vector<7x32xf32>
    tpu.vector_store %arg7[%c42, %c0_77], %112 {strides = array<i32>} : memref<49x32xf32, #tpu.memory_space<vmem>>, vector<7x32xf32>,
    %c0_78 = arith.constant 0 : index
    %c0_79 = arith.constant 0 : index
    %114 = vector.load %arg7[%c0_78, %c0_79] : memref<49x32xf32, #tpu.memory_space<vmem>>, vector<49x32xf32>
    %115 = arith.truncf %114 : vector<49x32xf32> to vector<49x32xbf16>
    %c7_i32_80 = arith.constant 7 : i32
    %116 = arith.muli %2, %c7_i32_80 : i32
    %c0_81 = arith.constant 0 : index
    %117 = arith.index_cast %116 : i32 to index
    %c0_82 = arith.constant 0 : index
    %118 = vector.load %arg4[%c0_81, %117, %c0_82] : memref<1x49x32xbf16, #tpu.memory_space<vmem>>, vector<1x49x32xbf16>
    %119 = vector.shape_cast %118 : vector<1x49x32xbf16> to vector<49x32xbf16>
    %120 = vector.shape_cast %115 : vector<49x32xbf16> to vector<1x49x32xbf16>
    tpu.vector_store %arg4[%c0_81, %117, %c0_82], %120 {strides = array<i32>} : memref<1x49x32xbf16, #tpu.memory_space<vmem>>, vector<1x49x32xbf16>,
    %c1_i32_83 = arith.constant 1 : i32
    return
  }
  func.func @transform_0(%arg0: i32) -> (i32, i32, i32) {
    %c0_i32 = arith.constant 0 : i32
    %c0_i32_0 = arith.constant 0 : i32
    %c0_i32_1 = arith.constant 0 : i32
    return %arg0, %c0_i32, %c0_i32_0 : i32, i32, i32
  }
  func.func @transform_1(%arg0: i32) -> (i32, i32) {
    %c0_i32 = arith.constant 0 : i32
    %c0_i32_0 = arith.constant 0 : i32
    %c0_i32_1 = arith.constant 0 : i32
    return %c0_i32, %c0_i32_0 : i32, i32
  }
  func.func @transform_2(%arg0: i32) -> (i32, i32) {
    %c0_i32 = arith.constant 0 : i32
    %c0_i32_0 = arith.constant 0 : i32
    %c0_i32_1 = arith.constant 0 : i32
    return %c0_i32, %c0_i32_0 : i32, i32
  }
  func.func @transform_3(%arg0: i32) -> (i32, i32, i32) {
    %c0_i32 = arith.constant 0 : i32
    %c0_i32_0 = arith.constant 0 : i32
    %c0_i32_1 = arith.constant 0 : i32
    return %arg0, %c0_i32, %c0_i32_0 : i32, i32, i32
  }
}

module attributes {stable_mosaic.version = 11 : i64} {
  func.func @_conv3x3_relu_pool_kernel(%arg0: i32, %arg1: memref<1x49x32xbf16, #tpu.memory_space<vmem>>, %arg2: memref<288x64xbf16, #tpu.memory_space<vmem>>, %arg3: memref<1x64xf32, #tpu.memory_space<vmem>>, %arg4: memref<1x4x64xbf16, #tpu.memory_space<vmem>>, %arg5: memref<26x288xbf16, #tpu.memory_space<vmem>>, %arg6: memref<26x64xf32, #tpu.memory_space<vmem>>, %arg7: memref<4x64xf32, #tpu.memory_space<vmem>>) attributes {dimension_semantics = [#tpu.dimension_semantics<parallel>], iteration_bounds = array<i64: 2>, scalar_prefetch = 0 : i64, scratch_operands = 3 : i64, tpu.core_type = #tpu.core_type<tc>, window_params = [{transform_indices = @transform_0, window_bounds = array<i64: 1, 49, 32>}, {pipeline_mode = #tpu.pipeline_mode<synchronous>, transform_indices = @transform_1, window_bounds = array<i64: 288, 64>}, {pipeline_mode = #tpu.pipeline_mode<synchronous>, transform_indices = @transform_2, window_bounds = array<i64: 1, 64>}, {transform_indices = @transform_3, window_bounds = array<i64: 1, 4, 64>}]} {
    %c0 = arith.constant 0 : index
    %c0_0 = arith.constant 0 : index
    %0 = vector.load %arg3[%c0, %c0_0] : memref<1x64xf32, #tpu.memory_space<vmem>>, vector<1x64xf32>
    %c0_i32 = arith.constant 0 : i32
    %c2_i32 = arith.constant 2 : i32
    %1 = arith.muli %c0_i32, %c2_i32 : i32
    %c0_i32_1 = arith.constant 0 : i32
    %2 = arith.minsi %1, %c0_i32_1 : i32
    %c2_i32_2 = arith.constant 2 : i32
    %3 = arith.muli %c2_i32_2, %2 : i32
    %c7_i32 = arith.constant 7 : i32
    %4 = arith.muli %3, %c7_i32 : i32
    %c0_i32_3 = arith.constant 0 : i32
    %5 = arith.addi %4, %c0_i32_3 : i32
    %c0_4 = arith.constant 0 : index
    %6 = arith.index_cast %5 : i32 to index
    %c0_5 = arith.constant 0 : index
    %7 = vector.load %arg1[%c0_4, %6, %c0_5] : memref<1x49x32xbf16, #tpu.memory_space<vmem>>, vector<1x26x32xbf16>
    %8 = vector.shape_cast %7 : vector<1x26x32xbf16> to vector<26x32xbf16>
    %c0_6 = arith.constant 0 : index
    %c0_7 = arith.constant 0 : index
    %9 = vector.load %arg5[%c0_6, %c0_7] : memref<26x288xbf16, #tpu.memory_space<vmem>>, vector<26x32xbf16>
    tpu.vector_store %arg5[%c0_6, %c0_7], %8 {strides = array<i32>} : memref<26x288xbf16, #tpu.memory_space<vmem>>, vector<26x32xbf16>,
    %c1_i32 = arith.constant 1 : i32
    %10 = arith.addi %4, %c1_i32 : i32
    %c0_8 = arith.constant 0 : index
    %11 = arith.index_cast %10 : i32 to index
    %c0_9 = arith.constant 0 : index
    %12 = vector.load %arg1[%c0_8, %11, %c0_9] : memref<1x49x32xbf16, #tpu.memory_space<vmem>>, vector<1x26x32xbf16>
    %13 = vector.shape_cast %12 : vector<1x26x32xbf16> to vector<26x32xbf16>
    %c0_10 = arith.constant 0 : index
    %c32 = arith.constant 32 : index
    %14 = vector.load %arg5[%c0_10, %c32] : memref<26x288xbf16, #tpu.memory_space<vmem>>, vector<26x32xbf16>
    tpu.vector_store %arg5[%c0_10, %c32], %13 {strides = array<i32>} : memref<26x288xbf16, #tpu.memory_space<vmem>>, vector<26x32xbf16>,
    %c2_i32_11 = arith.constant 2 : i32
    %15 = arith.addi %4, %c2_i32_11 : i32
    %c0_12 = arith.constant 0 : index
    %16 = arith.index_cast %15 : i32 to index
    %c0_13 = arith.constant 0 : index
    %17 = vector.load %arg1[%c0_12, %16, %c0_13] : memref<1x49x32xbf16, #tpu.memory_space<vmem>>, vector<1x26x32xbf16>
    %18 = vector.shape_cast %17 : vector<1x26x32xbf16> to vector<26x32xbf16>
    %c0_14 = arith.constant 0 : index
    %c64 = arith.constant 64 : index
    %19 = vector.load %arg5[%c0_14, %c64] : memref<26x288xbf16, #tpu.memory_space<vmem>>, vector<26x32xbf16>
    tpu.vector_store %arg5[%c0_14, %c64], %18 {strides = array<i32>} : memref<26x288xbf16, #tpu.memory_space<vmem>>, vector<26x32xbf16>,
    %c7_i32_15 = arith.constant 7 : i32
    %20 = arith.addi %4, %c7_i32_15 : i32
    %c0_16 = arith.constant 0 : index
    %21 = arith.index_cast %20 : i32 to index
    %c0_17 = arith.constant 0 : index
    %22 = vector.load %arg1[%c0_16, %21, %c0_17] : memref<1x49x32xbf16, #tpu.memory_space<vmem>>, vector<1x26x32xbf16>
    %23 = vector.shape_cast %22 : vector<1x26x32xbf16> to vector<26x32xbf16>
    %c0_18 = arith.constant 0 : index
    %c96 = arith.constant 96 : index
    %24 = vector.load %arg5[%c0_18, %c96] : memref<26x288xbf16, #tpu.memory_space<vmem>>, vector<26x32xbf16>
    tpu.vector_store %arg5[%c0_18, %c96], %23 {strides = array<i32>} : memref<26x288xbf16, #tpu.memory_space<vmem>>, vector<26x32xbf16>,
    %c8_i32 = arith.constant 8 : i32
    %25 = arith.addi %4, %c8_i32 : i32
    %c0_19 = arith.constant 0 : index
    %26 = arith.index_cast %25 : i32 to index
    %c0_20 = arith.constant 0 : index
    %27 = vector.load %arg1[%c0_19, %26, %c0_20] : memref<1x49x32xbf16, #tpu.memory_space<vmem>>, vector<1x26x32xbf16>
    %28 = vector.shape_cast %27 : vector<1x26x32xbf16> to vector<26x32xbf16>
    %c0_21 = arith.constant 0 : index
    %c128 = arith.constant 128 : index
    %29 = vector.load %arg5[%c0_21, %c128] : memref<26x288xbf16, #tpu.memory_space<vmem>>, vector<26x32xbf16>
    tpu.vector_store %arg5[%c0_21, %c128], %28 {strides = array<i32>} : memref<26x288xbf16, #tpu.memory_space<vmem>>, vector<26x32xbf16>,
    %c9_i32 = arith.constant 9 : i32
    %30 = arith.addi %4, %c9_i32 : i32
    %c0_22 = arith.constant 0 : index
    %31 = arith.index_cast %30 : i32 to index
    %c0_23 = arith.constant 0 : index
    %32 = vector.load %arg1[%c0_22, %31, %c0_23] : memref<1x49x32xbf16, #tpu.memory_space<vmem>>, vector<1x26x32xbf16>
    %33 = vector.shape_cast %32 : vector<1x26x32xbf16> to vector<26x32xbf16>
    %c0_24 = arith.constant 0 : index
    %c160 = arith.constant 160 : index
    %34 = vector.load %arg5[%c0_24, %c160] : memref<26x288xbf16, #tpu.memory_space<vmem>>, vector<26x32xbf16>
    tpu.vector_store %arg5[%c0_24, %c160], %33 {strides = array<i32>} : memref<26x288xbf16, #tpu.memory_space<vmem>>, vector<26x32xbf16>,
    %c14_i32 = arith.constant 14 : i32
    %35 = arith.addi %4, %c14_i32 : i32
    %c0_25 = arith.constant 0 : index
    %36 = arith.index_cast %35 : i32 to index
    %c0_26 = arith.constant 0 : index
    %37 = vector.load %arg1[%c0_25, %36, %c0_26] : memref<1x49x32xbf16, #tpu.memory_space<vmem>>, vector<1x26x32xbf16>
    %38 = vector.shape_cast %37 : vector<1x26x32xbf16> to vector<26x32xbf16>
    %c0_27 = arith.constant 0 : index
    %c192 = arith.constant 192 : index
    %39 = vector.load %arg5[%c0_27, %c192] : memref<26x288xbf16, #tpu.memory_space<vmem>>, vector<26x32xbf16>
    tpu.vector_store %arg5[%c0_27, %c192], %38 {strides = array<i32>} : memref<26x288xbf16, #tpu.memory_space<vmem>>, vector<26x32xbf16>,
    %c15_i32 = arith.constant 15 : i32
    %40 = arith.addi %4, %c15_i32 : i32
    %c0_28 = arith.constant 0 : index
    %41 = arith.index_cast %40 : i32 to index
    %c0_29 = arith.constant 0 : index
    %42 = vector.load %arg1[%c0_28, %41, %c0_29] : memref<1x49x32xbf16, #tpu.memory_space<vmem>>, vector<1x26x32xbf16>
    %43 = vector.shape_cast %42 : vector<1x26x32xbf16> to vector<26x32xbf16>
    %c0_30 = arith.constant 0 : index
    %c224 = arith.constant 224 : index
    %44 = vector.load %arg5[%c0_30, %c224] : memref<26x288xbf16, #tpu.memory_space<vmem>>, vector<26x32xbf16>
    tpu.vector_store %arg5[%c0_30, %c224], %43 {strides = array<i32>} : memref<26x288xbf16, #tpu.memory_space<vmem>>, vector<26x32xbf16>,
    %c16_i32 = arith.constant 16 : i32
    %45 = arith.addi %4, %c16_i32 : i32
    %c0_31 = arith.constant 0 : index
    %46 = arith.index_cast %45 : i32 to index
    %c0_32 = arith.constant 0 : index
    %47 = vector.load %arg1[%c0_31, %46, %c0_32] : memref<1x49x32xbf16, #tpu.memory_space<vmem>>, vector<1x26x32xbf16>
    %48 = vector.shape_cast %47 : vector<1x26x32xbf16> to vector<26x32xbf16>
    %c0_33 = arith.constant 0 : index
    %c256 = arith.constant 256 : index
    %49 = vector.load %arg5[%c0_33, %c256] : memref<26x288xbf16, #tpu.memory_space<vmem>>, vector<26x32xbf16>
    tpu.vector_store %arg5[%c0_33, %c256], %48 {strides = array<i32>} : memref<26x288xbf16, #tpu.memory_space<vmem>>, vector<26x32xbf16>,
    %c0_34 = arith.constant 0 : index
    %c0_35 = arith.constant 0 : index
    %50 = vector.load %arg5[%c0_34, %c0_35] : memref<26x288xbf16, #tpu.memory_space<vmem>>, vector<26x288xbf16>
    %c0_36 = arith.constant 0 : index
    %c0_37 = arith.constant 0 : index
    %51 = vector.load %arg2[%c0_36, %c0_37] : memref<288x64xbf16, #tpu.memory_space<vmem>>, vector<288x64xbf16>
    %cst = arith.constant dense<0.000000e+00> : vector<26x64xf32>
    %52 = tpu.matmul %50, %51, %cst {dimension_numbers = #tpu.dot_dimension_numbers<[1], [0], [0], [1], [0, 0, 1, 1], [], []>} : vector<26x288xbf16>, vector<288x64xbf16>, vector<26x64xf32> -> vector<26x64xf32>
    %53 = vector.broadcast %0 : vector<1x64xf32> to vector<26x64xf32>
    %54 = arith.addf %52, %53 : vector<26x64xf32>
    %cst_38 = arith.constant 0.000000e+00 : f32
    %55 = vector.broadcast %cst_38 : f32 to vector<26x64xf32>
    %56 = arith.maximumf %54, %55 : vector<26x64xf32>
    %c0_39 = arith.constant 0 : index
    %c0_40 = arith.constant 0 : index
    %57 = vector.load %arg6[%c0_39, %c0_40] : memref<26x64xf32, #tpu.memory_space<vmem>>, vector<26x64xf32>
    tpu.vector_store %arg6[%c0_39, %c0_40], %56 {strides = array<i32>} : memref<26x64xf32, #tpu.memory_space<vmem>>, vector<26x64xf32>,
    %c0_41 = arith.constant 0 : index
    %c0_42 = arith.constant 0 : index
    %58 = tpu.strided_load %arg6[%c0_41, %c0_42] {strides = array<i32: 2, 1>} : memref<26x64xf32, #tpu.memory_space<vmem>>, vector<2x64xf32>
    %c1 = arith.constant 1 : index
    %c0_43 = arith.constant 0 : index
    %59 = tpu.strided_load %arg6[%c1, %c0_43] {strides = array<i32: 2, 1>} : memref<26x64xf32, #tpu.memory_space<vmem>>, vector<2x64xf32>
    %c7 = arith.constant 7 : index
    %c0_44 = arith.constant 0 : index
    %60 = tpu.strided_load %arg6[%c7, %c0_44] {strides = array<i32: 2, 1>} : memref<26x64xf32, #tpu.memory_space<vmem>>, vector<2x64xf32>
    %c8 = arith.constant 8 : index
    %c0_45 = arith.constant 0 : index
    %61 = tpu.strided_load %arg6[%c8, %c0_45] {strides = array<i32: 2, 1>} : memref<26x64xf32, #tpu.memory_space<vmem>>, vector<2x64xf32>
    %62 = arith.maximumf %58, %59 : vector<2x64xf32>
    %63 = arith.maximumf %60, %61 : vector<2x64xf32>
    %64 = arith.maximumf %62, %63 : vector<2x64xf32>
    %c0_46 = arith.constant 0 : index
    %c0_47 = arith.constant 0 : index
    %65 = vector.load %arg7[%c0_46, %c0_47] : memref<4x64xf32, #tpu.memory_space<vmem>>, vector<2x64xf32>
    tpu.vector_store %arg7[%c0_46, %c0_47], %64 {strides = array<i32>} : memref<4x64xf32, #tpu.memory_space<vmem>>, vector<2x64xf32>,
    %c14 = arith.constant 14 : index
    %c0_48 = arith.constant 0 : index
    %66 = tpu.strided_load %arg6[%c14, %c0_48] {strides = array<i32: 2, 1>} : memref<26x64xf32, #tpu.memory_space<vmem>>, vector<2x64xf32>
    %c15 = arith.constant 15 : index
    %c0_49 = arith.constant 0 : index
    %67 = tpu.strided_load %arg6[%c15, %c0_49] {strides = array<i32: 2, 1>} : memref<26x64xf32, #tpu.memory_space<vmem>>, vector<2x64xf32>
    %c21 = arith.constant 21 : index
    %c0_50 = arith.constant 0 : index
    %68 = tpu.strided_load %arg6[%c21, %c0_50] {strides = array<i32: 2, 1>} : memref<26x64xf32, #tpu.memory_space<vmem>>, vector<2x64xf32>
    %c22 = arith.constant 22 : index
    %c0_51 = arith.constant 0 : index
    %69 = tpu.strided_load %arg6[%c22, %c0_51] {strides = array<i32: 2, 1>} : memref<26x64xf32, #tpu.memory_space<vmem>>, vector<2x64xf32>
    %70 = arith.maximumf %66, %67 : vector<2x64xf32>
    %71 = arith.maximumf %68, %69 : vector<2x64xf32>
    %72 = arith.maximumf %70, %71 : vector<2x64xf32>
    %c2 = arith.constant 2 : index
    %c0_52 = arith.constant 0 : index
    %73 = vector.load %arg7[%c2, %c0_52] : memref<4x64xf32, #tpu.memory_space<vmem>>, vector<2x64xf32>
    tpu.vector_store %arg7[%c2, %c0_52], %72 {strides = array<i32>} : memref<4x64xf32, #tpu.memory_space<vmem>>, vector<2x64xf32>,
    %c0_53 = arith.constant 0 : index
    %c0_54 = arith.constant 0 : index
    %74 = vector.load %arg7[%c0_53, %c0_54] : memref<4x64xf32, #tpu.memory_space<vmem>>, vector<4x64xf32>
    %75 = arith.truncf %74 : vector<4x64xf32> to vector<4x64xbf16>
    %c2_i32_55 = arith.constant 2 : i32
    %76 = arith.muli %2, %c2_i32_55 : i32
    %c0_56 = arith.constant 0 : index
    %77 = arith.index_cast %76 : i32 to index
    %c0_57 = arith.constant 0 : index
    %78 = vector.load %arg4[%c0_56, %77, %c0_57] : memref<1x4x64xbf16, #tpu.memory_space<vmem>>, vector<1x4x64xbf16>
    %79 = vector.shape_cast %78 : vector<1x4x64xbf16> to vector<4x64xbf16>
    %80 = vector.shape_cast %75 : vector<4x64xbf16> to vector<1x4x64xbf16>
    tpu.vector_store %arg4[%c0_56, %77, %c0_57], %80 {strides = array<i32>} : memref<1x4x64xbf16, #tpu.memory_space<vmem>>, vector<1x4x64xbf16>,
    %c1_i32_58 = arith.constant 1 : i32
    return
  }
  func.func @transform_0(%arg0: i32) -> (i32, i32, i32) {
    %c0_i32 = arith.constant 0 : i32
    %c0_i32_0 = arith.constant 0 : i32
    %c0_i32_1 = arith.constant 0 : i32
    return %arg0, %c0_i32, %c0_i32_0 : i32, i32, i32
  }
  func.func @transform_1(%arg0: i32) -> (i32, i32) {
    %c0_i32 = arith.constant 0 : i32
    %c0_i32_0 = arith.constant 0 : i32
    %c0_i32_1 = arith.constant 0 : i32
    return %c0_i32, %c0_i32_0 : i32, i32
  }
  func.func @transform_2(%arg0: i32) -> (i32, i32) {
    %c0_i32 = arith.constant 0 : i32
    %c0_i32_0 = arith.constant 0 : i32
    %c0_i32_1 = arith.constant 0 : i32
    return %c0_i32, %c0_i32_0 : i32, i32
  }
  func.func @transform_3(%arg0: i32) -> (i32, i32, i32) {
    %c0_i32 = arith.constant 0 : i32
    %c0_i32_0 = arith.constant 0 : i32
    %c0_i32_1 = arith.constant 0 : i32
    return %arg0, %c0_i32, %c0_i32_0 : i32, i32, i32
  }
}

module attributes {stable_mosaic.version = 11 : i64} {
  func.func @_fc_head_kernel(%arg0: i32, %arg1: i32, %arg2: memref<2x256xbf16, #tpu.memory_space<vmem>>, %arg3: memref<256x128xbf16, #tpu.memory_space<vmem>>, %arg4: memref<1x128xf32, #tpu.memory_space<vmem>>, %arg5: memref<128x128xbf16, #tpu.memory_space<vmem>>, %arg6: memref<1x128xf32, #tpu.memory_space<vmem>>, %arg7: memref<2x128xf32, #tpu.memory_space<vmem>>, %arg8: memref<2x128xf32, #tpu.memory_space<vmem>>) attributes {dimension_semantics = [#tpu.dimension_semantics<parallel>, #tpu.dimension_semantics<arbitrary>], iteration_bounds = array<i64: 1, 1>, scalar_prefetch = 0 : i64, scratch_operands = 1 : i64, tpu.core_type = #tpu.core_type<tc>, window_params = [{transform_indices = @transform_0, window_bounds = array<i64: 2, 256>}, {transform_indices = @transform_1, window_bounds = array<i64: 256, 128>}, {pipeline_mode = #tpu.pipeline_mode<synchronous>, transform_indices = @transform_2, window_bounds = array<i64: 1, 128>}, {pipeline_mode = #tpu.pipeline_mode<synchronous>, transform_indices = @transform_3, window_bounds = array<i64: 128, 128>}, {pipeline_mode = #tpu.pipeline_mode<synchronous>, transform_indices = @transform_4, window_bounds = array<i64: 1, 128>}, {transform_indices = @transform_5, window_bounds = array<i64: 2, 128>}]} {
    %c0_i32 = arith.constant 0 : i32
    %0 = arith.cmpi eq, %arg1, %c0_i32 : i32
    %1 = arith.extui %0 : i1 to i32
    %c0_i32_0 = arith.constant 0 : i32
    %2 = arith.cmpi ne, %1, %c0_i32_0 : i32
    scf.if %2 {
      %cst_10 = arith.constant 0.000000e+00 : f32
      %12 = vector.broadcast %cst_10 : f32 to vector<2x128xf32>
      %c0_11 = arith.constant 0 : index
      %c0_12 = arith.constant 0 : index
      %13 = vector.load %arg8[%c0_11, %c0_12] : memref<2x128xf32, #tpu.memory_space<vmem>>, vector<2x128xf32>
      tpu.vector_store %arg8[%c0_11, %c0_12], %12 {strides = array<i32>} : memref<2x128xf32, #tpu.memory_space<vmem>>, vector<2x128xf32>,
    } else {
    }
    %c0 = arith.constant 0 : index
    %c0_1 = arith.constant 0 : index
    %3 = vector.load %arg8[%c0, %c0_1] : memref<2x128xf32, #tpu.memory_space<vmem>>, vector<2x128xf32>
    %c0_2 = arith.constant 0 : index
    %c0_3 = arith.constant 0 : index
    %4 = vector.load %arg2[%c0_2, %c0_3] : memref<2x256xbf16, #tpu.memory_space<vmem>>, vector<2x256xbf16>
    %c0_4 = arith.constant 0 : index
    %c0_5 = arith.constant 0 : index
    %5 = vector.load %arg3[%c0_4, %c0_5] : memref<256x128xbf16, #tpu.memory_space<vmem>>, vector<256x128xbf16>
    %cst = arith.constant dense<0.000000e+00> : vector<2x128xf32>
    %6 = tpu.matmul %4, %5, %cst {dimension_numbers = #tpu.dot_dimension_numbers<[1], [0], [0], [1], [0, 0, 1, 1], [], []>} : vector<2x256xbf16>, vector<256x128xbf16>, vector<2x128xf32> -> vector<2x128xf32>
    %7 = arith.addf %3, %6 : vector<2x128xf32>
    %c0_6 = arith.constant 0 : index
    %c0_7 = arith.constant 0 : index
    %8 = vector.load %arg8[%c0_6, %c0_7] : memref<2x128xf32, #tpu.memory_space<vmem>>, vector<2x128xf32>
    tpu.vector_store %arg8[%c0_6, %c0_7], %7 {strides = array<i32>} : memref<2x128xf32, #tpu.memory_space<vmem>>, vector<2x128xf32>,
    %c0_i32_8 = arith.constant 0 : i32
    %9 = arith.cmpi eq, %arg1, %c0_i32_8 : i32
    %10 = arith.extui %9 : i1 to i32
    %c0_i32_9 = arith.constant 0 : i32
    %11 = arith.cmpi ne, %10, %c0_i32_9 : i32
    scf.if %11 {
      %c0_10 = arith.constant 0 : index
      %c0_11 = arith.constant 0 : index
      %12 = vector.load %arg8[%c0_10, %c0_11] : memref<2x128xf32, #tpu.memory_space<vmem>>, vector<2x128xf32>
      %c0_12 = arith.constant 0 : index
      %c0_13 = arith.constant 0 : index
      %13 = vector.load %arg4[%c0_12, %c0_13] : memref<1x128xf32, #tpu.memory_space<vmem>>, vector<1x128xf32>
      %14 = vector.broadcast %13 : vector<1x128xf32> to vector<2x128xf32>
      %15 = arith.addf %12, %14 : vector<2x128xf32>
      %cst_14 = arith.constant 0.000000e+00 : f32
      %16 = vector.broadcast %cst_14 : f32 to vector<2x128xf32>
      %17 = arith.maximumf %15, %16 : vector<2x128xf32>
      %18 = arith.truncf %17 : vector<2x128xf32> to vector<2x128xbf16>
      %c0_15 = arith.constant 0 : index
      %c0_16 = arith.constant 0 : index
      %19 = vector.load %arg5[%c0_15, %c0_16] : memref<128x128xbf16, #tpu.memory_space<vmem>>, vector<128x128xbf16>
      %cst_17 = arith.constant dense<0.000000e+00> : vector<2x128xf32>
      %20 = tpu.matmul %18, %19, %cst_17 {dimension_numbers = #tpu.dot_dimension_numbers<[1], [0], [0], [1], [0, 0, 1, 1], [], []>} : vector<2x128xbf16>, vector<128x128xbf16>, vector<2x128xf32> -> vector<2x128xf32>
      %c0_18 = arith.constant 0 : index
      %c0_19 = arith.constant 0 : index
      %21 = vector.load %arg6[%c0_18, %c0_19] : memref<1x128xf32, #tpu.memory_space<vmem>>, vector<1x128xf32>
      %22 = vector.broadcast %21 : vector<1x128xf32> to vector<2x128xf32>
      %23 = arith.addf %20, %22 : vector<2x128xf32>
      %c0_20 = arith.constant 0 : index
      %c0_21 = arith.constant 0 : index
      %24 = vector.load %arg7[%c0_20, %c0_21] : memref<2x128xf32, #tpu.memory_space<vmem>>, vector<2x128xf32>
      tpu.vector_store %arg7[%c0_20, %c0_21], %23 {strides = array<i32>} : memref<2x128xf32, #tpu.memory_space<vmem>>, vector<2x128xf32>,
    } else {
    }
    return
  }
  func.func @transform_0(%arg0: i32, %arg1: i32) -> (i32, i32) {
    %c0_i32 = arith.constant 0 : i32
    return %arg0, %arg1 : i32, i32
  }
  func.func @transform_1(%arg0: i32, %arg1: i32) -> (i32, i32) {
    %c0_i32 = arith.constant 0 : i32
    %c0_i32_0 = arith.constant 0 : i32
    return %arg1, %c0_i32 : i32, i32
  }
  func.func @transform_2(%arg0: i32, %arg1: i32) -> (i32, i32) {
    %c0_i32 = arith.constant 0 : i32
    %c0_i32_0 = arith.constant 0 : i32
    %c0_i32_1 = arith.constant 0 : i32
    return %c0_i32, %c0_i32_0 : i32, i32
  }
  func.func @transform_3(%arg0: i32, %arg1: i32) -> (i32, i32) {
    %c0_i32 = arith.constant 0 : i32
    %c0_i32_0 = arith.constant 0 : i32
    %c0_i32_1 = arith.constant 0 : i32
    return %c0_i32, %c0_i32_0 : i32, i32
  }
  func.func @transform_4(%arg0: i32, %arg1: i32) -> (i32, i32) {
    %c0_i32 = arith.constant 0 : i32
    %c0_i32_0 = arith.constant 0 : i32
    %c0_i32_1 = arith.constant 0 : i32
    return %c0_i32, %c0_i32_0 : i32, i32
  }
  func.func @transform_5(%arg0: i32, %arg1: i32) -> (i32, i32) {
    %c0_i32 = arith.constant 0 : i32
    %c0_i32_0 = arith.constant 0 : i32
    return %arg0, %c0_i32 : i32, i32
  }
}

</mosaic_0001>

<llo_original>
// kernel: cnn_forward.5
$region0: #{cnn_forward.5}
  #allocation0 [shape = 'u32[]', space=smem, size = 0x4, offset = 0x4, fixed_abs, tag = 'smem constant byte address 0x4 - core index']
  #allocation1 [shape = 'u32[72,128]{1,0:T(1,128)}', space=vmem, size = 0x9000, scoped, tag = 'internal scratch']
  #allocation2 [shape = 'f32[2,128]{1,0:T(2,128)}', space=vmem, size = 0x400, scoped, tag = 'scratch operand']
  %s0 = inlined_call_operand.vmem [shape: bf16[2,256], index: 0, kind: input, shape index: {}]
  %s1 = inlined_call_operand.vmem [shape: bf16[256,128], index: 1, kind: input, shape index: {}]
  %s2 = inlined_call_operand.vmem [shape: f32[1,128], index: 2, kind: input, shape index: {}]
  %s3 = inlined_call_operand.vmem [shape: bf16[128,128], index: 3, kind: input, shape index: {}]
  %s4 = inlined_call_operand.vmem [shape: f32[1,128], index: 4, kind: input, shape index: {}]
  %s5 = inlined_call_operand.hbm [shape: f32[2,128], index: 5, kind: output, shape index: {}]
  %s6 = sld [smem:[#allocation0]]
  $region38: #{cnn_forward.5} parent=0
    _
  %s8 = ssub.s32 1, %s6
  %s9 = scalar_select 0, %s8, %s6
  $region1: #{cnn_forward.5} parent=0
    #allocation3 [shape = 'u8[1024]{0}', space=vmem, size = 0x400, scoped, tag = 'output window, operand 0, single buffered']
    #allocation4 [shape = 's32[1]{0}', space=sflag, size = 0x4, scoped, tag = 'scoped memory for cnn_forward.5']
    %10 = vsyncpa [#allocation4], 0
    // Predicated region
    $region2: #{cnn_forward.5} parent=1 // pred_check
      _
    $region3: #{cnn_forward.5} parent=1 // pred_check_branch
      %12 = sbr.rel (0) target = $region5
    $region4: #{cnn_forward.5} parent=1 // pred_region
      _
    $region5: #{cnn_forward.5} parent=1 // pred_fallthru
      _
    // Predicated region
    $region6: #{cnn_forward.5} parent=1 // pred_check
      _
    $region7: #{cnn_forward.5} parent=1 // pred_check_branch
      %14 = sbr.rel (0) target = $region9
    $region8: #{cnn_forward.5} parent=1 // pred_region
      _
    $region9: #{cnn_forward.5} parent=1 // pred_fallthru
      _
    // Predicated region
    $region10: #{cnn_forward.5} parent=1 // pred_check
      _
    $region11: #{cnn_forward.5} parent=1 // pred_check_branch
      %16 = sbr.rel (0) target = $region13
    $region12: #{cnn_forward.5} parent=1 // pred_region
      _
    $region13: #{cnn_forward.5} parent=1 // pred_fallthru
      _
    // Predicated region
    $region14: #{cnn_forward.5} parent=1 // pred_check
      _
    $region15: #{cnn_forward.5} parent=1 // pred_check_branch
      %18 = sbr.rel (0) target = $region17
    $region16: #{cnn_forward.5} parent=1 // pred_region
      _
    $region17: #{cnn_forward.5} parent=1 // pred_fallthru
      _
    // Predicated region
    $region18: #{cnn_forward.5} parent=1 // pred_check
      _
    $region19: #{cnn_forward.5} parent=1 // pred_check_branch
      %20 = sbr.rel (0) target = $region21
    $region20: #{cnn_forward.5} parent=1 // pred_region
      _
    $region21: #{cnn_forward.5} parent=1 // pred_fallthru
      _
    %p21 = scmp.eq.s32.totalorder 0, 0
    // Predicated region
    $region22: #{cnn_forward.5} parent=1 // pred_check
      %p22 = pneg %p21
    $region23: #{cnn_forward.5} parent=1 // pred_check_branch
      %24 = sbr.rel (%p22) target = $region25
    $region24: #{cnn_forward.5} parent=1 // pred_region
      %25 = vst [vmem:[#allocation2] sm:$0x3] 0.0
    $region25: #{cnn_forward.5} parent=1 // pred_fallthru
      _
    %v26 = vld [vmem:[#allocation2] sm:$0x3]
    %v27 = vld [vmem:[%s0] sm:$0x3]
    %v28 = vld [vmem:[%s1] sm:$0xf]
    %v29 = vld [vmem:[%s1 + $0x4] sm:$0xf]
    %v30 = vld [vmem:[%s1 + $0x8] sm:$0xf]
    %v31 = vld [vmem:[%s1 + $0xc] sm:$0xf]
    %v32 = vld [vmem:[%s1 + $0x10] sm:$0xf]
    %v33 = vld [vmem:[%s1 + $0x14] sm:$0xf]
    %v34 = vld [vmem:[%s1 + $0x18] sm:$0xf]
    %v35 = vld [vmem:[%s1 + $0x1c] sm:$0xf]
    %v36 = vld [vmem:[%s1 + $0x20] sm:$0xf]
    %v37 = vld [vmem:[%s1 + $0x24] sm:$0xf]
    %v38 = vld [vmem:[%s1 + $0x28] sm:$0xf]
    %v39 = vld [vmem:[%s1 + $0x2c] sm:$0xf]
    %v40 = vld [vmem:[%s1 + $0x30] sm:$0xf]
    %v41 = vld [vmem:[%s1 + $0x34] sm:$0xf]
    %v42 = vld [vmem:[%s1 + $0x38] sm:$0xf]
    %v43 = vld [vmem:[%s1 + $0x3c] sm:$0xf]
    %v44 = vld [vmem:[%s1 + $0x40] sm:$0xf]
    %v45 = vld [vmem:[%s1 + $0x44] sm:$0xf]
    %v46 = vld [vmem:[%s1 + $0x48] sm:$0xf]
    %v47 = vld [vmem:[%s1 + $0x4c] sm:$0xf]
    %v48 = vld [vmem:[%s1 + $0x50] sm:$0xf]
    %v49 = vld [vmem:[%s1 + $0x54] sm:$0xf]
    %v50 = vld [vmem:[%s1 + $0x58] sm:$0xf]
    %v51 = vld [vmem:[%s1 + $0x5c] sm:$0xf]
    %v52 = vld [vmem:[%s1 + $0x60] sm:$0xf]
    %v53 = vld [vmem:[%s1 + $0x64] sm:$0xf]
    %v54 = vld [vmem:[%s1 + $0x68] sm:$0xf]
    %v55 = vld [vmem:[%s1 + $0x6c] sm:$0xf]
    %v56 = vld [vmem:[%s1 + $0x70] sm:$0xf]
    %v57 = vld [vmem:[%s1 + $0x74] sm:$0xf]
    %v58 = vld [vmem:[%s1 + $0x78] sm:$0xf]
    %v59 = vld [vmem:[%s1 + $0x7c] sm:$0xf]
    %61 = vst [vmem:[#allocation1] ss:$9 sm:$0xff] %v27
    %v62 = vld [vmem:[#allocation1] sm:$0xff]
    %v63 = vld [vmem:[#allocation1 + $0x9] sm:$0xff]
    %v98 = vunpack.c.l.b16 %v28
    %v99 = vunpack.c.l.b16 %v29
    %v100 = vunpack.c.l.b16 %v30
    %v101 = vunpack.c.l.b16 %v31
    %v102 = vunpack.c.l.b16 %v32
    %v103 = vunpack.c.l.b16 %v33
    %v104 = vunpack.c.l.b16 %v34
    %v105 = vunpack.c.l.b16 %v35
    %v106 = vunpack.c.l.b16 %v36
    %v107 = vunpack.c.l.b16 %v37
    %v108 = vunpack.c.l.b16 %v38
    %v109 = vunpack.c.l.b16 %v39
    %v110 = vunpack.c.l.b16 %v40
    %v111 = vunpack.c.l.b16 %v41
    %v112 = vunpack.c.l.b16 %v42
    %v113 = vunpack.c.l.b16 %v43
    %v114 = vunpack.c.l.b16 %v44
    %v115 = vunpack.c.l.b16 %v45
    %v116 = vunpack.c.l.b16 %v46
    %v117 = vunpack.c.l.b16 %v47
    %v118 = vunpack.c.l.b16 %v48
    %v119 = vunpack.c.l.b16 %v49
    %v120 = vunpack.c.l.b16 %v50
    %v121 = vunpack.c.l.b16 %v51
    %v122 = vunpack.c.l.b16 %v52
    %v123 = vunpack.c.l.b16 %v53
    %v124 = vunpack.c.l.b16 %v54
    %v125 = vunpack.c.l.b16 %v55
    %v126 = vunpack.c.l.b16 %v56
    %v127 = vunpack.c.l.b16 %v57
    %v128 = vunpack.c.l.b16 %v58
    %v129 = vunpack.c.l.b16 %v59
    %v130 = vpack.c.b16 %v99, %v98
    %v131 = vpack.c.b16 %v101, %v100
    %v132 = vpack.c.b16 %v103, %v102
    %v133 = vpack.c.b16 %v105, %v104
    %v134 = vpack.c.b16 %v107, %v106
    %v135 = vpack.c.b16 %v109, %v108
    %v136 = vpack.c.b16 %v111, %v110
    %v137 = vpack.c.b16 %v113, %v112
    %v138 = vpack.c.b16 %v115, %v114
    %v139 = vpack.c.b16 %v117, %v116
    %v140 = vpack.c.b16 %v119, %v118
    %v141 = vpack.c.b16 %v121, %v120
    %v142 = vpack.c.b16 %v123, %v122
    %v143 = vpack.c.b16 %v125, %v124
    %v144 = vpack.c.b16 %v127, %v126
    %v145 = vpack.c.b16 %v129, %v128
    %162 = vmatpush.bf16.msra.mxu0 %v137
    %163 = vmatpush.bf16.msra.mxu0 %v136
    %164 = vmatpush.bf16.msra.mxu0 %v135
    %165 = vmatpush.bf16.msra.mxu0 %v134
    %166 = vmatpush.bf16.msra.mxu0 %v133
    %167 = vmatpush.bf16.msra.mxu0 %v132
    %168 = vmatpush.bf16.msra.mxu0 %v131
    %169 = vmatpush.bf16.msra.mxu0 %v130
    %170 = vmatmul.bf16.gmra.mxu0 %v62
    %v171 = vpop.f32.mrf.mxu0
    %v172 = vadd.f32 0.0, %v171
    %v173 = vpop.f32.mrf.mxu0
    %174 = vdwg.mxu0
    %175 = vmatpush.bf16.msra.mxu0 %v145
    %176 = vmatpush.bf16.msra.mxu0 %v144
    %177 = vmatpush.bf16.msra.mxu0 %v143
    %178 = vmatpush.bf16.msra.mxu0 %v142
    %179 = vmatpush.bf16.msra.mxu0 %v141
    %180 = vmatpush.bf16.msra.mxu0 %v140
    %181 = vmatpush.bf16.msra.mxu0 %v139
    %182 = vmatpush.bf16.msra.mxu0 %v138
    %183 = vmatmul.bf16.gmra.mxu0 %v63
    %v184 = vpop.f32.mrf.mxu0
    %v185 = vadd.f32 %v172, %v184
    %v186 = vpop.f32.mrf.mxu0
    %187 = vdwg.mxu0
    %v188 = vadd.f32 %v26, %v185
    %189 = vst [vmem:[#allocation2] sm:$0x3] %v188
    // Predicated region
    $region26: #{cnn_forward.5} parent=1 // pred_check
      %p190 = pneg %p21
    $region27: #{cnn_forward.5} parent=1 // pred_check_branch
      %192 = sbr.rel (%p190) target = $region29
    $region28: #{cnn_forward.5} parent=1 // pred_region
      %v193 = vld [vmem:[#allocation2] sm:$0x3]
      %v194 = vld [vmem:[%s2] sm:$0x1]
      %v196 = vperm.slane %v194, 0
      %v198 = vadd.f32 %v193, %v196
      %v199 = vmax.f32 %v198, 0.0
      %v200 = vpack.c.bf16 %v199, %v199
      %v201 = vld [vmem:[%s3] sm:$0xf]
      %v202 = vld [vmem:[%s3 + $0x4] sm:$0xf]
      %v203 = vld [vmem:[%s3 + $0x8] sm:$0xf]
      %v204 = vld [vmem:[%s3 + $0xc] sm:$0xf]
      %v205 = vld [vmem:[%s3 + $0x10] sm:$0xf]
      %v206 = vld [vmem:[%s3 + $0x14] sm:$0xf]
      %v207 = vld [vmem:[%s3 + $0x18] sm:$0xf]
      %v208 = vld [vmem:[%s3 + $0x1c] sm:$0xf]
      %v209 = vld [vmem:[%s3 + $0x20] sm:$0xf]
      %v210 = vld [vmem:[%s3 + $0x24] sm:$0xf]
      %v211 = vld [vmem:[%s3 + $0x28] sm:$0xf]
      %v212 = vld [vmem:[%s3 + $0x2c] sm:$0xf]
      %v213 = vld [vmem:[%s3 + $0x30] sm:$0xf]
      %v214 = vld [vmem:[%s3 + $0x34] sm:$0xf]
      %v215 = vld [vmem:[%s3 + $0x38] sm:$0xf]
      %v216 = vld [vmem:[%s3 + $0x3c] sm:$0xf]
      %v217 = vld [vmem:[%s4] sm:$0x1]
      %v219 = vperm.slane %v217, 0
      %v237 = vunpack.c.l.b16 %v201
      %v238 = vunpack.c.l.b16 %v202
      %v239 = vunpack.c.l.b16 %v203
      %v240 = vunpack.c.l.b16 %v204
      %v241 = vunpack.c.l.b16 %v205
      %v242 = vunpack.c.l.b16 %v206
      %v243 = vunpack.c.l.b16 %v207
      %v244 = vunpack.c.l.b16 %v208
      %v245 = vunpack.c.l.b16 %v209
      %v246 = vunpack.c.l.b16 %v210
      %v247 = vunpack.c.l.b16 %v211
      %v248 = vunpack.c.l.b16 %v212
      %v249 = vunpack.c.l.b16 %v213
      %v250 = vunpack.c.l.b16 %v214
      %v251 = vunpack.c.l.b16 %v215
      %v252 = vunpack.c.l.b16 %v216
      %v253 = vpack.c.b16 %v238, %v237
      %v254 = vpack.c.b16 %v240, %v239
      %v255 = vpack.c.b16 %v242, %v241
      %v256 = vpack.c.b16 %v244, %v243
      %v257 = vpack.c.b16 %v246, %v245
      %v258 = vpack.c.b16 %v248, %v247
      %v259 = vpack.c.b16 %v250, %v249
      %v260 = vpack.c.b16 %v252, %v251
      %269 = vmatpush.bf16.msra.mxu0 %v260
      %270 = vmatpush.bf16.msra.mxu0 %v259
      %271 = vmatpush.bf16.msra.mxu0 %v258
      %272 = vmatpush.bf16.msra.mxu0 %v257
      %273 = vmatpush.bf16.msra.mxu0 %v256
      %274 = vmatpush.bf16.msra.mxu0 %v255
      %275 = vmatpush.bf16.msra.mxu0 %v254
      %276 = vmatpush.bf16.msra.mxu0 %v253
      %277 = vmatmul.bf16.gmra.mxu0 %v200
      %v278 = vpop.f32.mrf.mxu0
      %v279 = vadd.f32 %v219, %v278
      %v280 = vpop.f32.mrf.mxu0
      %281 = vdwg.mxu0
      %282 = vst [vmem:[#allocation3] sm:$0x3] %v279
    $region29: #{cnn_forward.5} parent=1 // pred_fallthru
      _
    // Predicated region
    $region30: #{cnn_forward.5} parent=1 // pred_check
      _
    $region31: #{cnn_forward.5} parent=1 // pred_check_branch
      %284 = sbr.rel (0) target = $region33
    $region32: #{cnn_forward.5} parent=1 // pred_region
      %286 = vsyncadd [#allocation4], 0
      %s288 = sshll.u32 [#allocation3], 4
      %s289 = int_to_ptr.vmem [resolvable:$true] %s288
      %s290 = sshll.u32 %s5, 4
      %s291 = int_to_ptr.hbm [resolvable:$true] %s290
      %293 = dma.vmem_to_hbm [thread:$0]  %s289, 32, %s291, [#allocation4]
    $region33: #{cnn_forward.5} parent=1 // pred_fallthru
      _
    // Predicated region
    $region34: #{cnn_forward.5} parent=1 // pred_check
      _
    $region35: #{cnn_forward.5} parent=1 // pred_check_branch
      %295 = sbr.rel (0) target = $region37
    $region36: #{cnn_forward.5} parent=1 // pred_region
      %297 = dma.done [#allocation4], 32
    $region37: #{cnn_forward.5} parent=1 // pred_fallthru
      _
    %298 = vsyncpa [#allocation4], 1

// kernel: cnn_forward.4
$region0: #{cnn_forward.4}
  #allocation0 [shape = 'u32[]', space=smem, size = 0x4, offset = 0x4, fixed_abs, tag = 'smem constant byte address 0x4 - core index']
  #allocation1 [shape = 'u32[72,128]{1,0:T(1,128)}', space=vmem, size = 0x9000, scoped, tag = 'internal scratch']
  #allocation2 [shape = 'bf16[26,288]{1,0:T(8,128)(2,1)}', space=vmem, size = 0x6000, scoped, tag = 'scratch operand']
  #allocation3 [shape = 'f32[26,64]{1,0:T(8,128)}', space=vmem, size = 0x4000, scoped, tag = 'scratch operand']
  #allocation4 [shape = 'f32[4,64]{1,0:T(4,128)}', space=vmem, size = 0x800, scoped, tag = 'scratch operand']
  %s0 = inlined_call_operand.vmem [shape: bf16[2,49,32], index: 0, kind: input, shape index: {}]
  %s1 = inlined_call_operand.vmem [shape: bf16[288,64], index: 1, kind: input, shape index: {}]
  %s2 = inlined_call_operand.vmem [shape: f32[1,64], index: 2, kind: input, shape index: {}]
  %s3 = inlined_call_operand.vmem [shape: bf16[2,4,64], index: 3, kind: output, shape index: {}]
  %s4 = sld [smem:[#allocation0]]
  $region45: #{cnn_forward.4} parent=0
    _
  %s6 = ssub.s32 1, %s4
  %s7 = scalar_select 0, %s6, %s4
  loop: start=0, step=1, limit=4
  $region2: #{cnn_forward.4} parent=0 // loop_pre_header
    _
  $region3: #{cnn_forward.4} parent=0 // loop_header
    %s9 = sphi 0, %s13
    %p10 = scmp.ge.s32.totalorder %s9, 4
    %s19 = sphi 0, %s21
    %s22 = sphi 0, %s19
    %s23 = sphi 0, %s22
    %s39 = sphi 0, %s23
    %s43 = sphi 0, %s43
    %s45 = sphi 0, %s43
    %s46 = sphi 0, %s45
    %s60 = sphi 0, %s46
    %s64 = sphi 0, %s64
    %s66 = sphi 0, %s64
    %s67 = sphi 0, %s66
    %s81 = sphi 0, %s67
    %s87 = sphi 0, %s89
    %s90 = sphi 0, %s87
    %s91 = sphi 0, %s90
    %s107 = sphi 0, %s91
  $region4: #{cnn_forward.4} parent=0 // loop_header_branch
    %12 = sbr.rel (%p10) target = $region8
  $region5: #{cnn_forward.4} parent=0 // loop_body
    %s14 = ssub.s32 %s9, 1
    %s15 = ssub.s32 %s9, 2
    %s16 = sadd.s32 %s9, 1
    %s17 = ssub.s32 %s9, %s16
    %p18 = scmp.eq.s32.totalorder %s17, 0
    %s20 = sadd.s32 %s19, 1
    %s21 = scalar_select %p18, %s19, %s20
    %p24 = pneg %p18
    %p25 = scmp.eq.s32.totalorder %s9, 1
    %p26 = por %p24, %p25
    %p27 = scmp.ne.s32.totalorder %s19, %s22
    %p28 = scmp.eq.s32.totalorder %s9, 0
    %p29 = por %p27, %p28
    %p30 = scmp.ne.s32.totalorder %s19, %s22
    %p31 = scmp.eq.s32.totalorder %s14, 1
    %p32 = por %p30, %p31
    %p33 = scmp.ne.s32.totalorder %s22, %s23
    %p34 = scmp.eq.s32.totalorder %s14, 0
    %p35 = por %p33, %p34
    %p36 = scmp.ne.s32.totalorder %s22, %s23
    %p37 = scmp.eq.s32.totalorder %s15, 1
    %p38 = por %p36, %p37
    %p40 = scmp.ne.s32.totalorder %s23, %s39
    %p41 = scmp.eq.s32.totalorder %s15, 0
    %p42 = por %p40, %p41
    %s44 = sadd.s32 %s43, 1
    %p47 = scmp.eq.s32.totalorder %s9, 1
    %p48 = scmp.ne.s32.totalorder %s43, %s45
    %p49 = scmp.eq.s32.totalorder %s9, 0
    %p50 = por %p48, %p49
    %p51 = scmp.ne.s32.totalorder %s43, %s45
    %p52 = scmp.eq.s32.totalorder %s14, 1
    %p53 = por %p51, %p52
    %p54 = scmp.ne.s32.totalorder %s45, %s46
    %p55 = scmp.eq.s32.totalorder %s14, 0
    %p56 = por %p54, %p55
    %p57 = scmp.ne.s32.totalorder %s45, %s46
    %p58 = scmp.eq.s32.totalorder %s15, 1
    %p59 = por %p57, %p58
    %p61 = scmp.ne.s32.totalorder %s46, %s60
    %p62 = scmp.eq.s32.totalorder %s15, 0
    %p63 = por %p61, %p62
    %s65 = sadd.s32 %s64, 1
    %p68 = scmp.eq.s32.totalorder %s9, 1
    %p69 = scmp.ne.s32.totalorder %s64, %s66
    %p70 = scmp.eq.s32.totalorder %s9, 0
    %p71 = por %p69, %p70
    %p72 = scmp.ne.s32.totalorder %s64, %s66
    %p73 = scmp.eq.s32.totalorder %s14, 1
    %p74 = por %p72, %p73
    %p75 = scmp.ne.s32.totalorder %s66, %s67
    %p76 = scmp.eq.s32.totalorder %s14, 0
    %p77 = por %p75, %p76
    %p78 = scmp.ne.s32.totalorder %s66, %s67
    %p79 = scmp.eq.s32.totalorder %s15, 1
    %p80 = por %p78, %p79
    %p82 = scmp.ne.s32.totalorder %s67, %s81
    %p83 = scmp.eq.s32.totalorder %s15, 0
    %p84 = por %p82, %p83
    %s85 = ssub.s32 %s9, %s16
    %p86 = scmp.eq.s32.totalorder %s85, 0
    %s88 = sadd.s32 %s87, 1
    %s89 = scalar_select %p86, %s87, %s88
    %p92 = pneg %p86
    %p93 = scmp.eq.s32.totalorder %s9, 1
    %p94 = por %p92, %p93
    %p95 = scmp.ne.s32.totalorder %s87, %s90
    %p96 = scmp.eq.s32.totalorder %s9, 0
    %p97 = por %p95, %p96
    %p98 = scmp.ne.s32.totalorder %s87, %s90
    %p99 = scmp.eq.s32.totalorder %s14, 1
    %p100 = por %p98, %p99
    %p101 = scmp.ne.s32.totalorder %s90, %s91
    %p102 = scmp.eq.s32.totalorder %s14, 0
    %p103 = por %p101, %p102
    %p104 = scmp.ne.s32.totalorder %s90, %s91
    %p105 = scmp.eq.s32.totalorder %s15, 1
    %p106 = por %p104, %p105
    %p108 = scmp.ne.s32.totalorder %s91, %s107
    %p109 = scmp.eq.s32.totalorder %s15, 0
    %p110 = por %p108, %p109
    %p111 = scmp.le.s32.totalorder 1, %s9
    %p112 = scmp.lt.s32.totalorder %s9, 3
    %p113 = pnand %p111, %p112
    %p114 = pneg %p113
    // Predicated region
    $region9: #{cnn_forward.4} parent=5 // pred_check
      _
    $region10: #{cnn_forward.4} parent=5 // pred_check_branch
      %116 = sbr.rel (%p113) target = $region12
    $region11: #{cnn_forward.4} parent=5 // pred_region
      %s117 = ssub.s32 %s9, 1
      // Predicated region
      $region13: #{cnn_forward.4} parent=11 // pred_check
        %p118 = pneg %p56
      $region14: #{cnn_forward.4} parent=11 // pred_check_branch
        %120 = sbr.rel (%p118) target = $region16
      $region15: #{cnn_forward.4} parent=11 // pred_region
        _
      $region16: #{cnn_forward.4} parent=11 // pred_fallthru
        _
      // Predicated region
      $region17: #{cnn_forward.4} parent=11 // pred_check
        %p121 = pneg %p77
      $region18: #{cnn_forward.4} parent=11 // pred_check_branch
        %123 = sbr.rel (%p121) target = $region20
      $region19: #{cnn_forward.4} parent=11 // pred_region
        _
      $region20: #{cnn_forward.4} parent=11 // pred_fallthru
        _
    $region12: #{cnn_forward.4} parent=5 // pred_fallthru
      _
    %p124 = scmp.lt.s32.totalorder %s9, 2
    // Predicated region
    $region21: #{cnn_forward.4} parent=5 // pred_check
      %p125 = pneg %p124
    $region22: #{cnn_forward.4} parent=5 // pred_check_branch
      %127 = sbr.rel (%p125) target = $region24
    $region23: #{cnn_forward.4} parent=5 // pred_region
      // Predicated region
      $region25: #{cnn_forward.4} parent=23 // pred_check
        %p128 = pneg %p29
      $region26: #{cnn_forward.4} parent=23 // pred_check_branch
        %130 = sbr.rel (%p128) target = $region28
      $region27: #{cnn_forward.4} parent=23 // pred_region
        %p131 = scmp.lt.s32.totalorder %s9, 1
        %s132 = scalar_select %p131, %s9, 1
        %s133 = smul.addr %s132, 7
        %s134 = smul.addr %s133, 4
        %s135 = scalar_lea.vmem %s0, %s134
      $region28: #{cnn_forward.4} parent=23 // pred_fallthru
        _
    $region24: #{cnn_forward.4} parent=5 // pred_fallthru
      _
    %p136 = scmp.le.s32.totalorder 1, %s9
    %p137 = scmp.lt.s32.totalorder %s9, 3
    %p138 = pnand %p136, %p137
    %p139 = pneg %p138
    // Predicated region
    $region29: #{cnn_forward.4} parent=5 // pred_check
      _
    $region30: #{cnn_forward.4} parent=5 // pred_check_branch
      %141 = sbr.rel (%p138) target = $region32
    $region31: #{cnn_forward.4} parent=5 // pred_region
      %s142 = ssub.s32 %s9, 1
      %p143 = scmp.lt.s32.totalorder %s14, 1
      %s144 = scalar_select %p143, %s14, 1
      %s145 = smul.addr %s144, 7
      %s146 = smul.addr %s145, 4
      %s147 = scalar_lea.vmem %s0, %s146
      %p148 = pneg %p35
      %p149 = pneg %p32
      %p150 = pneg %p56
      %p151 = pneg %p53
      %p152 = pneg %p77
      %p153 = pneg %p74
      %p154 = pneg %p103
      %p155 = pneg %p100
      %p156 = scmp.lt.s32.totalorder %s14, 1
      %s157 = scalar_select %p156, %s14, 1
      %s158 = smul.addr %s157, 2
      %s159 = scalar_lea.vmem %s3, %s158
      %p160 = scmp.lt.s32.totalorder %s14, 1
      %s161 = scalar_select %p160, %s14, 1
      %s162 = smul.addr %s161, 7
      %s163 = smul.addr %s162, 4
      %s164 = scalar_lea.vmem %s0, %s163
      %p165 = scmp.lt.s32.totalorder %s14, 1
      %s166 = scalar_select %p165, %s14, 1
      %s167 = smul.addr %s166, 2
      %s168 = scalar_lea.vmem %s3, %s167
      %v170 = vld [vmem:[%s2] sm:$0x1]
      %v171 = vld [vmem:[%s164] sm:$0xf]
      %v172 = vld [vmem:[%s164 + $0x4] sm:$0xf]
      %v173 = vld [vmem:[%s164 + $0x8] sm:$0xf]
      %v174 = vld [vmem:[%s164 + $0xc] sm:$0x1]
      %vm175 = vcmask 257024
      %176 = vst.msk [vmem:[#allocation2] sm:$0xf] %vm175, %v171
      %177 = vst.msk [vmem:[#allocation2 + $0xc] sm:$0xf] %vm175, %v172
      %178 = vst.msk [vmem:[#allocation2 + $0x18] sm:$0xf] %vm175, %v173
      %vm179 = vcmask 253952
      %180 = vst.msk [vmem:[#allocation2 + $0x24] sm:$0x1] %vm179, %v174
      %v181 = vld [vmem:[%s164] sm:$0xf]
      %v182 = vld [vmem:[%s164 + $0x4] sm:$0xf]
      %v183 = vld [vmem:[%s164 + $0x8] sm:$0xf]
      %v184 = vld [vmem:[%s164 + $0xc] sm:$0x3]
      %vm185 = vsmask.f32 3328
      %vm186 = vsmask.f32 7440
      %vm187 = vmor %vm185, %vm186
      %v189 = vshrl.u32 %v181, 16
      %v191 = vrot.slane %v189, 4
      %v192 = vshll.u32 %v181, 16
      %v194 = vrot.slane %v192, 5
      %v195 = vor.u32 %v191, %v194
      %v196 = vrot.slane %v195, 4
      %v198 = vshll.u32 %v182, 16
      %v200 = vrot.slane %v198, 5
      %v201 = vsel %vm187, %v196, %v200
      %v202 = vshrl.u32 %v182, 16
      %v204 = vrot.slane %v202, 4
      %v205 = vor.u32 %v204, %v200
      %v206 = vrot.slane %v205, 4
      %v208 = vshll.u32 %v183, 16
      %v210 = vrot.slane %v208, 5
      %v211 = vsel %vm187, %v206, %v210
      %v212 = vshrl.u32 %v183, 16
      %v214 = vrot.slane %v212, 4
      %v215 = vor.u32 %v214, %v210
      %v216 = vrot.slane %v215, 4
      %v218 = vshll.u32 %v184, 16
      %v220 = vrot.slane %v218, 5
      %v221 = vsel %vm187, %v216, %v220
      %v222 = vshrl.u32 %v184, 16
      %v224 = vrot.slane %v222, 4
      %v225 = vor.u32 %v224, %v220
      %v226 = vrot.slane %v225, 4
      %227 = vrot.lane.b32.xlu0 %v201, 32
      %v228 = vpop.permute.xlu0 %227
      %229 = vrot.lane.b32.xlu0 %v211, 32
      %v230 = vpop.permute.xlu0 %229
      %231 = vrot.lane.b32.xlu0 %v221, 32
      %v232 = vpop.permute.xlu0 %231
      %233 = vrot.lane.b32.xlu0 %v226, 32
      %v234 = vpop.permute.xlu0 %233
      %vm239 = vcmask 519424
      %240 = vst.msk [vmem:[#allocation2] sm:$0xf] %vm239, %v228
      %241 = vst.msk [vmem:[#allocation2 + $0xc] sm:$0xf] %vm239, %v230
      %242 = vst.msk [vmem:[#allocation2 + $0x18] sm:$0xf] %vm239, %v232
      %vm243 = vcmask 516352
      %244 = vst.msk [vmem:[#allocation2 + $0x24] sm:$0x1] %vm243, %v234
      %v245 = vld [vmem:[%s164] sm:$0xe]
      %v246 = vld [vmem:[%s164 + $0x4] sm:$0xf]
      %v247 = vld [vmem:[%s164 + $0x8] sm:$0xf]
      %v248 = vld [vmem:[%s164 + $0xc] sm:$0x3]
      %vm253 = vcmask 1042432
      %vm254 = vcmask 1046532
      %vm255 = vmor %vm253, %vm254
      %v256 = vrot.slane %v245, 5
      %v257 = vrot.slane %v256, 4
      %v258 = vrot.slane %v246, 5
      %v259 = vsel %vm255, %v257, %v258
      %v260 = vrot.slane %v258, 4
      %v261 = vrot.slane %v247, 5
      %v262 = vsel %vm255, %v260, %v261
      %v263 = vrot.slane %v261, 4
      %v264 = vrot.slane %v248, 5
      %v265 = vsel %vm255, %v263, %v264
      %v266 = vrot.slane %v264, 4
      %267 = vrot.lane.b32.xlu0 %v259, 64
      %v268 = vpop.permute.xlu0 %267
      %269 = vrot.lane.b32.xlu0 %v262, 64
      %v270 = vpop.permute.xlu0 %269
      %271 = vrot.lane.b32.xlu0 %v265, 64
      %v272 = vpop.permute.xlu0 %271
      %273 = vrot.lane.b32.xlu0 %v266, 64
      %v274 = vpop.permute.xlu0 %273
      %vm279 = vcmask 781824
      %280 = vst.msk [vmem:[#allocation2] sm:$0xf] %vm279, %v268
      %281 = vst.msk [vmem:[#allocation2 + $0xc] sm:$0xf] %vm279, %v270
      %282 = vst.msk [vmem:[#allocation2 + $0x18] sm:$0xf] %vm279, %v272
      %vm283 = vcmask 778752
      %284 = vst.msk [vmem:[#allocation2 + $0x24] sm:$0x1] %vm283, %v274
      %v285 = vld [vmem:[%s164] sm:$0x8]
      %v286 = vld [vmem:[%s164 + $0x4] sm:$0xf]
      %v287 = vld [vmem:[%s164 + $0x8] sm:$0xf]
      %v288 = vld [vmem:[%s164 + $0xc] sm:$0xf]
      %v289 = vld [vmem:[%s164 + $0x10] sm:$0x1]
      %vm290 = vsmask.f32 256
      %vm291 = vsmask.f32 4368
      %vm292 = vmor %vm290, %vm291
      %v294 = vshrl.u32 %v285, 16
      %v296 = vrot.slane %v294, 7
      %v297 = vrot.slane %v296, 4
      %v299 = vshrl.u32 %v286, 16
      %v301 = vrot.slane %v299, 7
      %v302 = vshll.u32 %v286, 16
      %v304 = vor.u32 %v301, %v302
      %v305 = vsel %vm292, %v297, %v304
      %v306 = vrot.slane %v301, 4
      %v308 = vshrl.u32 %v287, 16
      %v310 = vrot.slane %v308, 7
      %v311 = vshll.u32 %v287, 16
      %v313 = vor.u32 %v310, %v311
      %v314 = vsel %vm292, %v306, %v313
      %v315 = vrot.slane %v310, 4
      %v317 = vshrl.u32 %v288, 16
      %v319 = vrot.slane %v317, 7
      %v320 = vshll.u32 %v288, 16
      %v322 = vor.u32 %v319, %v320
      %v323 = vsel %vm292, %v315, %v322
      %v324 = vrot.slane %v319, 4
      %v326 = vshll.u32 %v289, 16
      %v328 = vsel %vm292, %v324, %v326
      %329 = vrot.lane.b32.xlu0 %v305, 96
      %v330 = vpop.permute.xlu0 %329
      %331 = vrot.lane.b32.xlu0 %v314, 96
      %v332 = vpop.permute.xlu0 %331
      %333 = vrot.lane.b32.xlu0 %v323, 96
      %v334 = vpop.permute.xlu0 %333
      %335 = vrot.lane.b32.xlu0 %v328, 96
      %v336 = vpop.permute.xlu0 %335
      %vm341 = vcmask 1044224
      %342 = vst.msk [vmem:[#allocation2] sm:$0xf] %vm341, %v330
      %343 = vst.msk [vmem:[#allocation2 + $0xc] sm:$0xf] %vm341, %v332
      %344 = vst.msk [vmem:[#allocation2 + $0x18] sm:$0xf] %vm341, %v334
      %vm345 = vcmask 1041152
      %346 = vst.msk [vmem:[#allocation2 + $0x24] sm:$0x1] %vm345, %v336
      %v347 = vld [vmem:[%s164 + $0x4] sm:$0xf]
      %v348 = vld [vmem:[%s164 + $0x8] sm:$0xf]
      %v349 = vld [vmem:[%s164 + $0xc] sm:$0xf]
      %v350 = vld [vmem:[%s164 + $0x10] sm:$0x1]
      %351 = vst.msk [vmem:[#allocation2 + $0x4] sm:$0xf] %vm175, %v347
      %352 = vst.msk [vmem:[#allocation2 + $0x10] sm:$0xf] %vm175, %v348
      %353 = vst.msk [vmem:[#allocation2 + $0x1c] sm:$0xf] %vm175, %v349
      %354 = vst.msk [vmem:[#allocation2 + $0x28] sm:$0x1] %vm179, %v350
      %v355 = vld [vmem:[%s164 + $0x4] sm:$0xf]
      %v356 = vld [vmem:[%s164 + $0x8] sm:$0xf]
      %v357 = vld [vmem:[%s164 + $0xc] sm:$0xf]
      %v358 = vld [vmem:[%s164 + $0x10] sm:$0x3]
      %v360 = vshrl.u32 %v355, 16
      %v362 = vrot.slane %v360, 4
      %v363 = vshll.u32 %v355, 16
      %v365 = vrot.slane %v363, 5
      %v366 = vor.u32 %v362, %v365
      %v367 = vrot.slane %v366, 4
      %v369 = vshll.u32 %v356, 16
      %v371 = vrot.slane %v369, 5
      %v372 = vsel %vm187, %v367, %v371
      %v373 = vshrl.u32 %v356, 16
      %v375 = vrot.slane %v373, 4
      %v376 = vor.u32 %v375, %v371
      %v377 = vrot.slane %v376, 4
      %v379 = vshll.u32 %v357, 16
      %v381 = vrot.slane %v379, 5
      %v382 = vsel %vm187, %v377, %v381
      %v383 = vshrl.u32 %v357, 16
      %v385 = vrot.slane %v383, 4
      %v386 = vor.u32 %v385, %v381
      %v387 = vrot.slane %v386, 4
      %v389 = vshll.u32 %v358, 16
      %v391 = vrot.slane %v389, 5
      %v392 = vsel %vm187, %v387, %v391
      %v393 = vshrl.u32 %v358, 16
      %v395 = vrot.slane %v393, 4
      %v396 = vor.u32 %v395, %v391
      %v397 = vrot.slane %v396, 4
      %398 = vrot.lane.b32.xlu0 %v372, 32
      %v399 = vpop.permute.xlu0 %398
      %400 = vrot.lane.b32.xlu0 %v382, 32
      %v401 = vpop.permute.xlu0 %400
      %402 = vrot.lane.b32.xlu0 %v392, 32
      %v403 = vpop.permute.xlu0 %402
      %404 = vrot.lane.b32.xlu0 %v397, 32
      %v405 = vpop.permute.xlu0 %404
      %410 = vst.msk [vmem:[#allocation2 + $0x4] sm:$0xf] %vm239, %v399
      %411 = vst.msk [vmem:[#allocation2 + $0x10] sm:$0xf] %vm239, %v401
      %412 = vst.msk [vmem:[#allocation2 + $0x1c] sm:$0xf] %vm239, %v403
      %413 = vst.msk [vmem:[#allocation2 + $0x28] sm:$0x1] %vm243, %v405
      %v414 = vld [vmem:[%s164 + $0x4] sm:$0x8]
      %v415 = vld [vmem:[%s164 + $0x8] sm:$0xf]
      %v416 = vld [vmem:[%s164 + $0xc] sm:$0xf]
      %v417 = vld [vmem:[%s164 + $0x10] sm:$0xf]
      %vm422 = vcmask 1040384
      %vm423 = vcmask 1044484
      %vm424 = vmor %vm422, %vm423
      %v425 = vrot.slane %v414, 7
      %v426 = vrot.slane %v425, 4
      %v427 = vrot.slane %v415, 7
      %v428 = vsel %vm424, %v426, %v427
      %v429 = vrot.slane %v427, 4
      %v430 = vrot.slane %v416, 7
      %v431 = vsel %vm424, %v429, %v430
      %v432 = vrot.slane %v430, 4
      %v433 = vrot.slane %v417, 7
      %v434 = vsel %vm424, %v432, %v433
      %v435 = vrot.slane %v433, 4
      %436 = vrot.lane.b32.xlu0 %v428, 64
      %v437 = vpop.permute.xlu0 %436
      %438 = vrot.lane.b32.xlu0 %v431, 64
      %v439 = vpop.permute.xlu0 %438
      %440 = vrot.lane.b32.xlu0 %v434, 64
      %v441 = vpop.permute.xlu0 %440
      %442 = vrot.lane.b32.xlu0 %v435, 64
      %v443 = vpop.permute.xlu0 %442
      %448 = vst.msk [vmem:[#allocation2 + $0x4] sm:$0xf] %vm279, %v437
      %449 = vst.msk [vmem:[#allocation2 + $0x10] sm:$0xf] %vm279, %v439
      %450 = vst.msk [vmem:[#allocation2 + $0x1c] sm:$0xf] %vm279, %v441
      %451 = vst.msk [vmem:[#allocation2 + $0x28] sm:$0x1] %vm283, %v443
      %v452 = vld [vmem:[%s164 + $0x4] sm:$0x8]
      %v453 = vld [vmem:[%s164 + $0x8] sm:$0xf]
      %v454 = vld [vmem:[%s164 + $0xc] sm:$0xf]
      %v455 = vld [vmem:[%s164 + $0x10] sm:$0xf]
      %v456 = vld [vmem:[%s164 + $0x14] sm:$0x1]
      %v458 = vshrl.u32 %v452, 16
      %v460 = vrot.slane %v458, 7
      %v461 = vrot.slane %v460, 4
      %v463 = vshrl.u32 %v453, 16
      %v465 = vrot.slane %v463, 7
      %v466 = vshll.u32 %v453, 16
      %v468 = vor.u32 %v465, %v466
      %v469 = vsel %vm292, %v461, %v468
      %v470 = vrot.slane %v465, 4
      %v472 = vshrl.u32 %v454, 16
      %v474 = vrot.slane %v472, 7
      %v475 = vshll.u32 %v454, 16
      %v477 = vor.u32 %v474, %v475
      %v478 = vsel %vm292, %v470, %v477
      %v479 = vrot.slane %v474, 4
      %v481 = vshrl.u32 %v455, 16
      %v483 = vrot.slane %v481, 7
      %v484 = vshll.u32 %v455, 16
      %v486 = vor.u32 %v483, %v484
      %v487 = vsel %vm292, %v479, %v486
      %v488 = vrot.slane %v483, 4
      %v490 = vshll.u32 %v456, 16
      %v492 = vsel %vm292, %v488, %v490
      %493 = vrot.lane.b32.xlu0 %v469, 96
      %v494 = vpop.permute.xlu0 %493
      %495 = vrot.lane.b32.xlu0 %v478, 96
      %v496 = vpop.permute.xlu0 %495
      %497 = vrot.lane.b32.xlu0 %v487, 96
      %v498 = vpop.permute.xlu0 %497
      %499 = vrot.lane.b32.xlu0 %v492, 96
      %v500 = vpop.permute.xlu0 %499
      %505 = vst.msk [vmem:[#allocation2 + $0x4] sm:$0xf] %vm341, %v494
      %506 = vst.msk [vmem:[#allocation2 + $0x10] sm:$0xf] %vm341, %v496
      %507 = vst.msk [vmem:[#allocation2 + $0x1c] sm:$0xf] %vm341, %v498
      %508 = vst.msk [vmem:[#allocation2 + $0x28] sm:$0x1] %vm345, %v500
      %v509 = vld [vmem:[%s164 + $0x8] sm:$0xf]
      %v510 = vld [vmem:[%s164 + $0xc] sm:$0xf]
      %v511 = vld [vmem:[%s164 + $0x10] sm:$0xf]
      %v512 = vld [vmem:[%s164 + $0x14] sm:$0x1]
      %513 = vst.msk [vmem:[#allocation2 + $0x8] sm:$0xf] %vm175, %v509
      %514 = vst.msk [vmem:[#allocation2 + $0x14] sm:$0xf] %vm175, %v510
      %515 = vst.msk [vmem:[#allocation2 + $0x20] sm:$0xf] %vm175, %v511
      %516 = vst.msk [vmem:[#allocation2 + $0x2c] sm:$0x1] %vm179, %v512
      %v517 = vld [vmem:[#allocation2] sm:$0xff]
      %v518 = vld [vmem:[#allocation2 + $0x8] sm:$0xf]
      %v519 = vld [vmem:[#allocation2 + $0xc] sm:$0xff]
      %v520 = vld [vmem:[#allocation2 + $0x14] sm:$0xf]
      %v521 = vld [vmem:[#allocation2 + $0x18] sm:$0xff]
      %v522 = vld [vmem:[#allocation2 + $0x20] sm:$0xf]
      %v523 = vld [vmem:[#allocation2 + $0x24] sm:$0x11]
      %v524 = vld [vmem:[#allocation2 + $0x2c] sm:$0x1]
      %v525 = vld [vmem:[%s1] sm:$0xf]
      %v526 = vld [vmem:[%s1 + $0x4] sm:$0xf]
      %v527 = vld [vmem:[%s1 + $0x8] sm:$0xf]
      %v528 = vld [vmem:[%s1 + $0xc] sm:$0xf]
      %v529 = vld [vmem:[%s1 + $0x10] sm:$0xf]
      %v530 = vld [vmem:[%s1 + $0x14] sm:$0xf]
      %v531 = vld [vmem:[%s1 + $0x18] sm:$0xf]
      %v532 = vld [vmem:[%s1 + $0x1c] sm:$0xf]
      %v533 = vld [vmem:[%s1 + $0x20] sm:$0xf]
      %v534 = vld [vmem:[%s1 + $0x24] sm:$0xf]
      %v535 = vld [vmem:[%s1 + $0x28] sm:$0xf]
      %v536 = vld [vmem:[%s1 + $0x2c] sm:$0xf]
      %v537 = vld [vmem:[%s1 + $0x30] sm:$0xf]
      %v538 = vld [vmem:[%s1 + $0x34] sm:$0xf]
      %v539 = vld [vmem:[%s1 + $0x38] sm:$0xf]
      %v540 = vld [vmem:[%s1 + $0x3c] sm:$0xf]
      %v541 = vld [vmem:[%s1 + $0x40] sm:$0xf]
      %v542 = vld [vmem:[%s1 + $0x44] sm:$0xf]
      %v543 = vld [vmem:[%s1 + $0x48] sm:$0xf]
      %v544 = vld [vmem:[%s1 + $0x4c] sm:$0xf]
      %v545 = vld [vmem:[%s1 + $0x50] sm:$0xf]
      %v546 = vld [vmem:[%s1 + $0x54] sm:$0xf]
      %v547 = vld [vmem:[%s1 + $0x58] sm:$0xf]
      %v548 = vld [vmem:[%s1 + $0x5c] sm:$0xf]
      %v549 = vld [vmem:[%s1 + $0x60] sm:$0xf]
      %v550 = vld [vmem:[%s1 + $0x64] sm:$0xf]
      %v551 = vld [vmem:[%s1 + $0x68] sm:$0xf]
      %v552 = vld [vmem:[%s1 + $0x6c] sm:$0xf]
      %v553 = vld [vmem:[%s1 + $0x70] sm:$0xf]
      %v554 = vld [vmem:[%s1 + $0x74] sm:$0xf]
      %v555 = vld [vmem:[%s1 + $0x78] sm:$0xf]
      %v556 = vld [vmem:[%s1 + $0x7c] sm:$0xf]
      %v557 = vld [vmem:[%s1 + $0x80] sm:$0xf]
      %v558 = vld [vmem:[%s1 + $0x84] sm:$0xf]
      %v559 = vld [vmem:[%s1 + $0x88] sm:$0xf]
      %v560 = vld [vmem:[%s1 + $0x8c] sm:$0xf]
      %v562 = vperm.slane %v170, 0
      %v572 = vunpack.c.l.b16 %v517
      %v573 = vunpack.c.h.b16 %v517
      %v574 = vunpack.c.l.b16 %v518
      %v575 = vunpack.c.l.b16 %v519
      %v576 = vunpack.c.h.b16 %v519
      %v577 = vunpack.c.l.b16 %v520
      %v578 = vunpack.c.l.b16 %v521
      %v579 = vunpack.c.h.b16 %v521
      %v580 = vunpack.c.l.b16 %v522
      %v581 = vunpack.c.l.b16 %v523
      %v582 = vunpack.c.h.b16 %v523
      %v583 = vunpack.c.l.b16 %v524
      %v584 = vpack.c.b16 %v575, %v572
      %v585 = vpack.c.b16 %v576, %v573
      %v586 = vpack.c.b16 %v577, %v574
      %v587 = vpack.c.b16 %v581, %v578
      %v588 = vpack.c.b16 %v582, %v579
      %v589 = vpack.c.b16 %v583, %v580
      %v630 = vunpack.c.l.b16 %v525
      %v631 = vunpack.c.l.b16 %v526
      %v632 = vunpack.c.l.b16 %v527
      %v633 = vunpack.c.l.b16 %v528
      %v634 = vunpack.c.l.b16 %v529
      %v635 = vunpack.c.l.b16 %v530
      %v636 = vunpack.c.l.b16 %v531
      %v637 = vunpack.c.l.b16 %v532
      %v638 = vunpack.c.l.b16 %v533
      %v639 = vunpack.c.l.b16 %v534
      %v640 = vunpack.c.l.b16 %v535
      %v641 = vunpack.c.l.b16 %v536
      %v642 = vunpack.c.l.b16 %v537
      %v643 = vunpack.c.l.b16 %v538
      %v644 = vunpack.c.l.b16 %v539
      %v645 = vunpack.c.l.b16 %v540
      %v646 = vunpack.c.l.b16 %v541
      %v647 = vunpack.c.l.b16 %v542
      %v648 = vunpack.c.l.b16 %v543
      %v649 = vunpack.c.l.b16 %v544
      %v650 = vunpack.c.l.b16 %v545
      %v651 = vunpack.c.l.b16 %v546
      %v652 = vunpack.c.l.b16 %v547
      %v653 = vunpack.c.l.b16 %v548
      %v654 = vunpack.c.l.b16 %v549
      %v655 = vunpack.c.l.b16 %v550
      %v656 = vunpack.c.l.b16 %v551
      %v657 = vunpack.c.l.b16 %v552
      %v658 = vunpack.c.l.b16 %v553
      %v659 = vunpack.c.l.b16 %v554
      %v660 = vunpack.c.l.b16 %v555
      %v661 = vunpack.c.l.b16 %v556
      %v662 = vunpack.c.l.b16 %v557
      %v663 = vunpack.c.l.b16 %v558
      %v664 = vunpack.c.l.b16 %v559
      %v665 = vunpack.c.l.b16 %v560
      %v666 = vpack.c.b16 %v631, %v630
      %v667 = vpack.c.b16 %v633, %v632
      %v668 = vpack.c.b16 %v635, %v634
      %v669 = vpack.c.b16 %v637, %v636
      %v670 = vpack.c.b16 %v639, %v638
      %v671 = vpack.c.b16 %v641, %v640
      %v672 = vpack.c.b16 %v643, %v642
      %v673 = vpack.c.b16 %v645, %v644
      %v674 = vpack.c.b16 %v647, %v646
      %v675 = vpack.c.b16 %v649, %v648
      %v676 = vpack.c.b16 %v651, %v650
      %v677 = vpack.c.b16 %v653, %v652
      %v678 = vpack.c.b16 %v655, %v654
      %v679 = vpack.c.b16 %v657, %v656
      %v680 = vpack.c.b16 %v659, %v658
      %v681 = vpack.c.b16 %v661, %v660
      %v682 = vpack.c.b16 %v663, %v662
      %v683 = vpack.c.b16 %v665, %v664
      %vm702 = vcmask 261120
      %v704 = vsel %vm702, %v586, 0
      %v707 = vsel %vm702, %v589, 0
      %709 = vmatpush.bf16.msra.mxu0 %v673
      %710 = vmatpush.bf16.msra.mxu0 %v672
      %711 = vmatpush.bf16.msra.mxu0 %v671
      %712 = vmatpush.bf16.msra.mxu0 %v670
      %713 = vmatpush.bf16.msra.mxu0 %v669
      %714 = vmatpush.bf16.msra.mxu0 %v668
      %715 = vmatpush.bf16.msra.mxu0 %v667
      %716 = vmatpush.bf16.msra.mxu0 %v666
      %717 = vmatmul.bf16.gmra.mxu0 %v584
      %v718 = vpop.f32.mrf.mxu0
      %v719 = vadd.f32 %v562, %v718
      %v720 = vpop.f32.mrf.mxu0
      %v721 = vadd.f32 %v562, %v720
      %722 = vmatmul.bf16.gmra.mxu0 %v587
      %v723 = vpop.f32.mrf.mxu0
      %v724 = vadd.f32 %v562, %v723
      %v725 = vpop.f32.mrf.mxu0
      %v726 = vadd.f32 %v562, %v725
      %727 = vdwg.mxu0
      %728 = vmatpush.bf16.msra.mxu0 %v681
      %729 = vmatpush.bf16.msra.mxu0 %v680
      %730 = vmatpush.bf16.msra.mxu0 %v679
      %731 = vmatpush.bf16.msra.mxu0 %v678
      %732 = vmatpush.bf16.msra.mxu0 %v677
      %733 = vmatpush.bf16.msra.mxu0 %v676
      %734 = vmatpush.bf16.msra.mxu0 %v675
      %735 = vmatpush.bf16.msra.mxu0 %v674
      %736 = vmatmul.bf16.gmra.mxu0 %v585
      %v737 = vpop.f32.mrf.mxu0
      %v738 = vadd.f32 %v719, %v737
      %v739 = vpop.f32.mrf.mxu0
      %v740 = vadd.f32 %v721, %v739
      %741 = vmatmul.bf16.gmra.mxu0 %v588
      %v742 = vpop.f32.mrf.mxu0
      %v743 = vadd.f32 %v724, %v742
      %v744 = vpop.f32.mrf.mxu0
      %v745 = vadd.f32 %v726, %v744
      %746 = vdwg.mxu0
      %747 = vmatpush.bf16.msra.mxu0 0
      %748 = vmatpush.bf16.msra.mxu0 0
      %749 = vmatpush.bf16.msra.mxu0 0
      %750 = vmatpush.bf16.msra.mxu0 0
      %751 = vmatpush.bf16.msra.mxu0 0
      %752 = vmatpush.bf16.msra.mxu0 0
      %753 = vmatpush.bf16.msra.mxu0 %v683
      %754 = vmatpush.bf16.msra.mxu0 %v682
      %755 = vmatmul.bf16.gmra.mxu0 %v704
      %v756 = vpop.f32.mrf.mxu0
      %v757 = vadd.f32 %v738, %v756
      %v758 = vpop.f32.mrf.mxu0
      %v759 = vadd.f32 %v740, %v758
      %760 = vmatmul.bf16.gmra.mxu0 %v707
      %v761 = vpop.f32.mrf.mxu0
      %v762 = vadd.f32 %v743, %v761
      %v763 = vpop.f32.mrf.mxu0
      %v764 = vadd.f32 %v745, %v763
      %765 = vdwg.mxu0
      %v766 = vmax.f32 %v757, 0.0
      %v767 = vmax.f32 %v759, 0.0
      %v768 = vmax.f32 %v762, 0.0
      %v769 = vmax.f32 %v764, 0.0
      %vm770 = vcmask 523264
      %771 = vst.msk [vmem:[#allocation3] sm:$0xff] %vm770, %v766
      %772 = vst.msk [vmem:[#allocation3 + $0x8] sm:$0xff] %vm770, %v767
      %773 = vst.msk [vmem:[#allocation3 + $0x10] sm:$0xff] %vm770, %v768
      %vm774 = vcmask 517120
      %775 = vst.msk [vmem:[#allocation3 + $0x18] sm:$0x3] %vm774, %v769
      %v776 = vld [vmem:[#allocation3] ss:$2 sm:$0x3]
      %s777 = scalar_lea.vmem [#allocation3], 1
      %v778 = vld [vmem:[%s777] ss:$2 sm:$0x3]
      %s779 = scalar_lea.vmem [#allocation3], 7
      %v780 = vld [vmem:[%s779] ss:$2 sm:$0x3]
      %s781 = scalar_lea.vmem [#allocation3], 8
      %v782 = vld [vmem:[%s781] ss:$2 sm:$0x3]
      %v783 = vmax.f32 %v776, %v778
      %v784 = vmax.f32 %v780, %v782
      %v785 = vmax.f32 %v783, %v784
      %786 = vst.msk [vmem:[#allocation4] sm:$0x3] %vm774, %v785
      %s787 = scalar_lea.vmem [#allocation3], 14
      %v788 = vld [vmem:[%s787] ss:$2 sm:$0x3]
      %s789 = scalar_lea.vmem [#allocation3], 15
      %v790 = vld [vmem:[%s789] ss:$2 sm:$0x3]
      %s791 = scalar_lea.vmem [#allocation3], 21
      %v792 = vld [vmem:[%s791] ss:$2 sm:$0x3]
      %s793 = scalar_lea.vmem [#allocation3], 22
      %v794 = vld [vmem:[%s793] ss:$2 sm:$0x3]
      %v795 = vmax.f32 %v788, %v790
      %v796 = vmax.f32 %v792, %v794
      %v797 = vmax.f32 %v795, %v796
      %798 = vst.msk [vmem:[#allocation4 + $0x2] sm:$0x3] %vm774, %v797
      %v799 = vld [vmem:[#allocation4] sm:$0xf]
      %v800 = vpack.c.bf16 %v799, %v799
      %801 = vst.msk [vmem:[%s168] sm:$0x3] %vm774, %v800
      %p802 = scmp.lt.s32.totalorder %s14, 1
      %s803 = scalar_select %p802, %s14, 1
      %s804 = smul.addr %s803, 2
      %s805 = scalar_lea.vmem %s3, %s804
      // Predicated region
      $region33: #{cnn_forward.4} parent=31 // pred_check
        %p806 = pneg %p100
      $region34: #{cnn_forward.4} parent=31 // pred_check_branch
        %808 = sbr.rel (%p806) target = $region36
      $region35: #{cnn_forward.4} parent=31 // pred_region
        _
      $region36: #{cnn_forward.4} parent=31 // pred_fallthru
        _
    $region32: #{cnn_forward.4} parent=5 // pred_fallthru
      _
    %p809 = scmp.le.s32.totalorder 2, %s9
    // Predicated region
    $region37: #{cnn_forward.4} parent=5 // pred_check
      %p810 = pneg %p809
    $region38: #{cnn_forward.4} parent=5 // pred_check_branch
      %812 = sbr.rel (%p810) target = $region40
    $region39: #{cnn_forward.4} parent=5 // pred_region
      %s813 = ssub.s32 %s9, 2
      // Predicated region
      $region41: #{cnn_forward.4} parent=39 // pred_check
        %p814 = pneg %p106
      $region42: #{cnn_forward.4} parent=39 // pred_check_branch
        %816 = sbr.rel (%p814) target = $region44
      $region43: #{cnn_forward.4} parent=39 // pred_region
        %p817 = scmp.lt.s32.totalorder %s15, 1
        %s818 = scalar_select %p817, %s15, 1
        %s819 = smul.addr %s818, 2
        %s820 = scalar_lea.vmem %s3, %s819
      $region44: #{cnn_forward.4} parent=39 // pred_fallthru
        _
    $region40: #{cnn_forward.4} parent=5 // pred_fallthru
      _
  $region6: #{cnn_forward.4} parent=0 // loop_footer
    %s13 = sadd.s32 1, %s9
  $region7: #{cnn_forward.4} parent=0 // loop_footer_branch
    %8 = sbr.rel target = $region3
  $region8: #{cnn_forward.4} parent=0 // loop_exit
    _

// kernel: cnn_forward.3
$region0: #{cnn_forward.3}
  #allocation0 [shape = 'u32[]', space=smem, size = 0x4, offset = 0x4, fixed_abs, tag = 'smem constant byte address 0x4 - core index']
  #allocation1 [shape = 'u32[72,128]{1,0:T(1,128)}', space=vmem, size = 0x9000, scoped, tag = 'internal scratch']
  #allocation2 [shape = 'bf16[222,27]{1,0:T(8,128)(2,1)}', space=vmem, size = 0xe000, scoped, tag = 'scratch operand']
  #allocation3 [shape = 'f32[222,32]{1,0:T(8,128)}', space=vmem, size = 0x1c000, scoped, tag = 'scratch operand']
  #allocation4 [shape = 'f32[49,32]{1,0:T(8,128)}', space=vmem, size = 0x7000, scoped, tag = 'scratch operand']
  %s0 = inlined_call_operand.vmem [shape: bf16[2,256,3], index: 0, kind: input, shape index: {}]
  %s1 = inlined_call_operand.vmem [shape: bf16[27,32], index: 1, kind: input, shape index: {}]
  %s2 = inlined_call_operand.vmem [shape: f32[1,32], index: 2, kind: input, shape index: {}]
  %s3 = inlined_call_operand.vmem [shape: bf16[2,49,32], index: 3, kind: output, shape index: {}]
  %s4 = sld [smem:[#allocation0]]
  $region45: #{cnn_forward.3} parent=0
    _
  %s6 = ssub.s32 1, %s4
  %s7 = scalar_select 0, %s6, %s4
  loop: start=0, step=1, limit=4
  $region2: #{cnn_forward.3} parent=0 // loop_pre_header
    _
  $region3: #{cnn_forward.3} parent=0 // loop_header
    %s9 = sphi 0, %s13
    %p10 = scmp.ge.s32.totalorder %s9, 4
    %s19 = sphi 0, %s21
    %s22 = sphi 0, %s19
    %s23 = sphi 0, %s22
    %s39 = sphi 0, %s23
    %s43 = sphi 0, %s43
    %s45 = sphi 0, %s43
    %s46 = sphi 0, %s45
    %s60 = sphi 0, %s46
    %s64 = sphi 0, %s64
    %s66 = sphi 0, %s64
    %s67 = sphi 0, %s66
    %s81 = sphi 0, %s67
    %s87 = sphi 0, %s89
    %s90 = sphi 0, %s87
    %s91 = sphi 0, %s90
    %s107 = sphi 0, %s91
  $region4: #{cnn_forward.3} parent=0 // loop_header_branch
    %12 = sbr.rel (%p10) target = $region8
  $region5: #{cnn_forward.3} parent=0 // loop_body
    %s14 = ssub.s32 %s9, 1
    %s15 = ssub.s32 %s9, 2
    %s16 = sadd.s32 %s9, 1
    %s17 = ssub.s32 %s9, %s16
    %p18 = scmp.eq.s32.totalorder %s17, 0
    %s20 = sadd.s32 %s19, 1
    %s21 = scalar_select %p18, %s19, %s20
    %p24 = pneg %p18
    %p25 = scmp.eq.s32.totalorder %s9, 1
    %p26 = por %p24, %p25
    %p27 = scmp.ne.s32.totalorder %s19, %s22
    %p28 = scmp.eq.s32.totalorder %s9, 0
    %p29 = por %p27, %p28
    %p30 = scmp.ne.s32.totalorder %s19, %s22
    %p31 = scmp.eq.s32.totalorder %s14, 1
    %p32 = por %p30, %p31
    %p33 = scmp.ne.s32.totalorder %s22, %s23
    %p34 = scmp.eq.s32.totalorder %s14, 0
    %p35 = por %p33, %p34
    %p36 = scmp.ne.s32.totalorder %s22, %s23
    %p37 = scmp.eq.s32.totalorder %s15, 1
    %p38 = por %p36, %p37
    %p40 = scmp.ne.s32.totalorder %s23, %s39
    %p41 = scmp.eq.s32.totalorder %s15, 0
    %p42 = por %p40, %p41
    %s44 = sadd.s32 %s43, 1
    %p47 = scmp.eq.s32.totalorder %s9, 1
    %p48 = scmp.ne.s32.totalorder %s43, %s45
    %p49 = scmp.eq.s32.totalorder %s9, 0
    %p50 = por %p48, %p49
    %p51 = scmp.ne.s32.totalorder %s43, %s45
    %p52 = scmp.eq.s32.totalorder %s14, 1
    %p53 = por %p51, %p52
    %p54 = scmp.ne.s32.totalorder %s45, %s46
    %p55 = scmp.eq.s32.totalorder %s14, 0
    %p56 = por %p54, %p55
    %p57 = scmp.ne.s32.totalorder %s45, %s46
    %p58 = scmp.eq.s32.totalorder %s15, 1
    %p59 = por %p57, %p58
    %p61 = scmp.ne.s32.totalorder %s46, %s60
    %p62 = scmp.eq.s32.totalorder %s15, 0
    %p63 = por %p61, %p62
    %s65 = sadd.s32 %s64, 1
    %p68 = scmp.eq.s32.totalorder %s9, 1
    %p69 = scmp.ne.s32.totalorder %s64, %s66
    %p70 = scmp.eq.s32.totalorder %s9, 0
    %p71 = por %p69, %p70
    %p72 = scmp.ne.s32.totalorder %s64, %s66
    %p73 = scmp.eq.s32.totalorder %s14, 1
    %p74 = por %p72, %p73
    %p75 = scmp.ne.s32.totalorder %s66, %s67
    %p76 = scmp.eq.s32.totalorder %s14, 0
    %p77 = por %p75, %p76
    %p78 = scmp.ne.s32.totalorder %s66, %s67
    %p79 = scmp.eq.s32.totalorder %s15, 1
    %p80 = por %p78, %p79
    %p82 = scmp.ne.s32.totalorder %s67, %s81
    %p83 = scmp.eq.s32.totalorder %s15, 0
    %p84 = por %p82, %p83
    %s85 = ssub.s32 %s9, %s16
    %p86 = scmp.eq.s32.totalorder %s85, 0
    %s88 = sadd.s32 %s87, 1
    %s89 = scalar_select %p86, %s87, %s88
    %p92 = pneg %p86
    %p93 = scmp.eq.s32.totalorder %s9, 1
    %p94 = por %p92, %p93
    %p95 = scmp.ne.s32.totalorder %s87, %s90
    %p96 = scmp.eq.s32.totalorder %s9, 0
    %p97 = por %p95, %p96
    %p98 = scmp.ne.s32.totalorder %s87, %s90
    %p99 = scmp.eq.s32.totalorder %s14, 1
    %p100 = por %p98, %p99
    %p101 = scmp.ne.s32.totalorder %s90, %s91
    %p102 = scmp.eq.s32.totalorder %s14, 0
    %p103 = por %p101, %p102
    %p104 = scmp.ne.s32.totalorder %s90, %s91
    %p105 = scmp.eq.s32.totalorder %s15, 1
    %p106 = por %p104, %p105
    %p108 = scmp.ne.s32.totalorder %s91, %s107
    %p109 = scmp.eq.s32.totalorder %s15, 0
    %p110 = por %p108, %p109
    %p111 = scmp.le.s32.totalorder 1, %s9
    %p112 = scmp.lt.s32.totalorder %s9, 3
    %p113 = pnand %p111, %p112
    %p114 = pneg %p113
    // Predicated region
    $region9: #{cnn_forward.3} parent=5 // pred_check
      _
    $region10: #{cnn_forward.3} parent=5 // pred_check_branch
      %116 = sbr.rel (%p113) target = $region12
    $region11: #{cnn_forward.3} parent=5 // pred_region
      %s117 = ssub.s32 %s9, 1
      // Predicated region
      $region13: #{cnn_forward.3} parent=11 // pred_check
        %p118 = pneg %p56
      $region14: #{cnn_forward.3} parent=11 // pred_check_branch
        %120 = sbr.rel (%p118) target = $region16
      $region15: #{cnn_forward.3} parent=11 // pred_region
        _
      $region16: #{cnn_forward.3} parent=11 // pred_fallthru
        _
      // Predicated region
      $region17: #{cnn_forward.3} parent=11 // pred_check
        %p121 = pneg %p77
      $region18: #{cnn_forward.3} parent=11 // pred_check_branch
        %123 = sbr.rel (%p121) target = $region20
      $region19: #{cnn_forward.3} parent=11 // pred_region
        _
      $region20: #{cnn_forward.3} parent=11 // pred_fallthru
        _
    $region12: #{cnn_forward.3} parent=5 // pred_fallthru
      _
    %p124 = scmp.lt.s32.totalorder %s9, 2
    // Predicated region
    $region21: #{cnn_forward.3} parent=5 // pred_check
      %p125 = pneg %p124
    $region22: #{cnn_forward.3} parent=5 // pred_check_branch
      %127 = sbr.rel (%p125) target = $region24
    $region23: #{cnn_forward.3} parent=5 // pred_region
      // Predicated region
      $region25: #{cnn_forward.3} parent=23 // pred_check
        %p128 = pneg %p29
      $region26: #{cnn_forward.3} parent=23 // pred_check_branch
        %130 = sbr.rel (%p128) target = $region28
      $region27: #{cnn_forward.3} parent=23 // pred_region
        %p131 = scmp.lt.s32.totalorder %s9, 1
        %s132 = scalar_select %p131, %s9, 1
        %s133 = smul.addr %s132, 32
        %s134 = smul.addr %s133, 4
        %s135 = scalar_lea.vmem %s0, %s134
      $region28: #{cnn_forward.3} parent=23 // pred_fallthru
        _
    $region24: #{cnn_forward.3} parent=5 // pred_fallthru
      _
    %p136 = scmp.le.s32.totalorder 1, %s9
    %p137 = scmp.lt.s32.totalorder %s9, 3
    %p138 = pnand %p136, %p137
    %p139 = pneg %p138
    // Predicated region
    $region29: #{cnn_forward.3} parent=5 // pred_check
      _
    $region30: #{cnn_forward.3} parent=5 // pred_check_branch
      %141 = sbr.rel (%p138) target = $region32
    $region31: #{cnn_forward.3} parent=5 // pred_region
      %s142 = ssub.s32 %s9, 1
      %p143 = scmp.lt.s32.totalorder %s14, 1
      %s144 = scalar_select %p143, %s14, 1
      %s145 = smul.addr %s144, 32
      %s146 = smul.addr %s145, 4
      %s147 = scalar_lea.vmem %s0, %s146
      %p148 = pneg %p35
      %p149 = pneg %p32
      %p150 = pneg %p56
      %p151 = pneg %p53
      %p152 = pneg %p77
      %p153 = pneg %p74
      %p154 = pneg %p103
      %p155 = pneg %p100
      %p156 = scmp.lt.s32.totalorder %s14, 1
      %s157 = scalar_select %p156, %s14, 1
      %s158 = smul.addr %s157, 7
      %s159 = smul.addr %s158, 4
      %s160 = scalar_lea.vmem %s3, %s159
      %p161 = scmp.lt.s32.totalorder %s14, 1
      %s162 = scalar_select %p161, %s14, 1
      %s163 = smul.addr %s162, 32
      %s164 = smul.addr %s163, 4
      %s165 = scalar_lea.vmem %s0, %s164
      %p166 = scmp.lt.s32.totalorder %s14, 1
      %s167 = scalar_select %p166, %s14, 1
      %s168 = smul.addr %s167, 7
      %s169 = smul.addr %s168, 4
      %s170 = scalar_lea.vmem %s3, %s169
      %v172 = vld [vmem:[%s2] sm:$0x1]
      %v173 = vld [vmem:[%s165] sm:$0xf]
      %v174 = vld [vmem:[%s165 + $0x4] sm:$0xf]
      %v175 = vld [vmem:[%s165 + $0x8] sm:$0xf]
      %v176 = vld [vmem:[%s165 + $0xc] sm:$0xf]
      %v177 = vld [vmem:[%s165 + $0x10] sm:$0xf]
      %v178 = vld [vmem:[%s165 + $0x14] sm:$0xf]
      %v179 = vld [vmem:[%s165 + $0x18] sm:$0xf]
      %v180 = vld [vmem:[%s165 + $0x1c] sm:$0xf]
      %v181 = vld [vmem:[%s165 + $0x20] sm:$0xf]
      %v182 = vld [vmem:[%s165 + $0x24] sm:$0xf]
      %v183 = vld [vmem:[%s165 + $0x28] sm:$0xf]
      %v184 = vld [vmem:[%s165 + $0x2c] sm:$0xf]
      %v185 = vld [vmem:[%s165 + $0x30] sm:$0xf]
      %v186 = vld [vmem:[%s165 + $0x34] sm:$0xf]
      %v187 = vld [vmem:[%s165 + $0x38] sm:$0xf]
      %v188 = vld [vmem:[%s165 + $0x3c] sm:$0xf]
      %v189 = vld [vmem:[%s165 + $0x40] sm:$0xf]
      %v190 = vld [vmem:[%s165 + $0x44] sm:$0xf]
      %v191 = vld [vmem:[%s165 + $0x48] sm:$0xf]
      %v192 = vld [vmem:[%s165 + $0x4c] sm:$0xf]
      %v193 = vld [vmem:[%s165 + $0x50] sm:$0xf]
      %v194 = vld [vmem:[%s165 + $0x54] sm:$0xf]
      %v195 = vld [vmem:[%s165 + $0x58] sm:$0xf]
      %v196 = vld [vmem:[%s165 + $0x5c] sm:$0xf]
      %v197 = vld [vmem:[%s165 + $0x60] sm:$0xf]
      %v198 = vld [vmem:[%s165 + $0x64] sm:$0xf]
      %v199 = vld [vmem:[%s165 + $0x68] sm:$0xf]
      %v200 = vld [vmem:[%s165 + $0x6c] sm:$0x7]
      %vm201 = vcmask 19456
      %202 = vst.msk [vmem:[#allocation2] sm:$0xf] %vm201, %v173
      %203 = vst.msk [vmem:[#allocation2 + $0x4] sm:$0xf] %vm201, %v174
      %204 = vst.msk [vmem:[#allocation2 + $0x8] sm:$0xf] %vm201, %v175
      %205 = vst.msk [vmem:[#allocation2 + $0xc] sm:$0xf] %vm201, %v176
      %206 = vst.msk [vmem:[#allocation2 + $0x10] sm:$0xf] %vm201, %v177
      %207 = vst.msk [vmem:[#allocation2 + $0x14] sm:$0xf] %vm201, %v178
      %208 = vst.msk [vmem:[#allocation2 + $0x18] sm:$0xf] %vm201, %v179
      %209 = vst.msk [vmem:[#allocation2 + $0x1c] sm:$0xf] %vm201, %v180
      %210 = vst.msk [vmem:[#allocation2 + $0x20] sm:$0xf] %vm201, %v181
      %211 = vst.msk [vmem:[#allocation2 + $0x24] sm:$0xf] %vm201, %v182
      %212 = vst.msk [vmem:[#allocation2 + $0x28] sm:$0xf] %vm201, %v183
      %213 = vst.msk [vmem:[#allocation2 + $0x2c] sm:$0xf] %vm201, %v184
      %214 = vst.msk [vmem:[#allocation2 + $0x30] sm:$0xf] %vm201, %v185
      %215 = vst.msk [vmem:[#allocation2 + $0x34] sm:$0xf] %vm201, %v186
      %216 = vst.msk [vmem:[#allocation2 + $0x38] sm:$0xf] %vm201, %v187
      %217 = vst.msk [vmem:[#allocation2 + $0x3c] sm:$0xf] %vm201, %v188
      %218 = vst.msk [vmem:[#allocation2 + $0x40] sm:$0xf] %vm201, %v189
      %219 = vst.msk [vmem:[#allocation2 + $0x44] sm:$0xf] %vm201, %v190
      %220 = vst.msk [vmem:[#allocation2 + $0x48] sm:$0xf] %vm201, %v191
      %221 = vst.msk [vmem:[#allocation2 + $0x4c] sm:$0xf] %vm201, %v192
      %222 = vst.msk [vmem:[#allocation2 + $0x50] sm:$0xf] %vm201, %v193
      %223 = vst.msk [vmem:[#allocation2 + $0x54] sm:$0xf] %vm201, %v194
      %224 = vst.msk [vmem:[#allocation2 + $0x58] sm:$0xf] %vm201, %v195
      %225 = vst.msk [vmem:[#allocation2 + $0x5c] sm:$0xf] %vm201, %v196
      %226 = vst.msk [vmem:[#allocation2 + $0x60] sm:$0xf] %vm201, %v197
      %227 = vst.msk [vmem:[#allocation2 + $0x64] sm:$0xf] %vm201, %v198
      %228 = vst.msk [vmem:[#allocation2 + $0x68] sm:$0xf] %vm201, %v199
      %vm229 = vcmask 18432
      %230 = vst.msk [vmem:[#allocation2 + $0x6c] sm:$0x7] %vm229, %v200
      %v231 = vld [vmem:[%s165] sm:$0xf]
      %v232 = vld [vmem:[%s165 + $0x4] sm:$0xf]
      %v233 = vld [vmem:[%s165 + $0x8] sm:$0xf]
      %v234 = vld [vmem:[%s165 + $0xc] sm:$0xf]
      %v235 = vld [vmem:[%s165 + $0x10] sm:$0xf]
      %v236 = vld [vmem:[%s165 + $0x14] sm:$0xf]
      %v237 = vld [vmem:[%s165 + $0x18] sm:$0xf]
      %v238 = vld [vmem:[%s165 + $0x1c] sm:$0xf]
      %v239 = vld [vmem:[%s165 + $0x20] sm:$0xf]
      %v240 = vld [vmem:[%s165 + $0x24] sm:$0xf]
      %v241 = vld [vmem:[%s165 + $0x28] sm:$0xf]
      %v242 = vld [vmem:[%s165 + $0x2c] sm:$0xf]
      %v243 = vld [vmem:[%s165 + $0x30] sm:$0xf]
      %v244 = vld [vmem:[%s165 + $0x34] sm:$0xf]
      %v245 = vld [vmem:[%s165 + $0x38] sm:$0xf]
      %v246 = vld [vmem:[%s165 + $0x3c] sm:$0xf]
      %v247 = vld [vmem:[%s165 + $0x40] sm:$0xf]
      %v248 = vld [vmem:[%s165 + $0x44] sm:$0xf]
      %v249 = vld [vmem:[%s165 + $0x48] sm:$0xf]
      %v250 = vld [vmem:[%s165 + $0x4c] sm:$0xf]
      %v251 = vld [vmem:[%s165 + $0x50] sm:$0xf]
      %v252 = vld [vmem:[%s165 + $0x54] sm:$0xf]
      %v253 = vld [vmem:[%s165 + $0x58] sm:$0xf]
      %v254 = vld [vmem:[%s165 + $0x5c] sm:$0xf]
      %v255 = vld [vmem:[%s165 + $0x60] sm:$0xf]
      %v256 = vld [vmem:[%s165 + $0x64] sm:$0xf]
      %v257 = vld [vmem:[%s165 + $0x68] sm:$0xf]
      %v258 = vld [vmem:[%s165 + $0x6c] sm:$0xf]
      %vm259 = vsmask.f32 3328
      %vm260 = vsmask.f32 7440
      %vm261 = vmor %vm259, %vm260
      %v263 = vshrl.u32 %v231, 16
      %v265 = vrot.slane %v263, 4
      %v266 = vshll.u32 %v231, 16
      %v268 = vrot.slane %v266, 5
      %v269 = vor.u32 %v265, %v268
      %v270 = vrot.slane %v269, 4
      %v272 = vshll.u32 %v232, 16
      %v274 = vrot.slane %v272, 5
      %v275 = vsel %vm261, %v270, %v274
      %v276 = vshrl.u32 %v232, 16
      %v278 = vrot.slane %v276, 4
      %v279 = vor.u32 %v278, %v274
      %v280 = vrot.slane %v279, 4
      %v282 = vshll.u32 %v233, 16
      %v284 = vrot.slane %v282, 5
      %v285 = vsel %vm261, %v280, %v284
      %v286 = vshrl.u32 %v233, 16
      %v288 = vrot.slane %v286, 4
      %v289 = vor.u32 %v288, %v284
      %v290 = vrot.slane %v289, 4
      %v292 = vshll.u32 %v234, 16
      %v294 = vrot.slane %v292, 5
      %v295 = vsel %vm261, %v290, %v294
      %v296 = vshrl.u32 %v234, 16
      %v298 = vrot.slane %v296, 4
      %v299 = vor.u32 %v298, %v294
      %v300 = vrot.slane %v299, 4
      %v302 = vshll.u32 %v235, 16
      %v304 = vrot.slane %v302, 5
      %v305 = vsel %vm261, %v300, %v304
      %v306 = vshrl.u32 %v235, 16
      %v308 = vrot.slane %v306, 4
      %v309 = vor.u32 %v308, %v304
      %v310 = vrot.slane %v309, 4
      %v312 = vshll.u32 %v236, 16
      %v314 = vrot.slane %v312, 5
      %v315 = vsel %vm261, %v310, %v314
      %v316 = vshrl.u32 %v236, 16
      %v318 = vrot.slane %v316, 4
      %v319 = vor.u32 %v318, %v314
      %v320 = vrot.slane %v319, 4
      %v322 = vshll.u32 %v237, 16
      %v324 = vrot.slane %v322, 5
      %v325 = vsel %vm261, %v320, %v324
      %v326 = vshrl.u32 %v237, 16
      %v328 = vrot.slane %v326, 4
      %v329 = vor.u32 %v328, %v324
      %v330 = vrot.slane %v329, 4
      %v332 = vshll.u32 %v238, 16
      %v334 = vrot.slane %v332, 5
      %v335 = vsel %vm261, %v330, %v334
      %v336 = vshrl.u32 %v238, 16
      %v338 = vrot.slane %v336, 4
      %v339 = vor.u32 %v338, %v334
      %v340 = vrot.slane %v339, 4
      %v342 = vshll.u32 %v239, 16
      %v344 = vrot.slane %v342, 5
      %v345 = vsel %vm261, %v340, %v344
      %v346 = vshrl.u32 %v239, 16
      %v348 = vrot.slane %v346, 4
      %v349 = vor.u32 %v348, %v344
      %v350 = vrot.slane %v349, 4
      %v352 = vshll.u32 %v240, 16
      %v354 = vrot.slane %v352, 5
      %v355 = vsel %vm261, %v350, %v354
      %v356 = vshrl.u32 %v240, 16
      %v358 = vrot.slane %v356, 4
      %v359 = vor.u32 %v358, %v354
      %v360 = vrot.slane %v359, 4
      %v362 = vshll.u32 %v241, 16
      %v364 = vrot.slane %v362, 5
      %v365 = vsel %vm261, %v360, %v364
      %v366 = vshrl.u32 %v241, 16
      %v368 = vrot.slane %v366, 4
      %v369 = vor.u32 %v368, %v364
      %v370 = vrot.slane %v369, 4
      %v372 = vshll.u32 %v242, 16
      %v374 = vrot.slane %v372, 5
      %v375 = vsel %vm261, %v370, %v374
      %v376 = vshrl.u32 %v242, 16
      %v378 = vrot.slane %v376, 4
      %v379 = vor.u32 %v378, %v374
      %v380 = vrot.slane %v379, 4
      %v382 = vshll.u32 %v243, 16
      %v384 = vrot.slane %v382, 5
      %v385 = vsel %vm261, %v380, %v384
      %v386 = vshrl.u32 %v243, 16
      %v388 = vrot.slane %v386, 4
      %v389 = vor.u32 %v388, %v384
      %v390 = vrot.slane %v389, 4
      %v392 = vshll.u32 %v244, 16
      %v394 = vrot.slane %v392, 5
      %v395 = vsel %vm261, %v390, %v394
      %v396 = vshrl.u32 %v244, 16
      %v398 = vrot.slane %v396, 4
      %v399 = vor.u32 %v398, %v394
      %v400 = vrot.slane %v399, 4
      %v402 = vshll.u32 %v245, 16
      %v404 = vrot.slane %v402, 5
      %v405 = vsel %vm261, %v400, %v404
      %v406 = vshrl.u32 %v245, 16
      %v408 = vrot.slane %v406, 4
      %v409 = vor.u32 %v408, %v404
      %v410 = vrot.slane %v409, 4
      %v412 = vshll.u32 %v246, 16
      %v414 = vrot.slane %v412, 5
      %v415 = vsel %vm261, %v410, %v414
      %v416 = vshrl.u32 %v246, 16
      %v418 = vrot.slane %v416, 4
      %v419 = vor.u32 %v418, %v414
      %v420 = vrot.slane %v419, 4
      %v422 = vshll.u32 %v247, 16
      %v424 = vrot.slane %v422, 5
      %v425 = vsel %vm261, %v420, %v424
      %v426 = vshrl.u32 %v247, 16
      %v428 = vrot.slane %v426, 4
      %v429 = vor.u32 %v428, %v424
      %v430 = vrot.slane %v429, 4
      %v432 = vshll.u32 %v248, 16
      %v434 = vrot.slane %v432, 5
      %v435 = vsel %vm261, %v430, %v434
      %v436 = vshrl.u32 %v248, 16
      %v438 = vrot.slane %v436, 4
      %v439 = vor.u32 %v438, %v434
      %v440 = vrot.slane %v439, 4
      %v442 = vshll.u32 %v249, 16
      %v444 = vrot.slane %v442, 5
      %v445 = vsel %vm261, %v440, %v444
      %v446 = vshrl.u32 %v249, 16
      %v448 = vrot.slane %v446, 4
      %v449 = vor.u32 %v448, %v444
      %v450 = vrot.slane %v449, 4
      %v452 = vshll.u32 %v250, 16
      %v454 = vrot.slane %v452, 5
      %v455 = vsel %vm261, %v450, %v454
      %v456 = vshrl.u32 %v250, 16
      %v458 = vrot.slane %v456, 4
      %v459 = vor.u32 %v458, %v454
      %v460 = vrot.slane %v459, 4
      %v462 = vshll.u32 %v251, 16
      %v464 = vrot.slane %v462, 5
      %v465 = vsel %vm261, %v460, %v464
      %v466 = vshrl.u32 %v251, 16
      %v468 = vrot.slane %v466, 4
      %v469 = vor.u32 %v468, %v464
      %v470 = vrot.slane %v469, 4
      %v472 = vshll.u32 %v252, 16
      %v474 = vrot.slane %v472, 5
      %v475 = vsel %vm261, %v470, %v474
      %v476 = vshrl.u32 %v252, 16
      %v478 = vrot.slane %v476, 4
      %v479 = vor.u32 %v478, %v474
      %v480 = vrot.slane %v479, 4
      %v482 = vshll.u32 %v253, 16
      %v484 = vrot.slane %v482, 5
      %v485 = vsel %vm261, %v480, %v484
      %v486 = vshrl.u32 %v253, 16
      %v488 = vrot.slane %v486, 4
      %v489 = vor.u32 %v488, %v484
      %v490 = vrot.slane %v489, 4
      %v492 = vshll.u32 %v254, 16
      %v494 = vrot.slane %v492, 5
      %v495 = vsel %vm261, %v490, %v494
      %v496 = vshrl.u32 %v254, 16
      %v498 = vrot.slane %v496, 4
      %v499 = vor.u32 %v498, %v494
      %v500 = vrot.slane %v499, 4
      %v502 = vshll.u32 %v255, 16
      %v504 = vrot.slane %v502, 5
      %v505 = vsel %vm261, %v500, %v504
      %v506 = vshrl.u32 %v255, 16
      %v508 = vrot.slane %v506, 4
      %v509 = vor.u32 %v508, %v504
      %v510 = vrot.slane %v509, 4
      %v512 = vshll.u32 %v256, 16
      %v514 = vrot.slane %v512, 5
      %v515 = vsel %vm261, %v510, %v514
      %v516 = vshrl.u32 %v256, 16
      %v518 = vrot.slane %v516, 4
      %v519 = vor.u32 %v518, %v514
      %v520 = vrot.slane %v519, 4
      %v522 = vshll.u32 %v257, 16
      %v524 = vrot.slane %v522, 5
      %v525 = vsel %vm261, %v520, %v524
      %v526 = vshrl.u32 %v257, 16
      %v528 = vrot.slane %v526, 4
      %v529 = vor.u32 %v528, %v524
      %v530 = vrot.slane %v529, 4
      %v532 = vshll.u32 %v258, 16
      %v534 = vrot.slane %v532, 5
      %v535 = vsel %vm261, %v530, %v534
      %v536 = vshrl.u32 %v258, 16
      %v538 = vrot.slane %v536, 4
      %v539 = vor.u32 %v538, %v534
      %v540 = vrot.slane %v539, 4
      %541 = vrot.lane.b32.xlu0 %v275, 3
      %v542 = vpop.permute.xlu0 %541
      %543 = vrot.lane.b32.xlu0 %v285, 3
      %v544 = vpop.permute.xlu0 %543
      %545 = vrot.lane.b32.xlu0 %v295, 3
      %v546 = vpop.permute.xlu0 %545
      %547 = vrot.lane.b32.xlu0 %v305, 3
      %v548 = vpop.permute.xlu0 %547
      %549 = vrot.lane.b32.xlu0 %v315, 3
      %v550 = vpop.permute.xlu0 %549
      %551 = vrot.lane.b32.xlu0 %v325, 3
      %v552 = vpop.permute.xlu0 %551
      %553 = vrot.lane.b32.xlu0 %v335, 3
      %v554 = vpop.permute.xlu0 %553
      %555 = vrot.lane.b32.xlu0 %v345, 3
      %v556 = vpop.permute.xlu0 %555
      %557 = vrot.lane.b32.xlu0 %v355, 3
      %v558 = vpop.permute.xlu0 %557
      %559 = vrot.lane.b32.xlu0 %v365, 3
      %v560 = vpop.permute.xlu0 %559
      %561 = vrot.lane.b32.xlu0 %v375, 3
      %v562 = vpop.permute.xlu0 %561
      %563 = vrot.lane.b32.xlu0 %v385, 3
      %v564 = vpop.permute.xlu0 %563
      %565 = vrot.lane.b32.xlu0 %v395, 3
      %v566 = vpop.permute.xlu0 %565
      %567 = vrot.lane.b32.xlu0 %v405, 3
      %v568 = vpop.permute.xlu0 %567
      %569 = vrot.lane.b32.xlu0 %v415, 3
      %v570 = vpop.permute.xlu0 %569
      %571 = vrot.lane.b32.xlu0 %v425, 3
      %v572 = vpop.permute.xlu0 %571
      %573 = vrot.lane.b32.xlu0 %v435, 3
      %v574 = vpop.permute.xlu0 %573
      %575 = vrot.lane.b32.xlu0 %v445, 3
      %v576 = vpop.permute.xlu0 %575
      %577 = vrot.lane.b32.xlu0 %v455, 3
      %v578 = vpop.permute.xlu0 %577
      %579 = vrot.lane.b32.xlu0 %v465, 3
      %v580 = vpop.permute.xlu0 %579
      %581 = vrot.lane.b32.xlu0 %v475, 3
      %v582 = vpop.permute.xlu0 %581
      %583 = vrot.lane.b32.xlu0 %v485, 3
      %v584 = vpop.permute.xlu0 %583
      %585 = vrot.lane.b32.xlu0 %v495, 3
      %v586 = vpop.permute.xlu0 %585
      %587 = vrot.lane.b32.xlu0 %v505, 3
      %v588 = vpop.permute.xlu0 %587
      %589 = vrot.lane.b32.xlu0 %v515, 3
      %v590 = vpop.permute.xlu0 %589
      %591 = vrot.lane.b32.xlu0 %v525, 3
      %v592 = vpop.permute.xlu0 %591
      %593 = vrot.lane.b32.xlu0 %v535, 3
      %v594 = vpop.permute.xlu0 %593
      %595 = vrot.lane.b32.xlu0 %v540, 3
      %v596 = vpop.permute.xlu0 %595
      %vm625 = vcmask 44056
      %626 = vst.msk [vmem:[#allocation2] sm:$0xf] %vm625, %v542
      %627 = vst.msk [vmem:[#allocation2 + $0x4] sm:$0xf] %vm625, %v544
      %628 = vst.msk [vmem:[#allocation2 + $0x8] sm:$0xf] %vm625, %v546
      %629 = vst.msk [vmem:[#allocation2 + $0xc] sm:$0xf] %vm625, %v548
      %630 = vst.msk [vmem:[#allocation2 + $0x10] sm:$0xf] %vm625, %v550
      %631 = vst.msk [vmem:[#allocation2 + $0x14] sm:$0xf] %vm625, %v552
      %632 = vst.msk [vmem:[#allocation2 + $0x18] sm:$0xf] %vm625, %v554
      %633 = vst.msk [vmem:[#allocation2 + $0x1c] sm:$0xf] %vm625, %v556
      %634 = vst.msk [vmem:[#allocation2 + $0x20] sm:$0xf] %vm625, %v558
      %635 = vst.msk [vmem:[#allocation2 + $0x24] sm:$0xf] %vm625, %v560
      %636 = vst.msk [vmem:[#allocation2 + $0x28] sm:$0xf] %vm625, %v562
      %637 = vst.msk [vmem:[#allocation2 + $0x2c] sm:$0xf] %vm625, %v564
      %638 = vst.msk [vmem:[#allocation2 + $0x30] sm:$0xf] %vm625, %v566
      %639 = vst.msk [vmem:[#allocation2 + $0x34] sm:$0xf] %vm625, %v568
      %640 = vst.msk [vmem:[#allocation2 + $0x38] sm:$0xf] %vm625, %v570
      %641 = vst.msk [vmem:[#allocation2 + $0x3c] sm:$0xf] %vm625, %v572
      %642 = vst.msk [vmem:[#allocation2 + $0x40] sm:$0xf] %vm625, %v574
      %643 = vst.msk [vmem:[#allocation2 + $0x44] sm:$0xf] %vm625, %v576
      %644 = vst.msk [vmem:[#allocation2 + $0x48] sm:$0xf] %vm625, %v578
      %645 = vst.msk [vmem:[#allocation2 + $0x4c] sm:$0xf] %vm625, %v580
      %646 = vst.msk [vmem:[#allocation2 + $0x50] sm:$0xf] %vm625, %v582
      %647 = vst.msk [vmem:[#allocation2 + $0x54] sm:$0xf] %vm625, %v584
      %648 = vst.msk [vmem:[#allocation2 + $0x58] sm:$0xf] %vm625, %v586
      %649 = vst.msk [vmem:[#allocation2 + $0x5c] sm:$0xf] %vm625, %v588
      %650 = vst.msk [vmem:[#allocation2 + $0x60] sm:$0xf] %vm625, %v590
      %651 = vst.msk [vmem:[#allocation2 + $0x64] sm:$0xf] %vm625, %v592
      %652 = vst.msk [vmem:[#allocation2 + $0x68] sm:$0xf] %vm625, %v594
      %vm653 = vcmask 43032
      %654 = vst.msk [vmem:[#allocation2 + $0x6c] sm:$0x7] %vm653, %v596
      %v655 = vld [vmem:[%s165] sm:$0xe]
      %v656 = vld [vmem:[%s165 + $0x4] sm:$0xf]
      %v657 = vld [vmem:[%s165 + $0x8] sm:$0xf]
      %v658 = vld [vmem:[%s165 + $0xc] sm:$0xf]
      %v659 = vld [vmem:[%s165 + $0x10] sm:$0xf]
      %v660 = vld [vmem:[%s165 + $0x14] sm:$0xf]
      %v661 = vld [vmem:[%s165 + $0x18] sm:$0xf]
      %v662 = vld [vmem:[%s165 + $0x1c] sm:$0xf]
      %v663 = vld [vmem:[%s165 + $0x20] sm:$0xf]
      %v664 = vld [vmem:[%s165 + $0x24] sm:$0xf]
      %v665 = vld [vmem:[%s165 + $0x28] sm:$0xf]
      %v666 = vld [vmem:[%s165 + $0x2c] sm:$0xf]
      %v667 = vld [vmem:[%s165 + $0x30] sm:$0xf]
      %v668 = vld [vmem:[%s165 + $0x34] sm:$0xf]
      %v669 = vld [vmem:[%s165 + $0x38] sm:$0xf]
      %v670 = vld [vmem:[%s165 + $0x3c] sm:$0xf]
      %v671 = vld [vmem:[%s165 + $0x40] sm:$0xf]
      %v672 = vld [vmem:[%s165 + $0x44] sm:$0xf]
      %v673 = vld [vmem:[%s165 + $0x48] sm:$0xf]
      %v674 = vld [vmem:[%s165 + $0x4c] sm:$0xf]
      %v675 = vld [vmem:[%s165 + $0x50] sm:$0xf]
      %v676 = vld [vmem:[%s165 + $0x54] sm:$0xf]
      %v677 = vld [vmem:[%s165 + $0x58] sm:$0xf]
      %v678 = vld [vmem:[%s165 + $0x5c] sm:$0xf]
      %v679 = vld [vmem:[%s165 + $0x60] sm:$0xf]
      %v680 = vld [vmem:[%s165 + $0x64] sm:$0xf]
      %v681 = vld [vmem:[%s165 + $0x68] sm:$0xf]
      %v682 = vld [vmem:[%s165 + $0x6c] sm:$0xf]
      %vm711 = vcmask 1042432
      %vm712 = vcmask 1046532
      %vm713 = vmor %vm711, %vm712
      %v714 = vrot.slane %v655, 5
      %v715 = vrot.slane %v714, 4
      %v716 = vrot.slane %v656, 5
      %v717 = vsel %vm713, %v715, %v716
      %v718 = vrot.slane %v716, 4
      %v719 = vrot.slane %v657, 5
      %v720 = vsel %vm713, %v718, %v719
      %v721 = vrot.slane %v719, 4
      %v722 = vrot.slane %v658, 5
      %v723 = vsel %vm713, %v721, %v722
      %v724 = vrot.slane %v722, 4
      %v725 = vrot.slane %v659, 5
      %v726 = vsel %vm713, %v724, %v725
      %v727 = vrot.slane %v725, 4
      %v728 = vrot.slane %v660, 5
      %v729 = vsel %vm713, %v727, %v728
      %v730 = vrot.slane %v728, 4
      %v731 = vrot.slane %v661, 5
      %v732 = vsel %vm713, %v730, %v731
      %v733 = vrot.slane %v731, 4
      %v734 = vrot.slane %v662, 5
      %v735 = vsel %vm713, %v733, %v734
      %v736 = vrot.slane %v734, 4
      %v737 = vrot.slane %v663, 5
      %v738 = vsel %vm713, %v736, %v737
      %v739 = vrot.slane %v737, 4
      %v740 = vrot.slane %v664, 5
      %v741 = vsel %vm713, %v739, %v740
      %v742 = vrot.slane %v740, 4
      %v743 = vrot.slane %v665, 5
      %v744 = vsel %vm713, %v742, %v743
      %v745 = vrot.slane %v743, 4
      %v746 = vrot.slane %v666, 5
      %v747 = vsel %vm713, %v745, %v746
      %v748 = vrot.slane %v746, 4
      %v749 = vrot.slane %v667, 5
      %v750 = vsel %vm713, %v748, %v749
      %v751 = vrot.slane %v749, 4
      %v752 = vrot.slane %v668, 5
      %v753 = vsel %vm713, %v751, %v752
      %v754 = vrot.slane %v752, 4
      %v755 = vrot.slane %v669, 5
      %v756 = vsel %vm713, %v754, %v755
      %v757 = vrot.slane %v755, 4
      %v758 = vrot.slane %v670, 5
      %v759 = vsel %vm713, %v757, %v758
      %v760 = vrot.slane %v758, 4
      %v761 = vrot.slane %v671, 5
      %v762 = vsel %vm713, %v760, %v761
      %v763 = vrot.slane %v761, 4
      %v764 = vrot.slane %v672, 5
      %v765 = vsel %vm713, %v763, %v764
      %v766 = vrot.slane %v764, 4
      %v767 = vrot.slane %v673, 5
      %v768 = vsel %vm713, %v766, %v767
      %v769 = vrot.slane %v767, 4
      %v770 = vrot.slane %v674, 5
      %v771 = vsel %vm713, %v769, %v770
      %v772 = vrot.slane %v770, 4
      %v773 = vrot.slane %v675, 5
      %v774 = vsel %vm713, %v772, %v773
      %v775 = vrot.slane %v773, 4
      %v776 = vrot.slane %v676, 5
      %v777 = vsel %vm713, %v775, %v776
      %v778 = vrot.slane %v776, 4
      %v779 = vrot.slane %v677, 5
      %v780 = vsel %vm713, %v778, %v779
      %v781 = vrot.slane %v779, 4
      %v782 = vrot.slane %v678, 5
      %v783 = vsel %vm713, %v781, %v782
      %v784 = vrot.slane %v782, 4
      %v785 = vrot.slane %v679, 5
      %v786 = vsel %vm713, %v784, %v785
      %v787 = vrot.slane %v785, 4
      %v788 = vrot.slane %v680, 5
      %v789 = vsel %vm713, %v787, %v788
      %v790 = vrot.slane %v788, 4
      %v791 = vrot.slane %v681, 5
      %v792 = vsel %vm713, %v790, %v791
      %v793 = vrot.slane %v791, 4
      %v794 = vrot.slane %v682, 5
      %v795 = vsel %vm713, %v793, %v794
      %v796 = vrot.slane %v794, 4
      %797 = vrot.lane.b32.xlu0 %v717, 6
      %v798 = vpop.permute.xlu0 %797
      %799 = vrot.lane.b32.xlu0 %v720, 6
      %v800 = vpop.permute.xlu0 %799
      %801 = vrot.lane.b32.xlu0 %v723, 6
      %v802 = vpop.permute.xlu0 %801
      %803 = vrot.lane.b32.xlu0 %v726, 6
      %v804 = vpop.permute.xlu0 %803
      %805 = vrot.lane.b32.xlu0 %v729, 6
      %v806 = vpop.permute.xlu0 %805
      %807 = vrot.lane.b32.xlu0 %v732, 6
      %v808 = vpop.permute.xlu0 %807
      %809 = vrot.lane.b32.xlu0 %v735, 6
      %v810 = vpop.permute.xlu0 %809
      %811 = vrot.lane.b32.xlu0 %v738, 6
      %v812 = vpop.permute.xlu0 %811
      %813 = vrot.lane.b32.xlu0 %v741, 6
      %v814 = vpop.permute.xlu0 %813
      %815 = vrot.lane.b32.xlu0 %v744, 6
      %v816 = vpop.permute.xlu0 %815
      %817 = vrot.lane.b32.xlu0 %v747, 6
      %v818 = vpop.permute.xlu0 %817
      %819 = vrot.lane.b32.xlu0 %v750, 6
      %v820 = vpop.permute.xlu0 %819
      %821 = vrot.lane.b32.xlu0 %v753, 6
      %v822 = vpop.permute.xlu0 %821
      %823 = vrot.lane.b32.xlu0 %v756, 6
      %v824 = vpop.permute.xlu0 %823
      %825 = vrot.lane.b32.xlu0 %v759, 6
      %v826 = vpop.permute.xlu0 %825
      %827 = vrot.lane.b32.xlu0 %v762, 6
      %v828 = vpop.permute.xlu0 %827
      %829 = vrot.lane.b32.xlu0 %v765, 6
      %v830 = vpop.permute.xlu0 %829
      %831 = vrot.lane.b32.xlu0 %v768, 6
      %v832 = vpop.permute.xlu0 %831
      %833 = vrot.lane.b32.xlu0 %v771, 6
      %v834 = vpop.permute.xlu0 %833
      %835 = vrot.lane.b32.xlu0 %v774, 6
      %v836 = vpop.permute.xlu0 %835
      %837 = vrot.lane.b32.xlu0 %v777, 6
      %v838 = vpop.permute.xlu0 %837
      %839 = vrot.lane.b32.xlu0 %v780, 6
      %v840 = vpop.permute.xlu0 %839
      %841 = vrot.lane.b32.xlu0 %v783, 6
      %v842 = vpop.permute.xlu0 %841
      %843 = vrot.lane.b32.xlu0 %v786, 6
      %v844 = vpop.permute.xlu0 %843
      %845 = vrot.lane.b32.xlu0 %v789, 6
      %v846 = vpop.permute.xlu0 %845
      %847 = vrot.lane.b32.xlu0 %v792, 6
      %v848 = vpop.permute.xlu0 %847
      %849 = vrot.lane.b32.xlu0 %v795, 6
      %v850 = vpop.permute.xlu0 %849
      %851 = vrot.lane.b32.xlu0 %v796, 6
      %v852 = vpop.permute.xlu0 %851
      %vm881 = vcmask 68656
      %882 = vst.msk [vmem:[#allocation2] sm:$0xf] %vm881, %v798
      %883 = vst.msk [vmem:[#allocation2 + $0x4] sm:$0xf] %vm881, %v800
      %884 = vst.msk [vmem:[#allocation2 + $0x8] sm:$0xf] %vm881, %v802
      %885 = vst.msk [vmem:[#allocation2 + $0xc] sm:$0xf] %vm881, %v804
      %886 = vst.msk [vmem:[#allocation2 + $0x10] sm:$0xf] %vm881, %v806
      %887 = vst.msk [vmem:[#allocation2 + $0x14] sm:$0xf] %vm881, %v808
      %888 = vst.msk [vmem:[#allocation2 + $0x18] sm:$0xf] %vm881, %v810
      %889 = vst.msk [vmem:[#allocation2 + $0x1c] sm:$0xf] %vm881, %v812
      %890 = vst.msk [vmem:[#allocation2 + $0x20] sm:$0xf] %vm881, %v814
      %891 = vst.msk [vmem:[#allocation2 + $0x24] sm:$0xf] %vm881, %v816
      %892 = vst.msk [vmem:[#allocation2 + $0x28] sm:$0xf] %vm881, %v818
      %893 = vst.msk [vmem:[#allocation2 + $0x2c] sm:$0xf] %vm881, %v820
      %894 = vst.msk [vmem:[#allocation2 + $0x30] sm:$0xf] %vm881, %v822
      %895 = vst.msk [vmem:[#allocation2 + $0x34] sm:$0xf] %vm881, %v824
      %896 = vst.msk [vmem:[#allocation2 + $0x38] sm:$0xf] %vm881, %v826
      %897 = vst.msk [vmem:[#allocation2 + $0x3c] sm:$0xf] %vm881, %v828
      %898 = vst.msk [vmem:[#allocation2 + $0x40] sm:$0xf] %vm881, %v830
      %899 = vst.msk [vmem:[#allocation2 + $0x44] sm:$0xf] %vm881, %v832
      %900 = vst.msk [vmem:[#allocation2 + $0x48] sm:$0xf] %vm881, %v834
      %901 = vst.msk [vmem:[#allocation2 + $0x4c] sm:$0xf] %vm881, %v836
      %902 = vst.msk [vmem:[#allocation2 + $0x50] sm:$0xf] %vm881, %v838
      %903 = vst.msk [vmem:[#allocation2 + $0x54] sm:$0xf] %vm881, %v840
      %904 = vst.msk [vmem:[#allocation2 + $0x58] sm:$0xf] %vm881, %v842
      %905 = vst.msk [vmem:[#allocation2 + $0x5c] sm:$0xf] %vm881, %v844
      %906 = vst.msk [vmem:[#allocation2 + $0x60] sm:$0xf] %vm881, %v846
      %907 = vst.msk [vmem:[#allocation2 + $0x64] sm:$0xf] %vm881, %v848
      %908 = vst.msk [vmem:[#allocation2 + $0x68] sm:$0xf] %vm881, %v850
      %vm909 = vcmask 67632
      %910 = vst.msk [vmem:[#allocation2 + $0x6c] sm:$0x7] %vm909, %v852
      %v911 = vld [vmem:[%s165 + $0x8] sm:$0xf]
      %v912 = vld [vmem:[%s165 + $0xc] sm:$0xf]
      %v913 = vld [vmem:[%s165 + $0x10] sm:$0xf]
      %v914 = vld [vmem:[%s165 + $0x14] sm:$0xf]
      %v915 = vld [vmem:[%s165 + $0x18] sm:$0xf]
      %v916 = vld [vmem:[%s165 + $0x1c] sm:$0xf]
      %v917 = vld [vmem:[%s165 + $0x20] sm:$0xf]
      %v918 = vld [vmem:[%s165 + $0x24] sm:$0xf]
      %v919 = vld [vmem:[%s165 + $0x28] sm:$0xf]
      %v920 = vld [vmem:[%s165 + $0x2c] sm:$0xf]
      %v921 = vld [vmem:[%s165 + $0x30] sm:$0xf]
      %v922 = vld [vmem:[%s165 + $0x34] sm:$0xf]
      %v923 = vld [vmem:[%s165 + $0x38] sm:$0xf]
      %v924 = vld [vmem:[%s165 + $0x3c] sm:$0xf]
      %v925 = vld [vmem:[%s165 + $0x40] sm:$0xf]
      %v926 = vld [vmem:[%s165 + $0x44] sm:$0xf]
      %v927 = vld [vmem:[%s165 + $0x48] sm:$0xf]
      %v928 = vld [vmem:[%s165 + $0x4c] sm:$0xf]
      %v929 = vld [vmem:[%s165 + $0x50] sm:$0xf]
      %v930 = vld [vmem:[%s165 + $0x54] sm:$0xf]
      %v931 = vld [vmem:[%s165 + $0x58] sm:$0xf]
      %v932 = vld [vmem:[%s165 + $0x5c] sm:$0xf]
      %v933 = vld [vmem:[%s165 + $0x60] sm:$0xf]
      %v934 = vld [vmem:[%s165 + $0x64] sm:$0xf]
      %v935 = vld [vmem:[%s165 + $0x68] sm:$0xf]
      %v936 = vld [vmem:[%s165 + $0x6c] sm:$0xf]
      %v937 = vld [vmem:[%s165 + $0x70] sm:$0xf]
      %v938 = vld [vmem:[%s165 + $0x74] sm:$0x7]
      %967 = vrot.lane.b32.xlu0 %v911, 9
      %v968 = vpop.permute.xlu0 %967
      %969 = vrot.lane.b32.xlu0 %v912, 9
      %v970 = vpop.permute.xlu0 %969
      %971 = vrot.lane.b32.xlu0 %v913, 9
      %v972 = vpop.permute.xlu0 %971
      %973 = vrot.lane.b32.xlu0 %v914, 9
      %v974 = vpop.permute.xlu0 %973
      %975 = vrot.lane.b32.xlu0 %v915, 9
      %v976 = vpop.permute.xlu0 %975
      %977 = vrot.lane.b32.xlu0 %v916, 9
      %v978 = vpop.permute.xlu0 %977
      %979 = vrot.lane.b32.xlu0 %v917, 9
      %v980 = vpop.permute.xlu0 %979
      %981 = vrot.lane.b32.xlu0 %v918, 9
      %v982 = vpop.permute.xlu0 %981
      %983 = vrot.lane.b32.xlu0 %v919, 9
      %v984 = vpop.permute.xlu0 %983
      %985 = vrot.lane.b32.xlu0 %v920, 9
      %v986 = vpop.permute.xlu0 %985
      %987 = vrot.lane.b32.xlu0 %v921, 9
      %v988 = vpop.permute.xlu0 %987
      %989 = vrot.lane.b32.xlu0 %v922, 9
      %v990 = vpop.permute.xlu0 %989
      %991 = vrot.lane.b32.xlu0 %v923, 9
      %v992 = vpop.permute.xlu0 %991
      %993 = vrot.lane.b32.xlu0 %v924, 9
      %v994 = vpop.permute.xlu0 %993
      %995 = vrot.lane.b32.xlu0 %v925, 9
      %v996 = vpop.permute.xlu0 %995
      %997 = vrot.lane.b32.xlu0 %v926, 9
      %v998 = vpop.permute.xlu0 %997
      %999 = vrot.lane.b32.xlu0 %v927, 9
      %v1000 = vpop.permute.xlu0 %999
      %1001 = vrot.lane.b32.xlu0 %v928, 9
      %v1002 = vpop.permute.xlu0 %1001
      %1003 = vrot.lane.b32.xlu0 %v929, 9
      %v1004 = vpop.permute.xlu0 %1003
      %1005 = vrot.lane.b32.xlu0 %v930, 9
      %v1006 = vpop.permute.xlu0 %1005
      %1007 = vrot.lane.b32.xlu0 %v931, 9
      %v1008 = vpop.permute.xlu0 %1007
      %1009 = vrot.lane.b32.xlu0 %v932, 9
      %v1010 = vpop.permute.xlu0 %1009
      %1011 = vrot.lane.b32.xlu0 %v933, 9
      %v1012 = vpop.permute.xlu0 %1011
      %1013 = vrot.lane.b32.xlu0 %v934, 9
      %v1014 = vpop.permute.xlu0 %1013
      %1015 = vrot.lane.b32.xlu0 %v935, 9
      %v1016 = vpop.permute.xlu0 %1015
      %1017 = vrot.lane.b32.xlu0 %v936, 9
      %v1018 = vpop.permute.xlu0 %1017
      %1019 = vrot.lane.b32.xlu0 %v937, 9
      %v1020 = vpop.permute.xlu0 %1019
      %1021 = vrot.lane.b32.xlu0 %v938, 9
      %v1022 = vpop.permute.xlu0 %1021
      %vm1051 = vcmask 93256
      %1052 = vst.msk [vmem:[#allocation2] sm:$0xf] %vm1051, %v968
      %1053 = vst.msk [vmem:[#allocation2 + $0x4] sm:$0xf] %vm1051, %v970
      %1054 = vst.msk [vmem:[#allocation2 + $0x8] sm:$0xf] %vm1051, %v972
      %1055 = vst.msk [vmem:[#allocation2 + $0xc] sm:$0xf] %vm1051, %v974
      %1056 = vst.msk [vmem:[#allocation2 + $0x10] sm:$0xf] %vm1051, %v976
      %1057 = vst.msk [vmem:[#allocation2 + $0x14] sm:$0xf] %vm1051, %v978
      %1058 = vst.msk [vmem:[#allocation2 + $0x18] sm:$0xf] %vm1051, %v980
      %1059 = vst.msk [vmem:[#allocation2 + $0x1c] sm:$0xf] %vm1051, %v982
      %1060 = vst.msk [vmem:[#allocation2 + $0x20] sm:$0xf] %vm1051, %v984
      %1061 = vst.msk [vmem:[#allocation2 + $0x24] sm:$0xf] %vm1051, %v986
      %1062 = vst.msk [vmem:[#allocation2 + $0x28] sm:$0xf] %vm1051, %v988
      %1063 = vst.msk [vmem:[#allocation2 + $0x2c] sm:$0xf] %vm1051, %v990
      %1064 = vst.msk [vmem:[#allocation2 + $0x30] sm:$0xf] %vm1051, %v992
      %1065 = vst.msk [vmem:[#allocation2 + $0x34] sm:$0xf] %vm1051, %v994
      %1066 = vst.msk [vmem:[#allocation2 + $0x38] sm:$0xf] %vm1051, %v996
      %1067 = vst.msk [vmem:[#allocation2 + $0x3c] sm:$0xf] %vm1051, %v998
      %1068 = vst.msk [vmem:[#allocation2 + $0x40] sm:$0xf] %vm1051, %v1000
      %1069 = vst.msk [vmem:[#allocation2 + $0x44] sm:$0xf] %vm1051, %v1002
      %1070 = vst.msk [vmem:[#allocation2 + $0x48] sm:$0xf] %vm1051, %v1004
      %1071 = vst.msk [vmem:[#allocation2 + $0x4c] sm:$0xf] %vm1051, %v1006
      %1072 = vst.msk [vmem:[#allocation2 + $0x50] sm:$0xf] %vm1051, %v1008
      %1073 = vst.msk [vmem:[#allocation2 + $0x54] sm:$0xf] %vm1051, %v1010
      %1074 = vst.msk [vmem:[#allocation2 + $0x58] sm:$0xf] %vm1051, %v1012
      %1075 = vst.msk [vmem:[#allocation2 + $0x5c] sm:$0xf] %vm1051, %v1014
      %1076 = vst.msk [vmem:[#allocation2 + $0x60] sm:$0xf] %vm1051, %v1016
      %1077 = vst.msk [vmem:[#allocation2 + $0x64] sm:$0xf] %vm1051, %v1018
      %1078 = vst.msk [vmem:[#allocation2 + $0x68] sm:$0xf] %vm1051, %v1020
      %vm1079 = vcmask 92232
      %1080 = vst.msk [vmem:[#allocation2 + $0x6c] sm:$0x7] %vm1079, %v1022
      %v1081 = vld [vmem:[%s165 + $0x8] sm:$0xf]
      %v1082 = vld [vmem:[%s165 + $0xc] sm:$0xf]
      %v1083 = vld [vmem:[%s165 + $0x10] sm:$0xf]
      %v1084 = vld [vmem:[%s165 + $0x14] sm:$0xf]
      %v1085 = vld [vmem:[%s165 + $0x18] sm:$0xf]
      %v1086 = vld [vmem:[%s165 + $0x1c] sm:$0xf]
      %v1087 = vld [vmem:[%s165 + $0x20] sm:$0xf]
      %v1088 = vld [vmem:[%s165 + $0x24] sm:$0xf]
      %v1089 = vld [vmem:[%s165 + $0x28] sm:$0xf]
      %v1090 = vld [vmem:[%s165 + $0x2c] sm:$0xf]
      %v1091 = vld [vmem:[%s165 + $0x30] sm:$0xf]
      %v1092 = vld [vmem:[%s165 + $0x34] sm:$0xf]
      %v1093 = vld [vmem:[%s165 + $0x38] sm:$0xf]
      %v1094 = vld [vmem:[%s165 + $0x3c] sm:$0xf]
      %v1095 = vld [vmem:[%s165 + $0x40] sm:$0xf]
      %v1096 = vld [vmem:[%s165 + $0x44] sm:$0xf]
      %v1097 = vld [vmem:[%s165 + $0x48] sm:$0xf]
      %v1098 = vld [vmem:[%s165 + $0x4c] sm:$0xf]
      %v1099 = vld [vmem:[%s165 + $0x50] sm:$0xf]
      %v1100 = vld [vmem:[%s165 + $0x54] sm:$0xf]
      %v1101 = vld [vmem:[%s165 + $0x58] sm:$0xf]
      %v1102 = vld [vmem:[%s165 + $0x5c] sm:$0xf]
      %v1103 = vld [vmem:[%s165 + $0x60] sm:$0xf]
      %v1104 = vld [vmem:[%s165 + $0x64] sm:$0xf]
      %v1105 = vld [vmem:[%s165 + $0x68] sm:$0xf]
      %v1106 = vld [vmem:[%s165 + $0x6c] sm:$0xf]
      %v1107 = vld [vmem:[%s165 + $0x70] sm:$0xf]
      %v1108 = vld [vmem:[%s165 + $0x74] sm:$0xf]
      %v1110 = vshrl.u32 %v1081, 16
      %v1112 = vrot.slane %v1110, 4
      %v1113 = vshll.u32 %v1081, 16
      %v1115 = vrot.slane %v1113, 5
      %v1116 = vor.u32 %v1112, %v1115
      %v1117 = vrot.slane %v1116, 4
      %v1119 = vshll.u32 %v1082, 16
      %v1121 = vrot.slane %v1119, 5
      %v1122 = vsel %vm261, %v1117, %v1121
      %v1123 = vshrl.u32 %v1082, 16
      %v1125 = vrot.slane %v1123, 4
      %v1126 = vor.u32 %v1125, %v1121
      %v1127 = vrot.slane %v1126, 4
      %v1129 = vshll.u32 %v1083, 16
      %v1131 = vrot.slane %v1129, 5
      %v1132 = vsel %vm261, %v1127, %v1131
      %v1133 = vshrl.u32 %v1083, 16
      %v1135 = vrot.slane %v1133, 4
      %v1136 = vor.u32 %v1135, %v1131
      %v1137 = vrot.slane %v1136, 4
      %v1139 = vshll.u32 %v1084, 16
      %v1141 = vrot.slane %v1139, 5
      %v1142 = vsel %vm261, %v1137, %v1141
      %v1143 = vshrl.u32 %v1084, 16
      %v1145 = vrot.slane %v1143, 4
      %v1146 = vor.u32 %v1145, %v1141
      %v1147 = vrot.slane %v1146, 4
      %v1149 = vshll.u32 %v1085, 16
      %v1151 = vrot.slane %v1149, 5
      %v1152 = vsel %vm261, %v1147, %v1151
      %v1153 = vshrl.u32 %v1085, 16
      %v1155 = vrot.slane %v1153, 4
      %v1156 = vor.u32 %v1155, %v1151
      %v1157 = vrot.slane %v1156, 4
      %v1159 = vshll.u32 %v1086, 16
      %v1161 = vrot.slane %v1159, 5
      %v1162 = vsel %vm261, %v1157, %v1161
      %v1163 = vshrl.u32 %v1086, 16
      %v1165 = vrot.slane %v1163, 4
      %v1166 = vor.u32 %v1165, %v1161
      %v1167 = vrot.slane %v1166, 4
      %v1169 = vshll.u32 %v1087, 16
      %v1171 = vrot.slane %v1169, 5
      %v1172 = vsel %vm261, %v1167, %v1171
      %v1173 = vshrl.u32 %v1087, 16
      %v1175 = vrot.slane %v1173, 4
      %v1176 = vor.u32 %v1175, %v1171
      %v1177 = vrot.slane %v1176, 4
      %v1179 = vshll.u32 %v1088, 16
      %v1181 = vrot.slane %v1179, 5
      %v1182 = vsel %vm261, %v1177, %v1181
      %v1183 = vshrl.u32 %v1088, 16
      %v1185 = vrot.slane %v1183, 4
      %v1186 = vor.u32 %v1185, %v1181
      %v1187 = vrot.slane %v1186, 4
      %v1189 = vshll.u32 %v1089, 16
      %v1191 = vrot.slane %v1189, 5
      %v1192 = vsel %vm261, %v1187, %v1191
      %v1193 = vshrl.u32 %v1089, 16
      %v1195 = vrot.slane %v1193, 4
      %v1196 = vor.u32 %v1195, %v1191
      %v1197 = vrot.slane %v1196, 4
      %v1199 = vshll.u32 %v1090, 16
      %v1201 = vrot.slane %v1199, 5
      %v1202 = vsel %vm261, %v1197, %v1201
      %v1203 = vshrl.u32 %v1090, 16
      %v1205 = vrot.slane %v1203, 4
      %v1206 = vor.u32 %v1205, %v1201
      %v1207 = vrot.slane %v1206, 4
      %v1209 = vshll.u32 %v1091, 16
      %v1211 = vrot.slane %v1209, 5
      %v1212 = vsel %vm261, %v1207, %v1211
      %v1213 = vshrl.u32 %v1091, 16
      %v1215 = vrot.slane %v1213, 4
      %v1216 = vor.u32 %v1215, %v1211
      %v1217 = vrot.slane %v1216, 4
      %v1219 = vshll.u32 %v1092, 16
      %v1221 = vrot.slane %v1219, 5
      %v1222 = vsel %vm261, %v1217, %v1221
      %v1223 = vshrl.u32 %v1092, 16
      %v1225 = vrot.slane %v1223, 4
      %v1226 = vor.u32 %v1225, %v1221
      %v1227 = vrot.slane %v1226, 4
      %v1229 = vshll.u32 %v1093, 16
      %v1231 = vrot.slane %v1229, 5
      %v1232 = vsel %vm261, %v1227, %v1231
      %v1233 = vshrl.u32 %v1093, 16
      %v1235 = vrot.slane %v1233, 4
      %v1236 = vor.u32 %v1235, %v1231
      %v1237 = vrot.slane %v1236, 4
      %v1239 = vshll.u32 %v1094, 16
      %v1241 = vrot.slane %v1239, 5
      %v1242 = vsel %vm261, %v1237, %v1241
      %v1243 = vshrl.u32 %v1094, 16
      %v1245 = vrot.slane %v1243, 4
      %v1246 = vor.u32 %v1245, %v1241
      %v1247 = vrot.slane %v1246, 4
      %v1249 = vshll.u32 %v1095, 16
      %v1251 = vrot.slane %v1249, 5
      %v1252 = vsel %vm261, %v1247, %v1251
      %v1253 = vshrl.u32 %v1095, 16
      %v1255 = vrot.slane %v1253, 4
      %v1256 = vor.u32 %v1255, %v1251
      %v1257 = vrot.slane %v1256, 4
      %v1259 = vshll.u32 %v1096, 16
      %v1261 = vrot.slane %v1259, 5
      %v1262 = vsel %vm261, %v1257, %v1261
      %v1263 = vshrl.u32 %v1096, 16
      %v1265 = vrot.slane %v1263, 4
      %v1266 = vor.u32 %v1265, %v1261
      %v1267 = vrot.slane %v1266, 4
      %v1269 = vshll.u32 %v1097, 16
      %v1271 = vrot.slane %v1269, 5
      %v1272 = vsel %vm261, %v1267, %v1271
      %v1273 = vshrl.u32 %v1097, 16
      %v1275 = vrot.slane %v1273, 4
      %v1276 = vor.u32 %v1275, %v1271
      %v1277 = vrot.slane %v1276, 4
      %v1279 = vshll.u32 %v1098, 16
      %v1281 = vrot.slane %v1279, 5
      %v1282 = vsel %vm261, %v1277, %v1281
      %v1283 = vshrl.u32 %v1098, 16
      %v1285 = vrot.slane %v1283, 4
      %v1286 = vor.u32 %v1285, %v1281
      %v1287 = vrot.slane %v1286, 4
      %v1289 = vshll.u32 %v1099, 16
      %v1291 = vrot.slane %v1289, 5
      %v1292 = vsel %vm261, %v1287, %v1291
      %v1293 = vshrl.u32 %v1099, 16
      %v1295 = vrot.slane %v1293, 4
      %v1296 = vor.u32 %v1295, %v1291
      %v1297 = vrot.slane %v1296, 4
      %v1299 = vshll.u32 %v1100, 16
      %v1301 = vrot.slane %v1299, 5
      %v1302 = vsel %vm261, %v1297, %v1301
      %v1303 = vshrl.u32 %v1100, 16
      %v1305 = vrot.slane %v1303, 4
      %v1306 = vor.u32 %v1305, %v1301
      %v1307 = vrot.slane %v1306, 4
      %v1309 = vshll.u32 %v1101, 16
      %v1311 = vrot.slane %v1309, 5
      %v1312 = vsel %vm261, %v1307, %v1311
      %v1313 = vshrl.u32 %v1101, 16
      %v1315 = vrot.slane %v1313, 4
      %v1316 = vor.u32 %v1315, %v1311
      %v1317 = vrot.slane %v1316, 4
      %v1319 = vshll.u32 %v1102, 16
      %v1321 = vrot.slane %v1319, 5
      %v1322 = vsel %vm261, %v1317, %v1321
      %v1323 = vshrl.u32 %v1102, 16
      %v1325 = vrot.slane %v1323, 4
      %v1326 = vor.u32 %v1325, %v1321
      %v1327 = vrot.slane %v1326, 4
      %v1329 = vshll.u32 %v1103, 16
      %v1331 = vrot.slane %v1329, 5
      %v1332 = vsel %vm261, %v1327, %v1331
      %v1333 = vshrl.u32 %v1103, 16
      %v1335 = vrot.slane %v1333, 4
      %v1336 = vor.u32 %v1335, %v1331
      %v1337 = vrot.slane %v1336, 4
      %v1339 = vshll.u32 %v1104, 16
      %v1341 = vrot.slane %v1339, 5
      %v1342 = vsel %vm261, %v1337, %v1341
      %v1343 = vshrl.u32 %v1104, 16
      %v1345 = vrot.slane %v1343, 4
      %v1346 = vor.u32 %v1345, %v1341
      %v1347 = vrot.slane %v1346, 4
      %v1349 = vshll.u32 %v1105, 16
      %v1351 = vrot.slane %v1349, 5
      %v1352 = vsel %vm261, %v1347, %v1351
      %v1353 = vshrl.u32 %v1105, 16
      %v1355 = vrot.slane %v1353, 4
      %v1356 = vor.u32 %v1355, %v1351
      %v1357 = vrot.slane %v1356, 4
      %v1359 = vshll.u32 %v1106, 16
      %v1361 = vrot.slane %v1359, 5
      %v1362 = vsel %vm261, %v1357, %v1361
      %v1363 = vshrl.u32 %v1106, 16
      %v1365 = vrot.slane %v1363, 4
      %v1366 = vor.u32 %v1365, %v1361
      %v1367 = vrot.slane %v1366, 4
      %v1369 = vshll.u32 %v1107, 16
      %v1371 = vrot.slane %v1369, 5
      %v1372 = vsel %vm261, %v1367, %v1371
      %v1373 = vshrl.u32 %v1107, 16
      %v1375 = vrot.slane %v1373, 4
      %v1376 = vor.u32 %v1375, %v1371
      %v1377 = vrot.slane %v1376, 4
      %v1379 = vshll.u32 %v1108, 16
      %v1381 = vrot.slane %v1379, 5
      %v1382 = vsel %vm261, %v1377, %v1381
      %v1383 = vshrl.u32 %v1108, 16
      %v1385 = vrot.slane %v1383, 4
      %v1386 = vor.u32 %v1385, %v1381
      %v1387 = vrot.slane %v1386, 4
      %1388 = vrot.lane.b32.xlu0 %v1122, 12
      %v1389 = vpop.permute.xlu0 %1388
      %1390 = vrot.lane.b32.xlu0 %v1132, 12
      %v1391 = vpop.permute.xlu0 %1390
      %1392 = vrot.lane.b32.xlu0 %v1142, 12
      %v1393 = vpop.permute.xlu0 %1392
      %1394 = vrot.lane.b32.xlu0 %v1152, 12
      %v1395 = vpop.permute.xlu0 %1394
      %1396 = vrot.lane.b32.xlu0 %v1162, 12
      %v1397 = vpop.permute.xlu0 %1396
      %1398 = vrot.lane.b32.xlu0 %v1172, 12
      %v1399 = vpop.permute.xlu0 %1398
      %1400 = vrot.lane.b32.xlu0 %v1182, 12
      %v1401 = vpop.permute.xlu0 %1400
      %1402 = vrot.lane.b32.xlu0 %v1192, 12
      %v1403 = vpop.permute.xlu0 %1402
      %1404 = vrot.lane.b32.xlu0 %v1202, 12
      %v1405 = vpop.permute.xlu0 %1404
      %1406 = vrot.lane.b32.xlu0 %v1212, 12
      %v1407 = vpop.permute.xlu0 %1406
      %1408 = vrot.lane.b32.xlu0 %v1222, 12
      %v1409 = vpop.permute.xlu0 %1408
      %1410 = vrot.lane.b32.xlu0 %v1232, 12
      %v1411 = vpop.permute.xlu0 %1410
      %1412 = vrot.lane.b32.xlu0 %v1242, 12
      %v1413 = vpop.permute.xlu0 %1412
      %1414 = vrot.lane.b32.xlu0 %v1252, 12
      %v1415 = vpop.permute.xlu0 %1414
      %1416 = vrot.lane.b32.xlu0 %v1262, 12
      %v1417 = vpop.permute.xlu0 %1416
      %1418 = vrot.lane.b32.xlu0 %v1272, 12
      %v1419 = vpop.permute.xlu0 %1418
      %1420 = vrot.lane.b32.xlu0 %v1282, 12
      %v1421 = vpop.permute.xlu0 %1420
      %1422 = vrot.lane.b32.xlu0 %v1292, 12
      %v1423 = vpop.permute.xlu0 %1422
      %1424 = vrot.lane.b32.xlu0 %v1302, 12
      %v1425 = vpop.permute.xlu0 %1424
      %1426 = vrot.lane.b32.xlu0 %v1312, 12
      %v1427 = vpop.permute.xlu0 %1426
      %1428 = vrot.lane.b32.xlu0 %v1322, 12
      %v1429 = vpop.permute.xlu0 %1428
      %1430 = vrot.lane.b32.xlu0 %v1332, 12
      %v1431 = vpop.permute.xlu0 %1430
      %1432 = vrot.lane.b32.xlu0 %v1342, 12
      %v1433 = vpop.permute.xlu0 %1432
      %1434 = vrot.lane.b32.xlu0 %v1352, 12
      %v1435 = vpop.permute.xlu0 %1434
      %1436 = vrot.lane.b32.xlu0 %v1362, 12
      %v1437 = vpop.permute.xlu0 %1436
      %1438 = vrot.lane.b32.xlu0 %v1372, 12
      %v1439 = vpop.permute.xlu0 %1438
      %1440 = vrot.lane.b32.xlu0 %v1382, 12
      %v1441 = vpop.permute.xlu0 %1440
      %1442 = vrot.lane.b32.xlu0 %v1387, 12
      %v1443 = vpop.permute.xlu0 %1442
      %vm1472 = vcmask 117856
      %1473 = vst.msk [vmem:[#allocation2] sm:$0xf] %vm1472, %v1389
      %1474 = vst.msk [vmem:[#allocation2 + $0x4] sm:$0xf] %vm1472, %v1391
      %1475 = vst.msk [vmem:[#allocation2 + $0x8] sm:$0xf] %vm1472, %v1393
      %1476 = vst.msk [vmem:[#allocation2 + $0xc] sm:$0xf] %vm1472, %v1395
      %1477 = vst.msk [vmem:[#allocation2 + $0x10] sm:$0xf] %vm1472, %v1397
      %1478 = vst.msk [vmem:[#allocation2 + $0x14] sm:$0xf] %vm1472, %v1399
      %1479 = vst.msk [vmem:[#allocation2 + $0x18] sm:$0xf] %vm1472, %v1401
      %1480 = vst.msk [vmem:[#allocation2 + $0x1c] sm:$0xf] %vm1472, %v1403
      %1481 = vst.msk [vmem:[#allocation2 + $0x20] sm:$0xf] %vm1472, %v1405
      %1482 = vst.msk [vmem:[#allocation2 + $0x24] sm:$0xf] %vm1472, %v1407
      %1483 = vst.msk [vmem:[#allocation2 + $0x28] sm:$0xf] %vm1472, %v1409
      %1484 = vst.msk [vmem:[#allocation2 + $0x2c] sm:$0xf] %vm1472, %v1411
      %1485 = vst.msk [vmem:[#allocation2 + $0x30] sm:$0xf] %vm1472, %v1413
      %1486 = vst.msk [vmem:[#allocation2 + $0x34] sm:$0xf] %vm1472, %v1415
      %1487 = vst.msk [vmem:[#allocation2 + $0x38] sm:$0xf] %vm1472, %v1417
      %1488 = vst.msk [vmem:[#allocation2 + $0x3c] sm:$0xf] %vm1472, %v1419
      %1489 = vst.msk [vmem:[#allocation2 + $0x40] sm:$0xf] %vm1472, %v1421
      %1490 = vst.msk [vmem:[#allocation2 + $0x44] sm:$0xf] %vm1472, %v1423
      %1491 = vst.msk [vmem:[#allocation2 + $0x48] sm:$0xf] %vm1472, %v1425
      %1492 = vst.msk [vmem:[#allocation2 + $0x4c] sm:$0xf] %vm1472, %v1427
      %1493 = vst.msk [vmem:[#allocation2 + $0x50] sm:$0xf] %vm1472, %v1429
      %1494 = vst.msk [vmem:[#allocation2 + $0x54] sm:$0xf] %vm1472, %v1431
      %1495 = vst.msk [vmem:[#allocation2 + $0x58] sm:$0xf] %vm1472, %v1433
      %1496 = vst.msk [vmem:[#allocation2 + $0x5c] sm:$0xf] %vm1472, %v1435
      %1497 = vst.msk [vmem:[#allocation2 + $0x60] sm:$0xf] %vm1472, %v1437
      %1498 = vst.msk [vmem:[#allocation2 + $0x64] sm:$0xf] %vm1472, %v1439
      %1499 = vst.msk [vmem:[#allocation2 + $0x68] sm:$0xf] %vm1472, %v1441
      %vm1500 = vcmask 116832
      %1501 = vst.msk [vmem:[#allocation2 + $0x6c] sm:$0x7] %vm1500, %v1443
      %v1502 = vld [vmem:[%s165 + $0x8] sm:$0xe]
      %v1503 = vld [vmem:[%s165 + $0xc] sm:$0xf]
      %v1504 = vld [vmem:[%s165 + $0x10] sm:$0xf]
      %v1505 = vld [vmem:[%s165 + $0x14] sm:$0xf]
      %v1506 = vld [vmem:[%s165 + $0x18] sm:$0xf]
      %v1507 = vld [vmem:[%s165 + $0x1c] sm:$0xf]
      %v1508 = vld [vmem:[%s165 + $0x20] sm:$0xf]
      %v1509 = vld [vmem:[%s165 + $0x24] sm:$0xf]
      %v1510 = vld [vmem:[%s165 + $0x28] sm:$0xf]
      %v1511 = vld [vmem:[%s165 + $0x2c] sm:$0xf]
      %v1512 = vld [vmem:[%s165 + $0x30] sm:$0xf]
      %v1513 = vld [vmem:[%s165 + $0x34] sm:$0xf]
      %v1514 = vld [vmem:[%s165 + $0x38] sm:$0xf]
      %v1515 = vld [vmem:[%s165 + $0x3c] sm:$0xf]
      %v1516 = vld [vmem:[%s165 + $0x40] sm:$0xf]
      %v1517 = vld [vmem:[%s165 + $0x44] sm:$0xf]
      %v1518 = vld [vmem:[%s165 + $0x48] sm:$0xf]
      %v1519 = vld [vmem:[%s165 + $0x4c] sm:$0xf]
      %v1520 = vld [vmem:[%s165 + $0x50] sm:$0xf]
      %v1521 = vld [vmem:[%s165 + $0x54] sm:$0xf]
      %v1522 = vld [vmem:[%s165 + $0x58] sm:$0xf]
      %v1523 = vld [vmem:[%s165 + $0x5c] sm:$0xf]
      %v1524 = vld [vmem:[%s165 + $0x60] sm:$0xf]
      %v1525 = vld [vmem:[%s165 + $0x64] sm:$0xf]
      %v1526 = vld [vmem:[%s165 + $0x68] sm:$0xf]
      %v1527 = vld [vmem:[%s165 + $0x6c] sm:$0xf]
      %v1528 = vld [vmem:[%s165 + $0x70] sm:$0xf]
      %v1529 = vld [vmem:[%s165 + $0x74] sm:$0xf]
      %v1558 = vrot.slane %v1502, 5
      %v1559 = vrot.slane %v1558, 4
      %v1560 = vrot.slane %v1503, 5
      %v1561 = vsel %vm713, %v1559, %v1560
      %v1562 = vrot.slane %v1560, 4
      %v1563 = vrot.slane %v1504, 5
      %v1564 = vsel %vm713, %v1562, %v1563
      %v1565 = vrot.slane %v1563, 4
      %v1566 = vrot.slane %v1505, 5
      %v1567 = vsel %vm713, %v1565, %v1566
      %v1568 = vrot.slane %v1566, 4
      %v1569 = vrot.slane %v1506, 5
      %v1570 = vsel %vm713, %v1568, %v1569
      %v1571 = vrot.slane %v1569, 4
      %v1572 = vrot.slane %v1507, 5
      %v1573 = vsel %vm713, %v1571, %v1572
      %v1574 = vrot.slane %v1572, 4
      %v1575 = vrot.slane %v1508, 5
      %v1576 = vsel %vm713, %v1574, %v1575
      %v1577 = vrot.slane %v1575, 4
      %v1578 = vrot.slane %v1509, 5
      %v1579 = vsel %vm713, %v1577, %v1578
      %v1580 = vrot.slane %v1578, 4
      %v1581 = vrot.slane %v1510, 5
      %v1582 = vsel %vm713, %v1580, %v1581
      %v1583 = vrot.slane %v1581, 4
      %v1584 = vrot.slane %v1511, 5
      %v1585 = vsel %vm713, %v1583, %v1584
      %v1586 = vrot.slane %v1584, 4
      %v1587 = vrot.slane %v1512, 5
      %v1588 = vsel %vm713, %v1586, %v1587
      %v1589 = vrot.slane %v1587, 4
      %v1590 = vrot.slane %v1513, 5
      %v1591 = vsel %vm713, %v1589, %v1590
      %v1592 = vrot.slane %v1590, 4
      %v1593 = vrot.slane %v1514, 5
      %v1594 = vsel %vm713, %v1592, %v1593
      %v1595 = vrot.slane %v1593, 4
      %v1596 = vrot.slane %v1515, 5
      %v1597 = vsel %vm713, %v1595, %v1596
      %v1598 = vrot.slane %v1596, 4
      %v1599 = vrot.slane %v1516, 5
      %v1600 = vsel %vm713, %v1598, %v1599
      %v1601 = vrot.slane %v1599, 4
      %v1602 = vrot.slane %v1517, 5
      %v1603 = vsel %vm713, %v1601, %v1602
      %v1604 = vrot.slane %v1602, 4
      %v1605 = vrot.slane %v1518, 5
      %v1606 = vsel %vm713, %v1604, %v1605
      %v1607 = vrot.slane %v1605, 4
      %v1608 = vrot.slane %v1519, 5
      %v1609 = vsel %vm713, %v1607, %v1608
      %v1610 = vrot.slane %v1608, 4
      %v1611 = vrot.slane %v1520, 5
      %v1612 = vsel %vm713, %v1610, %v1611
      %v1613 = vrot.slane %v1611, 4
      %v1614 = vrot.slane %v1521, 5
      %v1615 = vsel %vm713, %v1613, %v1614
      %v1616 = vrot.slane %v1614, 4
      %v1617 = vrot.slane %v1522, 5
      %v1618 = vsel %vm713, %v1616, %v1617
      %v1619 = vrot.slane %v1617, 4
      %v1620 = vrot.slane %v1523, 5
      %v1621 = vsel %vm713, %v1619, %v1620
      %v1622 = vrot.slane %v1620, 4
      %v1623 = vrot.slane %v1524, 5
      %v1624 = vsel %vm713, %v1622, %v1623
      %v1625 = vrot.slane %v1623, 4
      %v1626 = vrot.slane %v1525, 5
      %v1627 = vsel %vm713, %v1625, %v1626
      %v1628 = vrot.slane %v1626, 4
      %v1629 = vrot.slane %v1526, 5
      %v1630 = vsel %vm713, %v1628, %v1629
      %v1631 = vrot.slane %v1629, 4
      %v1632 = vrot.slane %v1527, 5
      %v1633 = vsel %vm713, %v1631, %v1632
      %v1634 = vrot.slane %v1632, 4
      %v1635 = vrot.slane %v1528, 5
      %v1636 = vsel %vm713, %v1634, %v1635
      %v1637 = vrot.slane %v1635, 4
      %v1638 = vrot.slane %v1529, 5
      %v1639 = vsel %vm713, %v1637, %v1638
      %v1640 = vrot.slane %v1638, 4
      %1641 = vrot.lane.b32.xlu0 %v1561, 15
      %v1642 = vpop.permute.xlu0 %1641
      %1643 = vrot.lane.b32.xlu0 %v1564, 15
      %v1644 = vpop.permute.xlu0 %1643
      %1645 = vrot.lane.b32.xlu0 %v1567, 15
      %v1646 = vpop.permute.xlu0 %1645
      %1647 = vrot.lane.b32.xlu0 %v1570, 15
      %v1648 = vpop.permute.xlu0 %1647
      %1649 = vrot.lane.b32.xlu0 %v1573, 15
      %v1650 = vpop.permute.xlu0 %1649
      %1651 = vrot.lane.b32.xlu0 %v1576, 15
      %v1652 = vpop.permute.xlu0 %1651
      %1653 = vrot.lane.b32.xlu0 %v1579, 15
      %v1654 = vpop.permute.xlu0 %1653
      %1655 = vrot.lane.b32.xlu0 %v1582, 15
      %v1656 = vpop.permute.xlu0 %1655
      %1657 = vrot.lane.b32.xlu0 %v1585, 15
      %v1658 = vpop.permute.xlu0 %1657
      %1659 = vrot.lane.b32.xlu0 %v1588, 15
      %v1660 = vpop.permute.xlu0 %1659
      %1661 = vrot.lane.b32.xlu0 %v1591, 15
      %v1662 = vpop.permute.xlu0 %1661
      %1663 = vrot.lane.b32.xlu0 %v1594, 15
      %v1664 = vpop.permute.xlu0 %1663
      %1665 = vrot.lane.b32.xlu0 %v1597, 15
      %v1666 = vpop.permute.xlu0 %1665
      %1667 = vrot.lane.b32.xlu0 %v1600, 15
      %v1668 = vpop.permute.xlu0 %1667
      %1669 = vrot.lane.b32.xlu0 %v1603, 15
      %v1670 = vpop.permute.xlu0 %1669
      %1671 = vrot.lane.b32.xlu0 %v1606, 15
      %v1672 = vpop.permute.xlu0 %1671
      %1673 = vrot.lane.b32.xlu0 %v1609, 15
      %v1674 = vpop.permute.xlu0 %1673
      %1675 = vrot.lane.b32.xlu0 %v1612, 15
      %v1676 = vpop.permute.xlu0 %1675
      %1677 = vrot.lane.b32.xlu0 %v1615, 15
      %v1678 = vpop.permute.xlu0 %1677
      %1679 = vrot.lane.b32.xlu0 %v1618, 15
      %v1680 = vpop.permute.xlu0 %1679
      %1681 = vrot.lane.b32.xlu0 %v1621, 15
      %v1682 = vpop.permute.xlu0 %1681
      %1683 = vrot.lane.b32.xlu0 %v1624, 15
      %v1684 = vpop.permute.xlu0 %1683
      %1685 = vrot.lane.b32.xlu0 %v1627, 15
      %v1686 = vpop.permute.xlu0 %1685
      %1687 = vrot.lane.b32.xlu0 %v1630, 15
      %v1688 = vpop.permute.xlu0 %1687
      %1689 = vrot.lane.b32.xlu0 %v1633, 15
      %v1690 = vpop.permute.xlu0 %1689
      %1691 = vrot.lane.b32.xlu0 %v1636, 15
      %v1692 = vpop.permute.xlu0 %1691
      %1693 = vrot.lane.b32.xlu0 %v1639, 15
      %v1694 = vpop.permute.xlu0 %1693
      %1695 = vrot.lane.b32.xlu0 %v1640, 15
      %v1696 = vpop.permute.xlu0 %1695
      %vm1725 = vcmask 142456
      %1726 = vst.msk [vmem:[#allocation2] sm:$0xf] %vm1725, %v1642
      %1727 = vst.msk [vmem:[#allocation2 + $0x4] sm:$0xf] %vm1725, %v1644
      %1728 = vst.msk [vmem:[#allocation2 + $0x8] sm:$0xf] %vm1725, %v1646
      %1729 = vst.msk [vmem:[#allocation2 + $0xc] sm:$0xf] %vm1725, %v1648
      %1730 = vst.msk [vmem:[#allocation2 + $0x10] sm:$0xf] %vm1725, %v1650
      %1731 = vst.msk [vmem:[#allocation2 + $0x14] sm:$0xf] %vm1725, %v1652
      %1732 = vst.msk [vmem:[#allocation2 + $0x18] sm:$0xf] %vm1725, %v1654
      %1733 = vst.msk [vmem:[#allocation2 + $0x1c] sm:$0xf] %vm1725, %v1656
      %1734 = vst.msk [vmem:[#allocation2 + $0x20] sm:$0xf] %vm1725, %v1658
      %1735 = vst.msk [vmem:[#allocation2 + $0x24] sm:$0xf] %vm1725, %v1660
      %1736 = vst.msk [vmem:[#allocation2 + $0x28] sm:$0xf] %vm1725, %v1662
      %1737 = vst.msk [vmem:[#allocation2 + $0x2c] sm:$0xf] %vm1725, %v1664
      %1738 = vst.msk [vmem:[#allocation2 + $0x30] sm:$0xf] %vm1725, %v1666
      %1739 = vst.msk [vmem:[#allocation2 + $0x34] sm:$0xf] %vm1725, %v1668
      %1740 = vst.msk [vmem:[#allocation2 + $0x38] sm:$0xf] %vm1725, %v1670
      %1741 = vst.msk [vmem:[#allocation2 + $0x3c] sm:$0xf] %vm1725, %v1672
      %1742 = vst.msk [vmem:[#allocation2 + $0x40] sm:$0xf] %vm1725, %v1674
      %1743 = vst.msk [vmem:[#allocation2 + $0x44] sm:$0xf] %vm1725, %v1676
      %1744 = vst.msk [vmem:[#allocation2 + $0x48] sm:$0xf] %vm1725, %v1678
      %1745 = vst.msk [vmem:[#allocation2 + $0x4c] sm:$0xf] %vm1725, %v1680
      %1746 = vst.msk [vmem:[#allocation2 + $0x50] sm:$0xf] %vm1725, %v1682
      %1747 = vst.msk [vmem:[#allocation2 + $0x54] sm:$0xf] %vm1725, %v1684
      %1748 = vst.msk [vmem:[#allocation2 + $0x58] sm:$0xf] %vm1725, %v1686
      %1749 = vst.msk [vmem:[#allocation2 + $0x5c] sm:$0xf] %vm1725, %v1688
      %1750 = vst.msk [vmem:[#allocation2 + $0x60] sm:$0xf] %vm1725, %v1690
      %1751 = vst.msk [vmem:[#allocation2 + $0x64] sm:$0xf] %vm1725, %v1692
      %1752 = vst.msk [vmem:[#allocation2 + $0x68] sm:$0xf] %vm1725, %v1694
      %vm1753 = vcmask 141432
      %1754 = vst.msk [vmem:[#allocation2 + $0x6c] sm:$0x7] %vm1753, %v1696
      %v1755 = vld [vmem:[%s165 + $0x10] sm:$0xf]
      %v1756 = vld [vmem:[%s165 + $0x14] sm:$0xf]
      %v1757 = vld [vmem:[%s165 + $0x18] sm:$0xf]
      %v1758 = vld [vmem:[%s165 + $0x1c] sm:$0xf]
      %v1759 = vld [vmem:[%s165 + $0x20] sm:$0xf]
      %v1760 = vld [vmem:[%s165 + $0x24] sm:$0xf]
      %v1761 = vld [vmem:[%s165 + $0x28] sm:$0xf]
      %v1762 = vld [vmem:[%s165 + $0x2c] sm:$0xf]
      %v1763 = vld [vmem:[%s165 + $0x30] sm:$0xf]
      %v1764 = vld [vmem:[%s165 + $0x34] sm:$0xf]
      %v1765 = vld [vmem:[%s165 + $0x38] sm:$0xf]
      %v1766 = vld [vmem:[%s165 + $0x3c] sm:$0xf]
      %v1767 = vld [vmem:[%s165 + $0x40] sm:$0xf]
      %v1768 = vld [vmem:[%s165 + $0x44] sm:$0xf]
      %v1769 = vld [vmem:[%s165 + $0x48] sm:$0xf]
      %v1770 = vld [vmem:[%s165 + $0x4c] sm:$0xf]
      %v1771 = vld [vmem:[%s165 + $0x50] sm:$0xf]
      %v1772 = vld [vmem:[%s165 + $0x54] sm:$0xf]
      %v1773 = vld [vmem:[%s165 + $0x58] sm:$0xf]
      %v1774 = vld [vmem:[%s165 + $0x5c] sm:$0xf]
      %v1775 = vld [vmem:[%s165 + $0x60] sm:$0xf]
      %v1776 = vld [vmem:[%s165 + $0x64] sm:$0xf]
      %v1777 = vld [vmem:[%s165 + $0x68] sm:$0xf]
      %v1778 = vld [vmem:[%s165 + $0x6c] sm:$0xf]
      %v1779 = vld [vmem:[%s165 + $0x70] sm:$0xf]
      %v1780 = vld [vmem:[%s165 + $0x74] sm:$0xf]
      %v1781 = vld [vmem:[%s165 + $0x78] sm:$0xf]
      %v1782 = vld [vmem:[%s165 + $0x7c] sm:$0x7]
      %1811 = vrot.lane.b32.xlu0 %v1755, 18
      %v1812 = vpop.permute.xlu0 %1811
      %1813 = vrot.lane.b32.xlu0 %v1756, 18
      %v1814 = vpop.permute.xlu0 %1813
      %1815 = vrot.lane.b32.xlu0 %v1757, 18
      %v1816 = vpop.permute.xlu0 %1815
      %1817 = vrot.lane.b32.xlu0 %v1758, 18
      %v1818 = vpop.permute.xlu0 %1817
      %1819 = vrot.lane.b32.xlu0 %v1759, 18
      %v1820 = vpop.permute.xlu0 %1819
      %1821 = vrot.lane.b32.xlu0 %v1760, 18
      %v1822 = vpop.permute.xlu0 %1821
      %1823 = vrot.lane.b32.xlu0 %v1761, 18
      %v1824 = vpop.permute.xlu0 %1823
      %1825 = vrot.lane.b32.xlu0 %v1762, 18
      %v1826 = vpop.permute.xlu0 %1825
      %1827 = vrot.lane.b32.xlu0 %v1763, 18
      %v1828 = vpop.permute.xlu0 %1827
      %1829 = vrot.lane.b32.xlu0 %v1764, 18
      %v1830 = vpop.permute.xlu0 %1829
      %1831 = vrot.lane.b32.xlu0 %v1765, 18
      %v1832 = vpop.permute.xlu0 %1831
      %1833 = vrot.lane.b32.xlu0 %v1766, 18
      %v1834 = vpop.permute.xlu0 %1833
      %1835 = vrot.lane.b32.xlu0 %v1767, 18
      %v1836 = vpop.permute.xlu0 %1835
      %1837 = vrot.lane.b32.xlu0 %v1768, 18
      %v1838 = vpop.permute.xlu0 %1837
      %1839 = vrot.lane.b32.xlu0 %v1769, 18
      %v1840 = vpop.permute.xlu0 %1839
      %1841 = vrot.lane.b32.xlu0 %v1770, 18
      %v1842 = vpop.permute.xlu0 %1841
      %1843 = vrot.lane.b32.xlu0 %v1771, 18
      %v1844 = vpop.permute.xlu0 %1843
      %1845 = vrot.lane.b32.xlu0 %v1772, 18
      %v1846 = vpop.permute.xlu0 %1845
      %1847 = vrot.lane.b32.xlu0 %v1773, 18
      %v1848 = vpop.permute.xlu0 %1847
      %1849 = vrot.lane.b32.xlu0 %v1774, 18
      %v1850 = vpop.permute.xlu0 %1849
      %1851 = vrot.lane.b32.xlu0 %v1775, 18
      %v1852 = vpop.permute.xlu0 %1851
      %1853 = vrot.lane.b32.xlu0 %v1776, 18
      %v1854 = vpop.permute.xlu0 %1853
      %1855 = vrot.lane.b32.xlu0 %v1777, 18
      %v1856 = vpop.permute.xlu0 %1855
      %1857 = vrot.lane.b32.xlu0 %v1778, 18
      %v1858 = vpop.permute.xlu0 %1857
      %1859 = vrot.lane.b32.xlu0 %v1779, 18
      %v1860 = vpop.permute.xlu0 %1859
      %1861 = vrot.lane.b32.xlu0 %v1780, 18
      %v1862 = vpop.permute.xlu0 %1861
      %1863 = vrot.lane.b32.xlu0 %v1781, 18
      %v1864 = vpop.permute.xlu0 %1863
      %1865 = vrot.lane.b32.xlu0 %v1782, 18
      %v1866 = vpop.permute.xlu0 %1865
      %vm1895 = vcmask 167056
      %1896 = vst.msk [vmem:[#allocation2] sm:$0xf] %vm1895, %v1812
      %1897 = vst.msk [vmem:[#allocation2 + $0x4] sm:$0xf] %vm1895, %v1814
      %1898 = vst.msk [vmem:[#allocation2 + $0x8] sm:$0xf] %vm1895, %v1816
      %1899 = vst.msk [vmem:[#allocation2 + $0xc] sm:$0xf] %vm1895, %v1818
      %1900 = vst.msk [vmem:[#allocation2 + $0x10] sm:$0xf] %vm1895, %v1820
      %1901 = vst.msk [vmem:[#allocation2 + $0x14] sm:$0xf] %vm1895, %v1822
      %1902 = vst.msk [vmem:[#allocation2 + $0x18] sm:$0xf] %vm1895, %v1824
      %1903 = vst.msk [vmem:[#allocation2 + $0x1c] sm:$0xf] %vm1895, %v1826
      %1904 = vst.msk [vmem:[#allocation2 + $0x20] sm:$0xf] %vm1895, %v1828
      %1905 = vst.msk [vmem:[#allocation2 + $0x24] sm:$0xf] %vm1895, %v1830
      %1906 = vst.msk [vmem:[#allocation2 + $0x28] sm:$0xf] %vm1895, %v1832
      %1907 = vst.msk [vmem:[#allocation2 + $0x2c] sm:$0xf] %vm1895, %v1834
      %1908 = vst.msk [vmem:[#allocation2 + $0x30] sm:$0xf] %vm1895, %v1836
      %1909 = vst.msk [vmem:[#allocation2 + $0x34] sm:$0xf] %vm1895, %v1838
      %1910 = vst.msk [vmem:[#allocation2 + $0x38] sm:$0xf] %vm1895, %v1840
      %1911 = vst.msk [vmem:[#allocation2 + $0x3c] sm:$0xf] %vm1895, %v1842
      %1912 = vst.msk [vmem:[#allocation2 + $0x40] sm:$0xf] %vm1895, %v1844
      %1913 = vst.msk [vmem:[#allocation2 + $0x44] sm:$0xf] %vm1895, %v1846
      %1914 = vst.msk [vmem:[#allocation2 + $0x48] sm:$0xf] %vm1895, %v1848
      %1915 = vst.msk [vmem:[#allocation2 + $0x4c] sm:$0xf] %vm1895, %v1850
      %1916 = vst.msk [vmem:[#allocation2 + $0x50] sm:$0xf] %vm1895, %v1852
      %1917 = vst.msk [vmem:[#allocation2 + $0x54] sm:$0xf] %vm1895, %v1854
      %1918 = vst.msk [vmem:[#allocation2 + $0x58] sm:$0xf] %vm1895, %v1856
      %1919 = vst.msk [vmem:[#allocation2 + $0x5c] sm:$0xf] %vm1895, %v1858
      %1920 = vst.msk [vmem:[#allocation2 + $0x60] sm:$0xf] %vm1895, %v1860
      %1921 = vst.msk [vmem:[#allocation2 + $0x64] sm:$0xf] %vm1895, %v1862
      %1922 = vst.msk [vmem:[#allocation2 + $0x68] sm:$0xf] %vm1895, %v1864
      %vm1923 = vcmask 166032
      %1924 = vst.msk [vmem:[#allocation2 + $0x6c] sm:$0x7] %vm1923, %v1866
      %v1925 = vld [vmem:[%s165 + $0x10] sm:$0xf]
      %v1926 = vld [vmem:[%s165 + $0x14] sm:$0xf]
      %v1927 = vld [vmem:[%s165 + $0x18] sm:$0xf]
      %v1928 = vld [vmem:[%s165 + $0x1c] sm:$0xf]
      %v1929 = vld [vmem:[%s165 + $0x20] sm:$0xf]
      %v1930 = vld [vmem:[%s165 + $0x24] sm:$0xf]
      %v1931 = vld [vmem:[%s165 + $0x28] sm:$0xf]
      %v1932 = vld [vmem:[%s165 + $0x2c] sm:$0xf]
      %v1933 = vld [vmem:[%s165 + $0x30] sm:$0xf]
      %v1934 = vld [vmem:[%s165 + $0x34] sm:$0xf]
      %v1935 = vld [vmem:[%s165 + $0x38] sm:$0xf]
      %v1936 = vld [vmem:[%s165 + $0x3c] sm:$0xf]
      %v1937 = vld [vmem:[%s165 + $0x40] sm:$0xf]
      %v1938 = vld [vmem:[%s165 + $0x44] sm:$0xf]
      %v1939 = vld [vmem:[%s165 + $0x48] sm:$0xf]
      %v1940 = vld [vmem:[%s165 + $0x4c] sm:$0xf]
      %v1941 = vld [vmem:[%s165 + $0x50] sm:$0xf]
      %v1942 = vld [vmem:[%s165 + $0x54] sm:$0xf]
      %v1943 = vld [vmem:[%s165 + $0x58] sm:$0xf]
      %v1944 = vld [vmem:[%s165 + $0x5c] sm:$0xf]
      %v1945 = vld [vmem:[%s165 + $0x60] sm:$0xf]
      %v1946 = vld [vmem:[%s165 + $0x64] sm:$0xf]
      %v1947 = vld [vmem:[%s165 + $0x68] sm:$0xf]
      %v1948 = vld [vmem:[%s165 + $0x6c] sm:$0xf]
      %v1949 = vld [vmem:[%s165 + $0x70] sm:$0xf]
      %v1950 = vld [vmem:[%s165 + $0x74] sm:$0xf]
      %v1951 = vld [vmem:[%s165 + $0x78] sm:$0xf]
      %v1952 = vld [vmem:[%s165 + $0x7c] sm:$0xf]
      %v1954 = vshrl.u32 %v1925, 16
      %v1956 = vrot.slane %v1954, 4
      %v1957 = vshll.u32 %v1925, 16
      %v1959 = vrot.slane %v1957, 5
      %v1960 = vor.u32 %v1956, %v1959
      %v1961 = vrot.slane %v1960, 4
      %v1963 = vshll.u32 %v1926, 16
      %v1965 = vrot.slane %v1963, 5
      %v1966 = vsel %vm261, %v1961, %v1965
      %v1967 = vshrl.u32 %v1926, 16
      %v1969 = vrot.slane %v1967, 4
      %v1970 = vor.u32 %v1969, %v1965
      %v1971 = vrot.slane %v1970, 4
      %v1973 = vshll.u32 %v1927, 16
      %v1975 = vrot.slane %v1973, 5
      %v1976 = vsel %vm261, %v1971, %v1975
      %v1977 = vshrl.u32 %v1927, 16
      %v1979 = vrot.slane %v1977, 4
      %v1980 = vor.u32 %v1979, %v1975
      %v1981 = vrot.slane %v1980, 4
      %v1983 = vshll.u32 %v1928, 16
      %v1985 = vrot.slane %v1983, 5
      %v1986 = vsel %vm261, %v1981, %v1985
      %v1987 = vshrl.u32 %v1928, 16
      %v1989 = vrot.slane %v1987, 4
      %v1990 = vor.u32 %v1989, %v1985
      %v1991 = vrot.slane %v1990, 4
      %v1993 = vshll.u32 %v1929, 16
      %v1995 = vrot.slane %v1993, 5
      %v1996 = vsel %vm261, %v1991, %v1995
      %v1997 = vshrl.u32 %v1929, 16
      %v1999 = vrot.slane %v1997, 4
      %v2000 = vor.u32 %v1999, %v1995
      %v2001 = vrot.slane %v2000, 4
      %v2003 = vshll.u32 %v1930, 16
      %v2005 = vrot.slane %v2003, 5
      %v2006 = vsel %vm261, %v2001, %v2005
      %v2007 = vshrl.u32 %v1930, 16
      %v2009 = vrot.slane %v2007, 4
      %v2010 = vor.u32 %v2009, %v2005
      %v2011 = vrot.slane %v2010, 4
      %v2013 = vshll.u32 %v1931, 16
      %v2015 = vrot.slane %v2013, 5
      %v2016 = vsel %vm261, %v2011, %v2015
      %v2017 = vshrl.u32 %v1931, 16
      %v2019 = vrot.slane %v2017, 4
      %v2020 = vor.u32 %v2019, %v2015
      %v2021 = vrot.slane %v2020, 4
      %v2023 = vshll.u32 %v1932, 16
      %v2025 = vrot.slane %v2023, 5
      %v2026 = vsel %vm261, %v2021, %v2025
      %v2027 = vshrl.u32 %v1932, 16
      %v2029 = vrot.slane %v2027, 4
      %v2030 = vor.u32 %v2029, %v2025
      %v2031 = vrot.slane %v2030, 4
      %v2033 = vshll.u32 %v1933, 16
      %v2035 = vrot.slane %v2033, 5
      %v2036 = vsel %vm261, %v2031, %v2035
      %v2037 = vshrl.u32 %v1933, 16
      %v2039 = vrot.slane %v2037, 4
      %v2040 = vor.u32 %v2039, %v2035
      %v2041 = vrot.slane %v2040, 4
      %v2043 = vshll.u32 %v1934, 16
      %v2045 = vrot.slane %v2043, 5
      %v2046 = vsel %vm261, %v2041, %v2045
      %v2047 = vshrl.u32 %v1934, 16
      %v2049 = vrot.slane %v2047, 4
      %v2050 = vor.u32 %v2049, %v2045
      %v2051 = vrot.slane %v2050, 4
      %v2053 = vshll.u32 %v1935, 16
      %v2055 = vrot.slane %v2053, 5
      %v2056 = vsel %vm261, %v2051, %v2055
      %v2057 = vshrl.u32 %v1935, 16
      %v2059 = vrot.slane %v2057, 4
      %v2060 = vor.u32 %v2059, %v2055
      %v2061 = vrot.slane %v2060, 4
      %v2063 = vshll.u32 %v1936, 16
      %v2065 = vrot.slane %v2063, 5
      %v2066 = vsel %vm261, %v2061, %v2065
      %v2067 = vshrl.u32 %v1936, 16
      %v2069 = vrot.slane %v2067, 4
      %v2070 = vor.u32 %v2069, %v2065
      %v2071 = vrot.slane %v2070, 4
      %v2073 = vshll.u32 %v1937, 16
      %v2075 = vrot.slane %v2073, 5
      %v2076 = vsel %vm261, %v2071, %v2075
      %v2077 = vshrl.u32 %v1937, 16
      %v2079 = vrot.slane %v2077, 4
      %v2080 = vor.u32 %v2079, %v2075
      %v2081 = vrot.slane %v2080, 4
      %v2083 = vshll.u32 %v1938, 16
      %v2085 = vrot.slane %v2083, 5
      %v2086 = vsel %vm261, %v2081, %v2085
      %v2087 = vshrl.u32 %v1938, 16
      %v2089 = vrot.slane %v2087, 4
      %v2090 = vor.u32 %v2089, %v2085
      %v2091 = vrot.slane %v2090, 4
      %v2093 = vshll.u32 %v1939, 16
      %v2095 = vrot.slane %v2093, 5
      %v2096 = vsel %vm261, %v2091, %v2095
      %v2097 = vshrl.u32 %v1939, 16
      %v2099 = vrot.slane %v2097, 4
      %v2100 = vor.u32 %v2099, %v2095
      %v2101 = vrot.slane %v2100, 4
      %v2103 = vshll.u32 %v1940, 16
      %v2105 = vrot.slane %v2103, 5
      %v2106 = vsel %vm261, %v2101, %v2105
      %v2107 = vshrl.u32 %v1940, 16
      %v2109 = vrot.slane %v2107, 4
      %v2110 = vor.u32 %v2109, %v2105
      %v2111 = vrot.slane %v2110, 4
      %v2113 = vshll.u32 %v1941, 16
      %v2115 = vrot.slane %v2113, 5
      %v2116 = vsel %vm261, %v2111, %v2115
      %v2117 = vshrl.u32 %v1941, 16
      %v2119 = vrot.slane %v2117, 4
      %v2120 = vor.u32 %v2119, %v2115
      %v2121 = vrot.slane %v2120, 4
      %v2123 = vshll.u32 %v1942, 16
      %v2125 = vrot.slane %v2123, 5
      %v2126 = vsel %vm261, %v2121, %v2125
      %v2127 = vshrl.u32 %v1942, 16
      %v2129 = vrot.slane %v2127, 4
      %v2130 = vor.u32 %v2129, %v2125
      %v2131 = vrot.slane %v2130, 4
      %v2133 = vshll.u32 %v1943, 16
      %v2135 = vrot.slane %v2133, 5
      %v2136 = vsel %vm261, %v2131, %v2135
      %v2137 = vshrl.u32 %v1943, 16
      %v2139 = vrot.slane %v2137, 4
      %v2140 = vor.u32 %v2139, %v2135
      %v2141 = vrot.slane %v2140, 4
      %v2143 = vshll.u32 %v1944, 16
      %v2145 = vrot.slane %v2143, 5
      %v2146 = vsel %vm261, %v2141, %v2145
      %v2147 = vshrl.u32 %v1944, 16
      %v2149 = vrot.slane %v2147, 4
      %v2150 = vor.u32 %v2149, %v2145
      %v2151 = vrot.slane %v2150, 4
      %v2153 = vshll.u32 %v1945, 16
      %v2155 = vrot.slane %v2153, 5
      %v2156 = vsel %vm261, %v2151, %v2155
      %v2157 = vshrl.u32 %v1945, 16
      %v2159 = vrot.slane %v2157, 4
      %v2160 = vor.u32 %v2159, %v2155
      %v2161 = vrot.slane %v2160, 4
      %v2163 = vshll.u32 %v1946, 16
      %v2165 = vrot.slane %v2163, 5
      %v2166 = vsel %vm261, %v2161, %v2165
      %v2167 = vshrl.u32 %v1946, 16
      %v2169 = vrot.slane %v2167, 4
      %v2170 = vor.u32 %v2169, %v2165
      %v2171 = vrot.slane %v2170, 4
      %v2173 = vshll.u32 %v1947, 16
      %v2175 = vrot.slane %v2173, 5
      %v2176 = vsel %vm261, %v2171, %v2175
      %v2177 = vshrl.u32 %v1947, 16
      %v2179 = vrot.slane %v2177, 4
      %v2180 = vor.u32 %v2179, %v2175
      %v2181 = vrot.slane %v2180, 4
      %v2183 = vshll.u32 %v1948, 16
      %v2185 = vrot.slane %v2183, 5
      %v2186 = vsel %vm261, %v2181, %v2185
      %v2187 = vshrl.u32 %v1948, 16
      %v2189 = vrot.slane %v2187, 4
      %v2190 = vor.u32 %v2189, %v2185
      %v2191 = vrot.slane %v2190, 4
      %v2193 = vshll.u32 %v1949, 16
      %v2195 = vrot.slane %v2193, 5
      %v2196 = vsel %vm261, %v2191, %v2195
      %v2197 = vshrl.u32 %v1949, 16
      %v2199 = vrot.slane %v2197, 4
      %v2200 = vor.u32 %v2199, %v2195
      %v2201 = vrot.slane %v2200, 4
      %v2203 = vshll.u32 %v1950, 16
      %v2205 = vrot.slane %v2203, 5
      %v2206 = vsel %vm261, %v2201, %v2205
      %v2207 = vshrl.u32 %v1950, 16
      %v2209 = vrot.slane %v2207, 4
      %v2210 = vor.u32 %v2209, %v2205
      %v2211 = vrot.slane %v2210, 4
      %v2213 = vshll.u32 %v1951, 16
      %v2215 = vrot.slane %v2213, 5
      %v2216 = vsel %vm261, %v2211, %v2215
      %v2217 = vshrl.u32 %v1951, 16
      %v2219 = vrot.slane %v2217, 4
      %v2220 = vor.u32 %v2219, %v2215
      %v2221 = vrot.slane %v2220, 4
      %v2223 = vshll.u32 %v1952, 16
      %v2225 = vrot.slane %v2223, 5
      %v2226 = vsel %vm261, %v2221, %v2225
      %v2227 = vshrl.u32 %v1952, 16
      %v2229 = vrot.slane %v2227, 4
      %v2230 = vor.u32 %v2229, %v2225
      %v2231 = vrot.slane %v2230, 4
      %2232 = vrot.lane.b32.xlu0 %v1966, 21
      %v2233 = vpop.permute.xlu0 %2232
      %2234 = vrot.lane.b32.xlu0 %v1976, 21
      %v2235 = vpop.permute.xlu0 %2234
      %2236 = vrot.lane.b32.xlu0 %v1986, 21
      %v2237 = vpop.permute.xlu0 %2236
      %2238 = vrot.lane.b32.xlu0 %v1996, 21
      %v2239 = vpop.permute.xlu0 %2238
      %2240 = vrot.lane.b32.xlu0 %v2006, 21
      %v2241 = vpop.permute.xlu0 %2240
      %2242 = vrot.lane.b32.xlu0 %v2016, 21
      %v2243 = vpop.permute.xlu0 %2242
      %2244 = vrot.lane.b32.xlu0 %v2026, 21
      %v2245 = vpop.permute.xlu0 %2244
      %2246 = vrot.lane.b32.xlu0 %v2036, 21
      %v2247 = vpop.permute.xlu0 %2246
      %2248 = vrot.lane.b32.xlu0 %v2046, 21
      %v2249 = vpop.permute.xlu0 %2248
      %2250 = vrot.lane.b32.xlu0 %v2056, 21
      %v2251 = vpop.permute.xlu0 %2250
      %2252 = vrot.lane.b32.xlu0 %v2066, 21
      %v2253 = vpop.permute.xlu0 %2252
      %2254 = vrot.lane.b32.xlu0 %v2076, 21
      %v2255 = vpop.permute.xlu0 %2254
      %2256 = vrot.lane.b32.xlu0 %v2086, 21
      %v2257 = vpop.permute.xlu0 %2256
      %2258 = vrot.lane.b32.xlu0 %v2096, 21
      %v2259 = vpop.permute.xlu0 %2258
      %2260 = vrot.lane.b32.xlu0 %v2106, 21
      %v2261 = vpop.permute.xlu0 %2260
      %2262 = vrot.lane.b32.xlu0 %v2116, 21
      %v2263 = vpop.permute.xlu0 %2262
      %2264 = vrot.lane.b32.xlu0 %v2126, 21
      %v2265 = vpop.permute.xlu0 %2264
      %2266 = vrot.lane.b32.xlu0 %v2136, 21
      %v2267 = vpop.permute.xlu0 %2266
      %2268 = vrot.lane.b32.xlu0 %v2146, 21
      %v2269 = vpop.permute.xlu0 %2268
      %2270 = vrot.lane.b32.xlu0 %v2156, 21
      %v2271 = vpop.permute.xlu0 %2270
      %2272 = vrot.lane.b32.xlu0 %v2166, 21
      %v2273 = vpop.permute.xlu0 %2272
      %2274 = vrot.lane.b32.xlu0 %v2176, 21
      %v2275 = vpop.permute.xlu0 %2274
      %2276 = vrot.lane.b32.xlu0 %v2186, 21
      %v2277 = vpop.permute.xlu0 %2276
      %2278 = vrot.lane.b32.xlu0 %v2196, 21
      %v2279 = vpop.permute.xlu0 %2278
      %2280 = vrot.lane.b32.xlu0 %v2206, 21
      %v2281 = vpop.permute.xlu0 %2280
      %2282 = vrot.lane.b32.xlu0 %v2216, 21
      %v2283 = vpop.permute.xlu0 %2282
      %2284 = vrot.lane.b32.xlu0 %v2226, 21
      %v2285 = vpop.permute.xlu0 %2284
      %2286 = vrot.lane.b32.xlu0 %v2231, 21
      %v2287 = vpop.permute.xlu0 %2286
      %vm2316 = vcmask 191656
      %2317 = vst.msk [vmem:[#allocation2] sm:$0xf] %vm2316, %v2233
      %2318 = vst.msk [vmem:[#allocation2 + $0x4] sm:$0xf] %vm2316, %v2235
      %2319 = vst.msk [vmem:[#allocation2 + $0x8] sm:$0xf] %vm2316, %v2237
      %2320 = vst.msk [vmem:[#allocation2 + $0xc] sm:$0xf] %vm2316, %v2239
      %2321 = vst.msk [vmem:[#allocation2 + $0x10] sm:$0xf] %vm2316, %v2241
      %2322 = vst.msk [vmem:[#allocation2 + $0x14] sm:$0xf] %vm2316, %v2243
      %2323 = vst.msk [vmem:[#allocation2 + $0x18] sm:$0xf] %vm2316, %v2245
      %2324 = vst.msk [vmem:[#allocation2 + $0x1c] sm:$0xf] %vm2316, %v2247
      %2325 = vst.msk [vmem:[#allocation2 + $0x20] sm:$0xf] %vm2316, %v2249
      %2326 = vst.msk [vmem:[#allocation2 + $0x24] sm:$0xf] %vm2316, %v2251
      %2327 = vst.msk [vmem:[#allocation2 + $0x28] sm:$0xf] %vm2316, %v2253
      %2328 = vst.msk [vmem:[#allocation2 + $0x2c] sm:$0xf] %vm2316, %v2255
      %2329 = vst.msk [vmem:[#allocation2 + $0x30] sm:$0xf] %vm2316, %v2257
      %2330 = vst.msk [vmem:[#allocation2 + $0x34] sm:$0xf] %vm2316, %v2259
      %2331 = vst.msk [vmem:[#allocation2 + $0x38] sm:$0xf] %vm2316, %v2261
      %2332 = vst.msk [vmem:[#allocation2 + $0x3c] sm:$0xf] %vm2316, %v2263
      %2333 = vst.msk [vmem:[#allocation2 + $0x40] sm:$0xf] %vm2316, %v2265
      %2334 = vst.msk [vmem:[#allocation2 + $0x44] sm:$0xf] %vm2316, %v2267
      %2335 = vst.msk [vmem:[#allocation2 + $0x48] sm:$0xf] %vm2316, %v2269
      %2336 = vst.msk [vmem:[#allocation2 + $0x4c] sm:$0xf] %vm2316, %v2271
      %2337 = vst.msk [vmem:[#allocation2 + $0x50] sm:$0xf] %vm2316, %v2273
      %2338 = vst.msk [vmem:[#allocation2 + $0x54] sm:$0xf] %vm2316, %v2275
      %2339 = vst.msk [vmem:[#allocation2 + $0x58] sm:$0xf] %vm2316, %v2277
      %2340 = vst.msk [vmem:[#allocation2 + $0x5c] sm:$0xf] %vm2316, %v2279
      %2341 = vst.msk [vmem:[#allocation2 + $0x60] sm:$0xf] %vm2316, %v2281
      %2342 = vst.msk [vmem:[#allocation2 + $0x64] sm:$0xf] %vm2316, %v2283
      %2343 = vst.msk [vmem:[#allocation2 + $0x68] sm:$0xf] %vm2316, %v2285
      %vm2344 = vcmask 190632
      %2345 = vst.msk [vmem:[#allocation2 + $0x6c] sm:$0x7] %vm2344, %v2287
      %v2346 = vld [vmem:[%s165 + $0x10] sm:$0xe]
      %v2347 = vld [vmem:[%s165 + $0x14] sm:$0xf]
      %v2348 = vld [vmem:[%s165 + $0x18] sm:$0xf]
      %v2349 = vld [vmem:[%s165 + $0x1c] sm:$0xf]
      %v2350 = vld [vmem:[%s165 + $0x20] sm:$0xf]
      %v2351 = vld [vmem:[%s165 + $0x24] sm:$0xf]
      %v2352 = vld [vmem:[%s165 + $0x28] sm:$0xf]
      %v2353 = vld [vmem:[%s165 + $0x2c] sm:$0xf]
      %v2354 = vld [vmem:[%s165 + $0x30] sm:$0xf]
      %v2355 = vld [vmem:[%s165 + $0x34] sm:$0xf]
      %v2356 = vld [vmem:[%s165 + $0x38] sm:$0xf]
      %v2357 = vld [vmem:[%s165 + $0x3c] sm:$0xf]
      %v2358 = vld [vmem:[%s165 + $0x40] sm:$0xf]
      %v2359 = vld [vmem:[%s165 + $0x44] sm:$0xf]
      %v2360 = vld [vmem:[%s165 + $0x48] sm:$0xf]
      %v2361 = vld [vmem:[%s165 + $0x4c] sm:$0xf]
      %v2362 = vld [vmem:[%s165 + $0x50] sm:$0xf]
      %v2363 = vld [vmem:[%s165 + $0x54] sm:$0xf]
      %v2364 = vld [vmem:[%s165 + $0x58] sm:$0xf]
      %v2365 = vld [vmem:[%s165 + $0x5c] sm:$0xf]
      %v2366 = vld [vmem:[%s165 + $0x60] sm:$0xf]
      %v2367 = vld [vmem:[%s165 + $0x64] sm:$0xf]
      %v2368 = vld [vmem:[%s165 + $0x68] sm:$0xf]
      %v2369 = vld [vmem:[%s165 + $0x6c] sm:$0xf]
      %v2370 = vld [vmem:[%s165 + $0x70] sm:$0xf]
      %v2371 = vld [vmem:[%s165 + $0x74] sm:$0xf]
      %v2372 = vld [vmem:[%s165 + $0x78] sm:$0xf]
      %v2373 = vld [vmem:[%s165 + $0x7c] sm:$0xf]
      %v2402 = vrot.slane %v2346, 5
      %v2403 = vrot.slane %v2402, 4
      %v2404 = vrot.slane %v2347, 5
      %v2405 = vsel %vm713, %v2403, %v2404
      %v2406 = vrot.slane %v2404, 4
      %v2407 = vrot.slane %v2348, 5
      %v2408 = vsel %vm713, %v2406, %v2407
      %v2409 = vrot.slane %v2407, 4
      %v2410 = vrot.slane %v2349, 5
      %v2411 = vsel %vm713, %v2409, %v2410
      %v2412 = vrot.slane %v2410, 4
      %v2413 = vrot.slane %v2350, 5
      %v2414 = vsel %vm713, %v2412, %v2413
      %v2415 = vrot.slane %v2413, 4
      %v2416 = vrot.slane %v2351, 5
      %v2417 = vsel %vm713, %v2415, %v2416
      %v2418 = vrot.slane %v2416, 4
      %v2419 = vrot.slane %v2352, 5
      %v2420 = vsel %vm713, %v2418, %v2419
      %v2421 = vrot.slane %v2419, 4
      %v2422 = vrot.slane %v2353, 5
      %v2423 = vsel %vm713, %v2421, %v2422
      %v2424 = vrot.slane %v2422, 4
      %v2425 = vrot.slane %v2354, 5
      %v2426 = vsel %vm713, %v2424, %v2425
      %v2427 = vrot.slane %v2425, 4
      %v2428 = vrot.slane %v2355, 5
      %v2429 = vsel %vm713, %v2427, %v2428
      %v2430 = vrot.slane %v2428, 4
      %v2431 = vrot.slane %v2356, 5
      %v2432 = vsel %vm713, %v2430, %v2431
      %v2433 = vrot.slane %v2431, 4
      %v2434 = vrot.slane %v2357, 5
      %v2435 = vsel %vm713, %v2433, %v2434
      %v2436 = vrot.slane %v2434, 4
      %v2437 = vrot.slane %v2358, 5
      %v2438 = vsel %vm713, %v2436, %v2437
      %v2439 = vrot.slane %v2437, 4
      %v2440 = vrot.slane %v2359, 5
      %v2441 = vsel %vm713, %v2439, %v2440
      %v2442 = vrot.slane %v2440, 4
      %v2443 = vrot.slane %v2360, 5
      %v2444 = vsel %vm713, %v2442, %v2443
      %v2445 = vrot.slane %v2443, 4
      %v2446 = vrot.slane %v2361, 5
      %v2447 = vsel %vm713, %v2445, %v2446
      %v2448 = vrot.slane %v2446, 4
      %v2449 = vrot.slane %v2362, 5
      %v2450 = vsel %vm713, %v2448, %v2449
      %v2451 = vrot.slane %v2449, 4
      %v2452 = vrot.slane %v2363, 5
      %v2453 = vsel %vm713, %v2451, %v2452
      %v2454 = vrot.slane %v2452, 4
      %v2455 = vrot.slane %v2364, 5
      %v2456 = vsel %vm713, %v2454, %v2455
      %v2457 = vrot.slane %v2455, 4
      %v2458 = vrot.slane %v2365, 5
      %v2459 = vsel %vm713, %v2457, %v2458
      %v2460 = vrot.slane %v2458, 4
      %v2461 = vrot.slane %v2366, 5
      %v2462 = vsel %vm713, %v2460, %v2461
      %v2463 = vrot.slane %v2461, 4
      %v2464 = vrot.slane %v2367, 5
      %v2465 = vsel %vm713, %v2463, %v2464
      %v2466 = vrot.slane %v2464, 4
      %v2467 = vrot.slane %v2368, 5
      %v2468 = vsel %vm713, %v2466, %v2467
      %v2469 = vrot.slane %v2467, 4
      %v2470 = vrot.slane %v2369, 5
      %v2471 = vsel %vm713, %v2469, %v2470
      %v2472 = vrot.slane %v2470, 4
      %v2473 = vrot.slane %v2370, 5
      %v2474 = vsel %vm713, %v2472, %v2473
      %v2475 = vrot.slane %v2473, 4
      %v2476 = vrot.slane %v2371, 5
      %v2477 = vsel %vm713, %v2475, %v2476
      %v2478 = vrot.slane %v2476, 4
      %v2479 = vrot.slane %v2372, 5
      %v2480 = vsel %vm713, %v2478, %v2479
      %v2481 = vrot.slane %v2479, 4
      %v2482 = vrot.slane %v2373, 5
      %v2483 = vsel %vm713, %v2481, %v2482
      %v2484 = vrot.slane %v2482, 4
      %2485 = vrot.lane.b32.xlu0 %v2405, 24
      %v2486 = vpop.permute.xlu0 %2485
      %2487 = vrot.lane.b32.xlu0 %v2408, 24
      %v2488 = vpop.permute.xlu0 %2487
      %2489 = vrot.lane.b32.xlu0 %v2411, 24
      %v2490 = vpop.permute.xlu0 %2489
      %2491 = vrot.lane.b32.xlu0 %v2414, 24
      %v2492 = vpop.permute.xlu0 %2491
      %2493 = vrot.lane.b32.xlu0 %v2417, 24
      %v2494 = vpop.permute.xlu0 %2493
      %2495 = vrot.lane.b32.xlu0 %v2420, 24
      %v2496 = vpop.permute.xlu0 %2495
      %2497 = vrot.lane.b32.xlu0 %v2423, 24
      %v2498 = vpop.permute.xlu0 %2497
      %2499 = vrot.lane.b32.xlu0 %v2426, 24
      %v2500 = vpop.permute.xlu0 %2499
      %2501 = vrot.lane.b32.xlu0 %v2429, 24
      %v2502 = vpop.permute.xlu0 %2501
      %2503 = vrot.lane.b32.xlu0 %v2432, 24
      %v2504 = vpop.permute.xlu0 %2503
      %2505 = vrot.lane.b32.xlu0 %v2435, 24
      %v2506 = vpop.permute.xlu0 %2505
      %2507 = vrot.lane.b32.xlu0 %v2438, 24
      %v2508 = vpop.permute.xlu0 %2507
      %2509 = vrot.lane.b32.xlu0 %v2441, 24
      %v2510 = vpop.permute.xlu0 %2509
      %2511 = vrot.lane.b32.xlu0 %v2444, 24
      %v2512 = vpop.permute.xlu0 %2511
      %2513 = vrot.lane.b32.xlu0 %v2447, 24
      %v2514 = vpop.permute.xlu0 %2513
      %2515 = vrot.lane.b32.xlu0 %v2450, 24
      %v2516 = vpop.permute.xlu0 %2515
      %2517 = vrot.lane.b32.xlu0 %v2453, 24
      %v2518 = vpop.permute.xlu0 %2517
      %2519 = vrot.lane.b32.xlu0 %v2456, 24
      %v2520 = vpop.permute.xlu0 %2519
      %2521 = vrot.lane.b32.xlu0 %v2459, 24
      %v2522 = vpop.permute.xlu0 %2521
      %2523 = vrot.lane.b32.xlu0 %v2462, 24
      %v2524 = vpop.permute.xlu0 %2523
      %2525 = vrot.lane.b32.xlu0 %v2465, 24
      %v2526 = vpop.permute.xlu0 %2525
      %2527 = vrot.lane.b32.xlu0 %v2468, 24
      %v2528 = vpop.permute.xlu0 %2527
      %2529 = vrot.lane.b32.xlu0 %v2471, 24
      %v2530 = vpop.permute.xlu0 %2529
      %2531 = vrot.lane.b32.xlu0 %v2474, 24
      %v2532 = vpop.permute.xlu0 %2531
      %2533 = vrot.lane.b32.xlu0 %v2477, 24
      %v2534 = vpop.permute.xlu0 %2533
      %2535 = vrot.lane.b32.xlu0 %v2480, 24
      %v2536 = vpop.permute.xlu0 %2535
      %2537 = vrot.lane.b32.xlu0 %v2483, 24
      %v2538 = vpop.permute.xlu0 %2537
      %2539 = vrot.lane.b32.xlu0 %v2484, 24
      %v2540 = vpop.permute.xlu0 %2539
      %vm2569 = vcmask 216256
      %2570 = vst.msk [vmem:[#allocation2] sm:$0xf] %vm2569, %v2486
      %2571 = vst.msk [vmem:[#allocation2 + $0x4] sm:$0xf] %vm2569, %v2488
      %2572 = vst.msk [vmem:[#allocation2 + $0x8] sm:$0xf] %vm2569, %v2490
      %2573 = vst.msk [vmem:[#allocation2 + $0xc] sm:$0xf] %vm2569, %v2492
      %2574 = vst.msk [vmem:[#allocation2 + $0x10] sm:$0xf] %vm2569, %v2494
      %2575 = vst.msk [vmem:[#allocation2 + $0x14] sm:$0xf] %vm2569, %v2496
      %2576 = vst.msk [vmem:[#allocation2 + $0x18] sm:$0xf] %vm2569, %v2498
      %2577 = vst.msk [vmem:[#allocation2 + $0x1c] sm:$0xf] %vm2569, %v2500
      %2578 = vst.msk [vmem:[#allocation2 + $0x20] sm:$0xf] %vm2569, %v2502
      %2579 = vst.msk [vmem:[#allocation2 + $0x24] sm:$0xf] %vm2569, %v2504
      %2580 = vst.msk [vmem:[#allocation2 + $0x28] sm:$0xf] %vm2569, %v2506
      %2581 = vst.msk [vmem:[#allocation2 + $0x2c] sm:$0xf] %vm2569, %v2508
      %2582 = vst.msk [vmem:[#allocation2 + $0x30] sm:$0xf] %vm2569, %v2510
      %2583 = vst.msk [vmem:[#allocation2 + $0x34] sm:$0xf] %vm2569, %v2512
      %2584 = vst.msk [vmem:[#allocation2 + $0x38] sm:$0xf] %vm2569, %v2514
      %2585 = vst.msk [vmem:[#allocation2 + $0x3c] sm:$0xf] %vm2569, %v2516
      %2586 = vst.msk [vmem:[#allocation2 + $0x40] sm:$0xf] %vm2569, %v2518
      %2587 = vst.msk [vmem:[#allocation2 + $0x44] sm:$0xf] %vm2569, %v2520
      %2588 = vst.msk [vmem:[#allocation2 + $0x48] sm:$0xf] %vm2569, %v2522
      %2589 = vst.msk [vmem:[#allocation2 + $0x4c] sm:$0xf] %vm2569, %v2524
      %2590 = vst.msk [vmem:[#allocation2 + $0x50] sm:$0xf] %vm2569, %v2526
      %2591 = vst.msk [vmem:[#allocation2 + $0x54] sm:$0xf] %vm2569, %v2528
      %2592 = vst.msk [vmem:[#allocation2 + $0x58] sm:$0xf] %vm2569, %v2530
      %2593 = vst.msk [vmem:[#allocation2 + $0x5c] sm:$0xf] %vm2569, %v2532
      %2594 = vst.msk [vmem:[#allocation2 + $0x60] sm:$0xf] %vm2569, %v2534
      %2595 = vst.msk [vmem:[#allocation2 + $0x64] sm:$0xf] %vm2569, %v2536
      %2596 = vst.msk [vmem:[#allocation2 + $0x68] sm:$0xf] %vm2569, %v2538
      %vm2597 = vcmask 215232
      %2598 = vst.msk [vmem:[#allocation2 + $0x6c] sm:$0x7] %vm2597, %v2540
      %v2599 = vld [vmem:[#allocation2] sm:$0xf]
      %v2600 = vld [vmem:[#allocation2 + $0x4] sm:$0xf]
      %v2601 = vld [vmem:[#allocation2 + $0x8] sm:$0xf]
      %v2602 = vld [vmem:[#allocation2 + $0xc] sm:$0xf]
      %v2603 = vld [vmem:[#allocation2 + $0x10] sm:$0xf]
      %v2604 = vld [vmem:[#allocation2 + $0x14] sm:$0xf]
      %v2605 = vld [vmem:[#allocation2 + $0x18] sm:$0xf]
      %v2606 = vld [vmem:[#allocation2 + $0x1c] sm:$0xf]
      %v2607 = vld [vmem:[#allocation2 + $0x20] sm:$0xf]
      %v2608 = vld [vmem:[#allocation2 + $0x24] sm:$0xf]
      %v2609 = vld [vmem:[#allocation2 + $0x28] sm:$0xf]
      %v2610 = vld [vmem:[#allocation2 + $0x2c] sm:$0xf]
      %v2611 = vld [vmem:[#allocation2 + $0x30] sm:$0xf]
      %v2612 = vld [vmem:[#allocation2 + $0x34] sm:$0xf]
      %v2613 = vld [vmem:[#allocation2 + $0x38] sm:$0xf]
      %v2614 = vld [vmem:[#allocation2 + $0x3c] sm:$0xf]
      %v2615 = vld [vmem:[#allocation2 + $0x40] sm:$0xf]
      %v2616 = vld [vmem:[#allocation2 + $0x44] sm:$0xf]
      %v2617 = vld [vmem:[#allocation2 + $0x48] sm:$0xf]
      %v2618 = vld [vmem:[#allocation2 + $0x4c] sm:$0xf]
      %v2619 = vld [vmem:[#allocation2 + $0x50] sm:$0xf]
      %v2620 = vld [vmem:[#allocation2 + $0x54] sm:$0xf]
      %v2621 = vld [vmem:[#allocation2 + $0x58] sm:$0xf]
      %v2622 = vld [vmem:[#allocation2 + $0x5c] sm:$0xf]
      %v2623 = vld [vmem:[#allocation2 + $0x60] sm:$0xf]
      %v2624 = vld [vmem:[#allocation2 + $0x64] sm:$0xf]
      %v2625 = vld [vmem:[#allocation2 + $0x68] sm:$0xf]
      %v2626 = vld [vmem:[#allocation2 + $0x6c] sm:$0x7]
      %v2627 = vld [vmem:[%s1] sm:$0xf]
      %v2628 = vld [vmem:[%s1 + $0x4] sm:$0xf]
      %v2629 = vld [vmem:[%s1 + $0x8] sm:$0xf]
      %v2630 = vld [vmem:[%s1 + $0xc] sm:$0x3]
      %v2632 = vperm.slane %v172, 0
      %v2662 = vunpack.c.l.b16 %v2599
      %v2663 = vunpack.c.l.b16 %v2600
      %v2664 = vunpack.c.l.b16 %v2601
      %v2665 = vunpack.c.l.b16 %v2602
      %v2666 = vunpack.c.l.b16 %v2603
      %v2667 = vunpack.c.l.b16 %v2604
      %v2668 = vunpack.c.l.b16 %v2605
      %v2669 = vunpack.c.l.b16 %v2606
      %v2670 = vunpack.c.l.b16 %v2607
      %v2671 = vunpack.c.l.b16 %v2608
      %v2672 = vunpack.c.l.b16 %v2609
      %v2673 = vunpack.c.l.b16 %v2610
      %v2674 = vunpack.c.l.b16 %v2611
      %v2675 = vunpack.c.l.b16 %v2612
      %v2676 = vunpack.c.l.b16 %v2613
      %v2677 = vunpack.c.l.b16 %v2614
      %v2678 = vunpack.c.l.b16 %v2615
      %v2679 = vunpack.c.l.b16 %v2616
      %v2680 = vunpack.c.l.b16 %v2617
      %v2681 = vunpack.c.l.b16 %v2618
      %v2682 = vunpack.c.l.b16 %v2619
      %v2683 = vunpack.c.l.b16 %v2620
      %v2684 = vunpack.c.l.b16 %v2621
      %v2685 = vunpack.c.l.b16 %v2622
      %v2686 = vunpack.c.l.b16 %v2623
      %v2687 = vunpack.c.l.b16 %v2624
      %v2688 = vunpack.c.l.b16 %v2625
      %v2689 = vunpack.c.l.b16 %v2626
      %v2690 = vpack.c.b16 %v2663, %v2662
      %v2691 = vpack.c.b16 %v2665, %v2664
      %v2692 = vpack.c.b16 %v2667, %v2666
      %v2693 = vpack.c.b16 %v2669, %v2668
      %v2694 = vpack.c.b16 %v2671, %v2670
      %v2695 = vpack.c.b16 %v2673, %v2672
      %v2696 = vpack.c.b16 %v2675, %v2674
      %v2697 = vpack.c.b16 %v2677, %v2676
      %v2698 = vpack.c.b16 %v2679, %v2678
      %v2699 = vpack.c.b16 %v2681, %v2680
      %v2700 = vpack.c.b16 %v2683, %v2682
      %v2701 = vpack.c.b16 %v2685, %v2684
      %v2702 = vpack.c.b16 %v2687, %v2686
      %v2703 = vpack.c.b16 %v2689, %v2688
      %v2708 = vunpack.c.l.b16 %v2627
      %v2709 = vunpack.c.l.b16 %v2628
      %v2710 = vunpack.c.l.b16 %v2629
      %v2711 = vunpack.c.l.b16 %v2630
      %v2712 = vpack.c.b16 %v2709, %v2708
      %v2713 = vpack.c.b16 %v2711, %v2710
      %vm2715 = vcmask 220160
      %v2717 = vsel %vm2715, %v2690, 0
      %v2720 = vsel %vm2715, %v2691, 0
      %v2723 = vsel %vm2715, %v2692, 0
      %v2726 = vsel %vm2715, %v2693, 0
      %v2729 = vsel %vm2715, %v2694, 0
      %v2732 = vsel %vm2715, %v2695, 0
      %v2735 = vsel %vm2715, %v2696, 0
      %v2738 = vsel %vm2715, %v2697, 0
      %v2741 = vsel %vm2715, %v2698, 0
      %v2744 = vsel %vm2715, %v2699, 0
      %v2747 = vsel %vm2715, %v2700, 0
      %v2750 = vsel %vm2715, %v2701, 0
      %v2753 = vsel %vm2715, %v2702, 0
      %v2756 = vsel %vm2715, %v2703, 0
      %vm2758 = vcmask 1044480
      %vm2759 = vcmask 1045504
      %v2760 = vsel %vm2758, 4294967295, 65535
      %v2761 = vsel %vm2759, %v2760, 0
      %v2763 = vand.u32 %v2713, %v2761
      %2765 = vmatpush.bf16.msra.mxu0 0
      %2766 = vmatpush.bf16.msra.mxu0 0
      %2767 = vmatpush.bf16.msra.mxu0 0
      %2768 = vmatpush.bf16.msra.mxu0 0
      %2769 = vmatpush.bf16.msra.mxu0 0
      %2770 = vmatpush.bf16.msra.mxu0 0
      %2771 = vmatpush.bf16.msra.mxu0 %v2763
      %2772 = vmatpush.bf16.msra.mxu0 %v2712
      %2773 = vmatmul.bf16.gmra.mxu0 %v2717
      %v2774 = vpop.f32.mrf.mxu0
      %v2775 = vadd.f32 %v2632, %v2774
      %v2776 = vpop.f32.mrf.mxu0
      %v2777 = vadd.f32 %v2632, %v2776
      %2778 = vmatmul.bf16.gmra.mxu0 %v2720
      %v2779 = vpop.f32.mrf.mxu0
      %v2780 = vadd.f32 %v2632, %v2779
      %v2781 = vpop.f32.mrf.mxu0
      %v2782 = vadd.f32 %v2632, %v2781
      %2783 = vmatmul.bf16.gmra.mxu0 %v2723
      %v2784 = vpop.f32.mrf.mxu0
      %v2785 = vadd.f32 %v2632, %v2784
      %v2786 = vpop.f32.mrf.mxu0
      %v2787 = vadd.f32 %v2632, %v2786
      %2788 = vmatmul.bf16.gmra.mxu0 %v2726
      %v2789 = vpop.f32.mrf.mxu0
      %v2790 = vadd.f32 %v2632, %v2789
      %v2791 = vpop.f32.mrf.mxu0
      %v2792 = vadd.f32 %v2632, %v2791
      %2793 = vmatmul.bf16.gmra.mxu0 %v2729
      %v2794 = vpop.f32.mrf.mxu0
      %v2795 = vadd.f32 %v2632, %v2794
      %v2796 = vpop.f32.mrf.mxu0
      %v2797 = vadd.f32 %v2632, %v2796
      %2798 = vmatmul.bf16.gmra.mxu0 %v2732
      %v2799 = vpop.f32.mrf.mxu0
      %v2800 = vadd.f32 %v2632, %v2799
      %v2801 = vpop.f32.mrf.mxu0
      %v2802 = vadd.f32 %v2632, %v2801
      %2803 = vmatmul.bf16.gmra.mxu0 %v2735
      %v2804 = vpop.f32.mrf.mxu0
      %v2805 = vadd.f32 %v2632, %v2804
      %v2806 = vpop.f32.mrf.mxu0
      %v2807 = vadd.f32 %v2632, %v2806
      %2808 = vmatmul.bf16.gmra.mxu0 %v2738
      %v2809 = vpop.f32.mrf.mxu0
      %v2810 = vadd.f32 %v2632, %v2809
      %v2811 = vpop.f32.mrf.mxu0
      %v2812 = vadd.f32 %v2632, %v2811
      %2813 = vmatmul.bf16.gmra.mxu0 %v2741
      %v2814 = vpop.f32.mrf.mxu0
      %v2815 = vadd.f32 %v2632, %v2814
      %v2816 = vpop.f32.mrf.mxu0
      %v2817 = vadd.f32 %v2632, %v2816
      %2818 = vmatmul.bf16.gmra.mxu0 %v2744
      %v2819 = vpop.f32.mrf.mxu0
      %v2820 = vadd.f32 %v2632, %v2819
      %v2821 = vpop.f32.mrf.mxu0
      %v2822 = vadd.f32 %v2632, %v2821
      %2823 = vmatmul.bf16.gmra.mxu0 %v2747
      %v2824 = vpop.f32.mrf.mxu0
      %v2825 = vadd.f32 %v2632, %v2824
      %v2826 = vpop.f32.mrf.mxu0
      %v2827 = vadd.f32 %v2632, %v2826
      %2828 = vmatmul.bf16.gmra.mxu0 %v2750
      %v2829 = vpop.f32.mrf.mxu0
      %v2830 = vadd.f32 %v2632, %v2829
      %v2831 = vpop.f32.mrf.mxu0
      %v2832 = vadd.f32 %v2632, %v2831
      %2833 = vmatmul.bf16.gmra.mxu0 %v2753
      %v2834 = vpop.f32.mrf.mxu0
      %v2835 = vadd.f32 %v2632, %v2834
      %v2836 = vpop.f32.mrf.mxu0
      %v2837 = vadd.f32 %v2632, %v2836
      %2838 = vmatmul.bf16.gmra.mxu0 %v2756
      %v2839 = vpop.f32.mrf.mxu0
      %v2840 = vadd.f32 %v2632, %v2839
      %v2841 = vpop.f32.mrf.mxu0
      %v2842 = vadd.f32 %v2632, %v2841
      %2843 = vdwg.mxu0
      %v2844 = vmax.f32 %v2775, 0.0
      %v2845 = vmax.f32 %v2777, 0.0
      %v2846 = vmax.f32 %v2780, 0.0
      %v2847 = vmax.f32 %v2782, 0.0
      %v2848 = vmax.f32 %v2785, 0.0
      %v2849 = vmax.f32 %v2787, 0.0
      %v2850 = vmax.f32 %v2790, 0.0
      %v2851 = vmax.f32 %v2792, 0.0
      %v2852 = vmax.f32 %v2795, 0.0
      %v2853 = vmax.f32 %v2797, 0.0
      %v2854 = vmax.f32 %v2800, 0.0
      %v2855 = vmax.f32 %v2802, 0.0
      %v2856 = vmax.f32 %v2805, 0.0
      %v2857 = vmax.f32 %v2807, 0.0
      %v2858 = vmax.f32 %v2810, 0.0
      %v2859 = vmax.f32 %v2812, 0.0
      %v2860 = vmax.f32 %v2815, 0.0
      %v2861 = vmax.f32 %v2817, 0.0
      %v2862 = vmax.f32 %v2820, 0.0
      %v2863 = vmax.f32 %v2822, 0.0
      %v2864 = vmax.f32 %v2825, 0.0
      %v2865 = vmax.f32 %v2827, 0.0
      %v2866 = vmax.f32 %v2830, 0.0
      %v2867 = vmax.f32 %v2832, 0.0
      %v2868 = vmax.f32 %v2835, 0.0
      %v2869 = vmax.f32 %v2837, 0.0
      %v2870 = vmax.f32 %v2840, 0.0
      %v2871 = vmax.f32 %v2842, 0.0
      %vm2872 = vcmask 261120
      %2873 = vst.msk [vmem:[#allocation3] sm:$0xff] %vm2872, %v2844
      %2874 = vst.msk [vmem:[#allocation3 + $0x8] sm:$0xff] %vm2872, %v2845
      %2875 = vst.msk [vmem:[#allocation3 + $0x10] sm:$0xff] %vm2872, %v2846
      %2876 = vst.msk [vmem:[#allocation3 + $0x18] sm:$0xff] %vm2872, %v2847
      %2877 = vst.msk [vmem:[#allocation3 + $0x20] sm:$0xff] %vm2872, %v2848
      %2878 = vst.msk [vmem:[#allocation3 + $0x28] sm:$0xff] %vm2872, %v2849
      %2879 = vst.msk [vmem:[#allocation3 + $0x30] sm:$0xff] %vm2872, %v2850
      %2880 = vst.msk [vmem:[#allocation3 + $0x38] sm:$0xff] %vm2872, %v2851
      %2881 = vst.msk [vmem:[#allocation3 + $0x40] sm:$0xff] %vm2872, %v2852
      %2882 = vst.msk [vmem:[#allocation3 + $0x48] sm:$0xff] %vm2872, %v2853
      %2883 = vst.msk [vmem:[#allocation3 + $0x50] sm:$0xff] %vm2872, %v2854
      %2884 = vst.msk [vmem:[#allocation3 + $0x58] sm:$0xff] %vm2872, %v2855
      %2885 = vst.msk [vmem:[#allocation3 + $0x60] sm:$0xff] %vm2872, %v2856
      %2886 = vst.msk [vmem:[#allocation3 + $0x68] sm:$0xff] %vm2872, %v2857
      %2887 = vst.msk [vmem:[#allocation3 + $0x70] sm:$0xff] %vm2872, %v2858
      %2888 = vst.msk [vmem:[#allocation3 + $0x78] sm:$0xff] %vm2872, %v2859
      %2889 = vst.msk [vmem:[#allocation3 + $0x80] sm:$0xff] %vm2872, %v2860
      %2890 = vst.msk [vmem:[#allocation3 + $0x88] sm:$0xff] %vm2872, %v2861
      %2891 = vst.msk [vmem:[#allocation3 + $0x90] sm:$0xff] %vm2872, %v2862
      %2892 = vst.msk [vmem:[#allocation3 + $0x98] sm:$0xff] %vm2872, %v2863
      %2893 = vst.msk [vmem:[#allocation3 + $0xa0] sm:$0xff] %vm2872, %v2864
      %2894 = vst.msk [vmem:[#allocation3 + $0xa8] sm:$0xff] %vm2872, %v2865
      %2895 = vst.msk [vmem:[#allocation3 + $0xb0] sm:$0xff] %vm2872, %v2866
      %2896 = vst.msk [vmem:[#allocation3 + $0xb8] sm:$0xff] %vm2872, %v2867
      %2897 = vst.msk [vmem:[#allocation3 + $0xc0] sm:$0xff] %vm2872, %v2868
      %2898 = vst.msk [vmem:[#allocation3 + $0xc8] sm:$0xff] %vm2872, %v2869
      %2899 = vst.msk [vmem:[#allocation3 + $0xd0] sm:$0xff] %vm2872, %v2870
      %vm2900 = vcmask 259072
      %2901 = vst.msk [vmem:[#allocation3 + $0xd8] sm:$0x3f] %vm2900, %v2871
      %v2902 = vld [vmem:[#allocation3] ss:$2 sm:$0x7f]
      %s2903 = scalar_lea.vmem [#allocation3], 1
      %v2904 = vld [vmem:[%s2903] ss:$2 sm:$0x7f]
      %s2905 = scalar_lea.vmem [#allocation3], 16
      %v2906 = vld [vmem:[%s2905] ss:$2 sm:$0x7f]
      %s2907 = scalar_lea.vmem [#allocation3], 17
      %v2908 = vld [vmem:[%s2907] ss:$2 sm:$0x7f]
      %v2909 = vmax.f32 %v2902, %v2904
      %v2910 = vmax.f32 %v2906, %v2908
      %v2911 = vmax.f32 %v2909, %v2910
      %vm2912 = vcmask 260096
      %2913 = vst.msk [vmem:[#allocation4] sm:$0x7f] %vm2912, %v2911
      %s2914 = scalar_lea.vmem [#allocation3], 32
      %v2915 = vld [vmem:[%s2914] ss:$2 sm:$0x7f]
      %s2916 = scalar_lea.vmem [#allocation3], 33
      %v2917 = vld [vmem:[%s2916] ss:$2 sm:$0x7f]
      %s2918 = scalar_lea.vmem [#allocation3], 48
      %v2919 = vld [vmem:[%s2918] ss:$2 sm:$0x7f]
      %s2920 = scalar_lea.vmem [#allocation3], 49
      %v2921 = vld [vmem:[%s2920] ss:$2 sm:$0x7f]
      %v2922 = vmax.f32 %v2915, %v2917
      %v2923 = vmax.f32 %v2919, %v2921
      %v2924 = vmax.f32 %v2922, %v2923
      %2925 = vst.msk [vmem:[#allocation4 + $0x7] sm:$0x7f] %vm2912, %v2924
      %s2926 = scalar_lea.vmem [#allocation3], 64
      %v2927 = vld [vmem:[%s2926] ss:$2 sm:$0x7f]
      %s2928 = scalar_lea.vmem [#allocation3], 65
      %v2929 = vld [vmem:[%s2928] ss:$2 sm:$0x7f]
      %s2930 = scalar_lea.vmem [#allocation3], 80
      %v2931 = vld [vmem:[%s2930] ss:$2 sm:$0x7f]
      %s2932 = scalar_lea.vmem [#allocation3], 81
      %v2933 = vld [vmem:[%s2932] ss:$2 sm:$0x7f]
      %v2934 = vmax.f32 %v2927, %v2929
      %v2935 = vmax.f32 %v2931, %v2933
      %v2936 = vmax.f32 %v2934, %v2935
      %2937 = vst.msk [vmem:[#allocation4 + $0xe] sm:$0x7f] %vm2912, %v2936
      %s2938 = scalar_lea.vmem [#allocation3], 96
      %v2939 = vld [vmem:[%s2938] ss:$2 sm:$0x7f]
      %s2940 = scalar_lea.vmem [#allocation3], 97
      %v2941 = vld [vmem:[%s2940] ss:$2 sm:$0x7f]
      %s2942 = scalar_lea.vmem [#allocation3], 112
      %v2943 = vld [vmem:[%s2942] ss:$2 sm:$0x7f]
      %s2944 = scalar_lea.vmem [#allocation3], 113
      %v2945 = vld [vmem:[%s2944] ss:$2 sm:$0x7f]
      %v2946 = vmax.f32 %v2939, %v2941
      %v2947 = vmax.f32 %v2943, %v2945
      %v2948 = vmax.f32 %v2946, %v2947
      %2949 = vst.msk [vmem:[#allocation4 + $0x15] sm:$0x7f] %vm2912, %v2948
      %s2950 = scalar_lea.vmem [#allocation3], 128
      %v2951 = vld [vmem:[%s2950] ss:$2 sm:$0x7f]
      %s2952 = scalar_lea.vmem [#allocation3], 129
      %v2953 = vld [vmem:[%s2952] ss:$2 sm:$0x7f]
      %s2954 = scalar_lea.vmem [#allocation3], 144
      %v2955 = vld [vmem:[%s2954] ss:$2 sm:$0x7f]
      %s2956 = scalar_lea.vmem [#allocation3], 145
      %v2957 = vld [vmem:[%s2956] ss:$2 sm:$0x7f]
      %v2958 = vmax.f32 %v2951, %v2953
      %v2959 = vmax.f32 %v2955, %v2957
      %v2960 = vmax.f32 %v2958, %v2959
      %2961 = vst.msk [vmem:[#allocation4 + $0x1c] sm:$0x7f] %vm2912, %v2960
      %s2962 = scalar_lea.vmem [#allocation3], 160
      %v2963 = vld [vmem:[%s2962] ss:$2 sm:$0x7f]
      %s2964 = scalar_lea.vmem [#allocation3], 161
      %v2965 = vld [vmem:[%s2964] ss:$2 sm:$0x7f]
      %s2966 = scalar_lea.vmem [#allocation3], 176
      %v2967 = vld [vmem:[%s2966] ss:$2 sm:$0x7f]
      %s2968 = scalar_lea.vmem [#allocation3], 177
      %v2969 = vld [vmem:[%s2968] ss:$2 sm:$0x7f]
      %v2970 = vmax.f32 %v2963, %v2965
      %v2971 = vmax.f32 %v2967, %v2969
      %v2972 = vmax.f32 %v2970, %v2971
      %2973 = vst.msk [vmem:[#allocation4 + $0x23] sm:$0x7f] %vm2912, %v2972
      %s2974 = scalar_lea.vmem [#allocation3], 192
      %v2975 = vld [vmem:[%s2974] ss:$2 sm:$0x7f]
      %s2976 = scalar_lea.vmem [#allocation3], 193
      %v2977 = vld [vmem:[%s2976] ss:$2 sm:$0x7f]
      %s2978 = scalar_lea.vmem [#allocation3], 208
      %v2979 = vld [vmem:[%s2978] ss:$2 sm:$0x7f]
      %s2980 = scalar_lea.vmem [#allocation3], 209
      %v2981 = vld [vmem:[%s2980] ss:$2 sm:$0x7f]
      %v2982 = vmax.f32 %v2975, %v2977
      %v2983 = vmax.f32 %v2979, %v2981
      %v2984 = vmax.f32 %v2982, %v2983
      %2985 = vst.msk [vmem:[#allocation4 + $0x2a] sm:$0x7f] %vm2912, %v2984
      %v2986 = vld [vmem:[#allocation4] sm:$0xff]
      %v2987 = vld [vmem:[#allocation4 + $0x8] sm:$0xff]
      %v2988 = vld [vmem:[#allocation4 + $0x10] sm:$0xff]
      %v2989 = vld [vmem:[#allocation4 + $0x18] sm:$0xff]
      %v2990 = vld [vmem:[#allocation4 + $0x20] sm:$0xff]
      %v2991 = vld [vmem:[#allocation4 + $0x28] sm:$0xff]
      %v2992 = vld [vmem:[#allocation4 + $0x30] sm:$0x1]
      %v2993 = vpack.c.bf16 %v2986, %v2986
      %v2994 = vpack.c.bf16 %v2987, %v2987
      %v2995 = vpack.c.bf16 %v2988, %v2988
      %v2996 = vpack.c.bf16 %v2989, %v2989
      %v2997 = vpack.c.bf16 %v2990, %v2990
      %v2998 = vpack.c.bf16 %v2991, %v2991
      %v2999 = vpack.c.bf16 %v2992, %v2992
      %vm3000 = vcmask 257024
      %3001 = vst.msk [vmem:[%s170] sm:$0xf] %vm3000, %v2993
      %3002 = vst.msk [vmem:[%s170 + $0x4] sm:$0xf] %vm3000, %v2994
      %3003 = vst.msk [vmem:[%s170 + $0x8] sm:$0xf] %vm3000, %v2995
      %3004 = vst.msk [vmem:[%s170 + $0xc] sm:$0xf] %vm3000, %v2996
      %3005 = vst.msk [vmem:[%s170 + $0x10] sm:$0xf] %vm3000, %v2997
      %3006 = vst.msk [vmem:[%s170 + $0x14] sm:$0xf] %vm3000, %v2998
      %vm3007 = vcmask 253952
      %vm3008 = vsmask.f32 256
      %vm3009 = vmand %vm3007, %vm3008
      %v3010 = vld [vmem:[%s170 + $0x18] sm:$0x1]
      %v3011 = vsel %vm3009, %v2999, %v3010
      %3012 = vst [vmem:[%s170 + $0x18] sm:$0x1] %v3011
      %p3013 = scmp.lt.s32.totalorder %s14, 1
      %s3014 = scalar_select %p3013, %s14, 1
      %s3015 = smul.addr %s3014, 7
      %s3016 = smul.addr %s3015, 4
      %s3017 = scalar_lea.vmem %s3, %s3016
      // Predicated region
      $region33: #{cnn_forward.3} parent=31 // pred_check
        %p3018 = pneg %p100
      $region34: #{cnn_forward.3} parent=31 // pred_check_branch
        %3020 = sbr.rel (%p3018) target = $region36
      $region35: #{cnn_forward.3} parent=31 // pred_region
        _
      $region36: #{cnn_forward.3} parent=31 // pred_fallthru
        _
    $region32: #{cnn_forward.3} parent=5 // pred_fallthru
      _
    %p3021 = scmp.le.s32.totalorder 2, %s9
    // Predicated region
    $region37: #{cnn_forward.3} parent=5 // pred_check
      %p3022 = pneg %p3021
    $region38: #{cnn_forward.3} parent=5 // pred_check_branch
      %3024 = sbr.rel (%p3022) target = $region40
    $region39: #{cnn_forward.3} parent=5 // pred_region
      %s3025 = ssub.s32 %s9, 2
      // Predicated region
      $region41: #{cnn_forward.3} parent=39 // pred_check
        %p3026 = pneg %p106
      $region42: #{cnn_forward.3} parent=39 // pred_check_branch
        %3028 = sbr.rel (%p3026) target = $region44
      $region43: #{cnn_forward.3} parent=39 // pred_region
        %p3029 = scmp.lt.s32.totalorder %s15, 1
        %s3030 = scalar_select %p3029, %s15, 1
        %s3031 = smul.addr %s3030, 7
        %s3032 = smul.addr %s3031, 4
        %s3033 = scalar_lea.vmem %s3, %s3032
      $region44: #{cnn_forward.3} parent=39 // pred_fallthru
        _
    $region40: #{cnn_forward.3} parent=5 // pred_fallthru
      _
  $region6: #{cnn_forward.3} parent=0 // loop_footer
    %s13 = sadd.s32 1, %s9
  $region7: #{cnn_forward.3} parent=0 // loop_footer_branch
    %8 = sbr.rel target = $region3
  $region8: #{cnn_forward.3} parent=0 // loop_exit
    _

</llo_original>
